<compile_context>
chip_gen: v7x
topology: tpu7x:2x2x1
jax: 0.10.0
libtpu: 0.0.40
codegen_flags: <defaults>
</compile_context>

<pallas_src>
import functools

import jax
import jax.numpy as jnp
from jax import lax
from jax.experimental import pallas as pl
from jax.experimental.pallas import tpu as pltpu

POOL_K = 5
POOL_R = POOL_K // 2          # 2
HALO = 3 * POOL_R             # 6: three chained radius-2 pools
BN_EPS = 1e-5
LANE = 128


def _round_up(a, b):
    return (a + b - 1) // b * b


def _silu(v):
    # exp lands on the EUP slot; reciprocal avoids a VALU divide.
    return v * pl.reciprocal(1.0 + jnp.exp(-v), approx=False)


def sppf_kernel(x_ref, w1_ref, b1_ref, w2_ref, b2_ref, o_ref, pad_ref, *, true_h):
    Hs, W, Cinp = x_ref.shape          # halo'd strip rows, width, padded Cin
    TH, _, Coutp = o_ref.shape         # output strip rows, width, padded Cout
    Chp = w1_ref.shape[1]
    s = pl.program_id(1)

    # ---- conv1 (1x1) + folded BN + SiLU over the whole halo'd strip (MXU) ----
    x = x_ref[...]
    h = jnp.dot(x.reshape(Hs * W, Cinp), w1_ref[...],
                preferred_element_type=jnp.float32) + b1_ref[...]
    h = _silu(h)

    # Rows outside the real image -> -inf.  This both discards the zero-padded
    # halo rows and implements the pool's H-direction "same" (-inf) padding.
    q = lax.broadcasted_iota(jnp.int32, (Hs * W, Chp), 0)
    lo = (HALO - s * TH) * W
    hi = (true_h + HALO - s * TH) * W
    h = jnp.where((q >= lo) & (q < hi), h, -jnp.inf)
    h3 = h.reshape(Hs, W, Chp)

    # ---- separable 5x5 / stride-1 "same" max pool, chained x3 ----
    # -inf only on the 2-wide W border columns, once per grid step.
    border = jnp.full((Hs, POOL_R, Chp), -jnp.inf, dtype=jnp.float32)
    pad_ref[:, 0:POOL_R, :] = border
    pad_ref[:, POOL_R + W:2 * POOL_R + W, :] = border

    def pool(t):                        # (R, W, Chp) -> (R - 4, W, Chp)
        R = t.shape[0]
        pad_ref[0:R, POOL_R:POOL_R + W, :] = t
        u = pad_ref[0:R, 0:W, :]                          # 1x5 max along W
        for dw in range(1, POOL_K):
            u = jnp.maximum(u, pad_ref[0:R, dw:dw + W, :])
        out = u[0:R - 2 * POOL_R]                         # 5x1 max along H
        for dh in range(1, POOL_K):
            out = jnp.maximum(out, u[dh:dh + R - 2 * POOL_R])
        return out

    y1 = pool(h3)        # exact for strip rows [-4, TH+4)
    y2 = pool(y1)        # exact for strip rows [-2, TH+2)
    y3 = pool(y2)        # exact for strip rows [0, TH)

    # ---- conv2 (1x1) + folded BN + SiLU on concat([h, y1, y2, y3], C) ----
    cat = jnp.concatenate(
        [h3[HALO:HALO + TH],
         y1[2 * POOL_R:2 * POOL_R + TH],
         y2[POOL_R:POOL_R + TH],
         y3],
        axis=-1)                                          # (TH, W, 4*Chp)
    cat = cat.reshape(TH * W, 4 * Chp).astype(w2_ref.dtype)
    z = jnp.dot(cat, w2_ref[...], preferred_element_type=jnp.float32) + b2_ref[...]
    z = _silu(z)
    o_ref[...] = z.reshape(TH, W, Coutp)


def sppf_pallas(x, params, *, strip_h=None, compute_dtype=jnp.float32):
    """x: (N, H, W, Cin) float32, NHWC."""
    N, H, W, Cin = x.shape
    w1, w2 = params["w1"], params["w2"]
    Ch = w1.shape[1]
    Cout = w2.shape[1]

    # --- fold eval-mode BatchNorm (running stats) into the 1x1 convs ---
    s1 = params["g1"] / jnp.sqrt(params["v1"] + BN_EPS)
    w1e = w1 * s1[None, :]
    b1e = params["b1"] - params["m1"] * s1
    s2 = params["g2"] / jnp.sqrt(params["v2"] + BN_EPS)
    w2e = w2 * s2[None, :]
    b2e = params["b2"] - params["m2"] * s2

    # --- lane-pad every channel dim to a multiple of 128 ---
    Cinp = _round_up(Cin, LANE)
    Chp = _round_up(Ch, LANE)
    Coutp = _round_up(Cout, LANE)
    w1p = jnp.zeros((Cinp, Chp), jnp.float32).at[:Cin, :Ch].set(w1e)
    b1p = jnp.zeros((1, Chp), jnp.float32).at[0, :Ch].set(b1e)
    w2p = jnp.zeros((4 * Chp, Coutp), jnp.float32)
    for k in range(4):
        w2p = w2p.at[k * Chp:k * Chp + Ch, :Cout].set(w2e[k * Ch:(k + 1) * Ch])
    b2p = jnp.zeros((1, Coutp), jnp.float32).at[0, :Cout].set(b2e)
    w1p = w1p.astype(compute_dtype)
    w2p = w2p.astype(compute_dtype)

    # --- H-strip tiling with a 6-row halo ---
    if strip_h is None:
        strip_h = next(th for th in range(min(H, 64), 0, -1) if H % th == 0)
    TH = strip_h
    assert H % TH == 0, "strip_h must divide H"
    S = H // TH
    Hs = TH + 2 * HALO

    # Stage overlapped halo'd strips in HBM (wrapper-side layout plumbing) so
    # the standard BlockSpec pipeline can double-buffer them per grid step.
    xp = jnp.zeros((N, H, W, Cinp), jnp.float32).at[..., :Cin].set(x)
    xp = jnp.pad(xp, ((0, 0), (HALO, HALO), (0, 0), (0, 0)))
    x_strips = jnp.stack([xp[:, s * TH:s * TH + Hs] for s in range(S)], axis=1)
    x_strips = x_strips.astype(compute_dtype)            # (N, S, Hs, W, Cinp)

    Wp = _round_up(W + 2 * POOL_R, 8)                    # sublane-aligned scratch

    # Explicit VMEM budget: double-buffered blocks + scratch + live intermediates.
    cbytes = jnp.dtype(compute_dtype).itemsize
    est = (2 * Hs * W * Cinp * cbytes
           + 2 * TH * W * Coutp * 4
           + 2 * (Cinp * Chp + 4 * Chp * Coutp) * cbytes
           + Hs * Wp * Chp * 4
           + 8 * Hs * W * Chp * 4)
    vmem_limit = int(min(56 * 2 ** 20, max(32 * 2 ** 20, 2 * est)))

    kernel = pl.pallas_call(
        functools.partial(sppf_kernel, true_h=H),
        out_shape=jax.ShapeDtypeStruct((N, H, W, Coutp), jnp.float32),
        grid_spec=pltpu.PrefetchScalarGridSpec(
            num_scalar_prefetch=0,
            grid=(N, S),
            in_specs=[
                pl.BlockSpec((pl.Squeezed(), pl.Squeezed(), Hs, W, Cinp),
                             lambda n, s: (n, s, 0, 0, 0)),
                pl.BlockSpec((Cinp, Chp), lambda n, s: (0, 0)),
                pl.BlockSpec((1, Chp), lambda n, s: (0, 0)),
                pl.BlockSpec((4 * Chp, Coutp), lambda n, s: (0, 0)),
                pl.BlockSpec((1, Coutp), lambda n, s: (0, 0)),
            ],
            out_specs=pl.BlockSpec((pl.Squeezed(), TH, W, Coutp),
                                   lambda n, s: (n, s, 0, 0)),
            scratch_shapes=[pltpu.VMEM((Hs, Wp, Chp), jnp.float32)],
        ),
        compiler_params=pltpu.CompilerParams(
            dimension_semantics=("parallel", "parallel"),
            vmem_limit_bytes=vmem_limit,
        ),
    )
    out = kernel(x_strips, w1p, b1p, w2p, b2p)
    return out[..., :Cout]


# ------------------------- pure-JAX reference ------------------------------ #
def sppf_reference(x, params):
    def conv_bn_silu(t, w, g, b, m, v):
        y = jnp.einsum("nhwc,cd->nhwd", t, w)
        y = (y - m) / jnp.sqrt(v + BN_EPS) * g + b
        return y * (1.0 / (1.0 + jnp.exp(-y)))

    def pool(t):
        N, H, W, C = t.shape
        tp = jnp.pad(t, ((0, 0), (POOL_R, POOL_R), (POOL_R, POOL_R), (0, 0)),
                     constant_values=-jnp.inf)
        out = tp[:, 0:H, 0:W, :]
        for dh in range(POOL_K):
            for dw in range(POOL_K):
                out = jnp.maximum(out, tp[:, dh:dh + H, dw:dw + W, :])
        return out

    h = conv_bn_silu(x, params["w1"], params["g1"], params["b1"],
                     params["m1"], params["v1"])
    y1 = pool(h)
    y2 = pool(y1)
    y3 = pool(y2)
    cat = jnp.concatenate([h, y1, y2, y3], axis=-1)
    return conv_bn_silu(cat, params["w2"], params["g2"], params["b2"],
                        params["m2"], params["v2"])


def init_params(key, cin, cout):
    ch = cin // 2
    ks = jax.random.split(key, 12)
    f32 = jnp.float32
    return dict(
        w1=jax.random.normal(ks[0], (cin, ch), f32) * 0.2,
        g1=jax.random.uniform(ks[1], (ch,), f32, 0.8, 1.2),
        b1=jax.random.normal(ks[2], (ch,), f32) * 0.1,
        m1=jax.random.normal(ks[3], (ch,), f32) * 0.1,
        v1=jax.random.uniform(ks[4], (ch,), f32, 0.5, 1.5),
        w2=jax.random.normal(ks[5], (4 * ch, cout), f32) * 0.2,
        g2=jax.random.uniform(ks[6], (cout,), f32, 0.8, 1.2),
        b2=jax.random.normal(ks[7], (cout,), f32) * 0.1,
        m2=jax.random.normal(ks[8], (cout,), f32) * 0.1,
        v2=jax.random.uniform(ks[9], (cout,), f32, 0.5, 1.5),
    )


if __name__ == "__main__":
    key = jax.random.PRNGKey(0)
    kx, kp = jax.random.split(key)

    N, H, W = 2, 16, 16
    in_channels, out_channels = 8, 8      # hidden = in_channels // 2 = 4

    x = jax.random.uniform(kx, (N, H, W, in_channels), jnp.float32)
    params = init_params(kp, in_channels, out_channels)

    ref = sppf_reference(x, params)

    # f32 path, 2 H-strips per image (exercises the halo).
    out = sppf_pallas(x, params, strip_h=8, compute_dtype=jnp.float32)
    jax.block_until_ready(out)
    assert out.shape == (N, H, W, out_channels)
    err = float(jnp.max(jnp.abs(out - ref)))
    assert jnp.allclose(out, ref, atol=1e-4, rtol=1e-4), f"f32/strip8 err={err}"

    # f32 path, single strip (halo fully outside the image on both sides).
    out1 = sppf_pallas(x, params, strip_h=16, compute_dtype=jnp.float32)
    jax.block_until_ready(out1)
    err1 = float(jnp.max(jnp.abs(out1 - ref)))
    assert jnp.allclose(out1, ref, atol=1e-4, rtol=1e-4), f"f32/strip16 err={err1}"

    # bf16 matmul inputs (f32 accumulation, f32 pool/SiLU path).
    outb = sppf_pallas(x, params, strip_h=8, compute_dtype=jnp.bfloat16)
    jax.block_until_ready(outb)
    errb = float(jnp.max(jnp.abs(outb - ref)))
    assert jnp.allclose(outb, ref, atol=3e-2, rtol=3e-2), f"bf16 err={errb}"

    print("KERNEL_OK")
</pallas_src>

<mosaic_0001>
module attributes {stable_mosaic.version = 11 : i64} {
  func.func @sppf_kernel(%arg0: i32, %arg1: i32, %arg2: memref<1x1x20x16x128xf32, #tpu.memory_space<vmem>>, %arg3: memref<128x128xf32, #tpu.memory_space<vmem>>, %arg4: memref<1x128xf32, #tpu.memory_space<vmem>>, %arg5: memref<512x128xf32, #tpu.memory_space<vmem>>, %arg6: memref<1x128xf32, #tpu.memory_space<vmem>>, %arg7: memref<1x8x16x128xf32, #tpu.memory_space<vmem>>, %arg8: memref<20x24x128xf32, #tpu.memory_space<vmem>>) attributes {dimension_semantics = [#tpu.dimension_semantics<parallel>, #tpu.dimension_semantics<parallel>], iteration_bounds = array<i64: 2, 2>, scalar_prefetch = 0 : i64, scratch_operands = 1 : i64, tpu.core_type = #tpu.core_type<tc>, window_params = [{transform_indices = @transform_0, window_bounds = array<i64: 1, 1, 20, 16, 128>}, {pipeline_mode = #tpu.pipeline_mode<synchronous>, transform_indices = @transform_1, window_bounds = array<i64: 128, 128>}, {pipeline_mode = #tpu.pipeline_mode<synchronous>, transform_indices = @transform_2, window_bounds = array<i64: 1, 128>}, {pipeline_mode = #tpu.pipeline_mode<synchronous>, transform_indices = @transform_3, window_bounds = array<i64: 512, 128>}, {pipeline_mode = #tpu.pipeline_mode<synchronous>, transform_indices = @transform_4, window_bounds = array<i64: 1, 128>}, {transform_indices = @transform_5, window_bounds = array<i64: 1, 8, 16, 128>}]} {
    %c0 = arith.constant 0 : index
    %c0_0 = arith.constant 0 : index
    %c0_1 = arith.constant 0 : index
    %c0_2 = arith.constant 0 : index
    %c0_3 = arith.constant 0 : index
    %0 = vector.load %arg2[%c0, %c0_0, %c0_1, %c0_2, %c0_3] : memref<1x1x20x16x128xf32, #tpu.memory_space<vmem>>, vector<1x1x20x16x128xf32>
    %1 = vector.shape_cast %0 : vector<1x1x20x16x128xf32> to vector<20x16x128xf32>
    %2 = vector.shape_cast %1 : vector<20x16x128xf32> to vector<320x128xf32>
    %c0_4 = arith.constant 0 : index
    %c0_5 = arith.constant 0 : index
    %3 = vector.load %arg3[%c0_4, %c0_5] : memref<128x128xf32, #tpu.memory_space<vmem>>, vector<128x128xf32>
    %cst = arith.constant dense<0.000000e+00> : vector<320x128xf32>
    %4 = tpu.matmul %2, %3, %cst {dimension_numbers = #tpu.dot_dimension_numbers<[1], [0], [0], [1], [0, 0, 1, 1], [], []>} : vector<320x128xf32>, vector<128x128xf32>, vector<320x128xf32> -> vector<320x128xf32>
    %c0_6 = arith.constant 0 : index
    %c0_7 = arith.constant 0 : index
    %5 = vector.load %arg4[%c0_6, %c0_7] : memref<1x128xf32, #tpu.memory_space<vmem>>, vector<1x128xf32>
    %6 = vector.broadcast %5 : vector<1x128xf32> to vector<320x128xf32>
    %7 = arith.addf %4, %6 : vector<320x128xf32>
    %cst_8 = arith.constant 0.000000e+00 : f32
    %8 = vector.broadcast %cst_8 : f32 to vector<320x128xf32>
    %9 = arith.subf %8, %7 : vector<320x128xf32>
    %10 = math.exp %9 : vector<320x128xf32>
    %cst_9 = arith.constant 1.000000e+00 : f32
    %11 = vector.broadcast %cst_9 : f32 to vector<320x128xf32>
    %12 = arith.addf %11, %10 : vector<320x128xf32>
    %13 = tpu.reciprocal %12 : vector<320x128xf32> -> vector<320x128xf32>
    %14 = arith.mulf %7, %13 : vector<320x128xf32>
    %15 = tpu.iota {dimensions = array<i32: 0>} : vector<320x128xi32>
    %c8_i32 = arith.constant 8 : i32
    %16 = arith.muli %arg1, %c8_i32 : i32
    %c6_i32 = arith.constant 6 : i32
    %17 = arith.subi %c6_i32, %16 : i32
    %c16_i32 = arith.constant 16 : i32
    %18 = arith.muli %17, %c16_i32 : i32
    %c8_i32_10 = arith.constant 8 : i32
    %19 = arith.muli %arg1, %c8_i32_10 : i32
    %c22_i32 = arith.constant 22 : i32
    %20 = arith.subi %c22_i32, %19 : i32
    %c16_i32_11 = arith.constant 16 : i32
    %21 = arith.muli %20, %c16_i32_11 : i32
    %22 = vector.broadcast %18 : i32 to vector<320x128xi32>
    %23 = arith.cmpi sge, %15, %22 : vector<320x128xi32>
    %24 = vector.broadcast %21 : i32 to vector<320x128xi32>
    %25 = arith.cmpi slt, %15, %24 : vector<320x128xi32>
    %26 = arith.andi %23, %25 : vector<320x128xi1>
    %cst_12 = arith.constant 0xFF800000 : f32
    %27 = vector.broadcast %cst_12 : f32 to vector<320x128xf32>
    %28 = arith.select %26, %14, %27 : vector<320x128xi1>, vector<320x128xf32>
    %29 = vector.shape_cast %28 : vector<320x128xf32> to vector<20x16x128xf32>
    %cst_13 = arith.constant 0xFF800000 : f32
    %30 = vector.broadcast %cst_13 : f32 to vector<20x2x128xf32>
    %c0_14 = arith.constant 0 : index
    %c0_15 = arith.constant 0 : index
    %c0_16 = arith.constant 0 : index
    %31 = vector.load %arg8[%c0_14, %c0_15, %c0_16] : memref<20x24x128xf32, #tpu.memory_space<vmem>>, vector<20x2x128xf32>
    tpu.vector_store %arg8[%c0_14, %c0_15, %c0_16], %30 {strides = array<i32>} : memref<20x24x128xf32, #tpu.memory_space<vmem>>, vector<20x2x128xf32>,
    %c0_17 = arith.constant 0 : index
    %c18 = arith.constant 18 : index
    %c0_18 = arith.constant 0 : index
    %32 = vector.load %arg8[%c0_17, %c18, %c0_18] : memref<20x24x128xf32, #tpu.memory_space<vmem>>, vector<20x2x128xf32>
    tpu.vector_store %arg8[%c0_17, %c18, %c0_18], %30 {strides = array<i32>} : memref<20x24x128xf32, #tpu.memory_space<vmem>>, vector<20x2x128xf32>,
    %c0_19 = arith.constant 0 : index
    %c2 = arith.constant 2 : index
    %c0_20 = arith.constant 0 : index
    %33 = vector.load %arg8[%c0_19, %c2, %c0_20] : memref<20x24x128xf32, #tpu.memory_space<vmem>>, vector<20x16x128xf32>
    tpu.vector_store %arg8[%c0_19, %c2, %c0_20], %29 {strides = array<i32>} : memref<20x24x128xf32, #tpu.memory_space<vmem>>, vector<20x16x128xf32>,
    %c0_21 = arith.constant 0 : index
    %c0_22 = arith.constant 0 : index
    %c0_23 = arith.constant 0 : index
    %34 = vector.load %arg8[%c0_21, %c0_22, %c0_23] : memref<20x24x128xf32, #tpu.memory_space<vmem>>, vector<20x16x128xf32>
    %c0_24 = arith.constant 0 : index
    %c1 = arith.constant 1 : index
    %c0_25 = arith.constant 0 : index
    %35 = vector.load %arg8[%c0_24, %c1, %c0_25] : memref<20x24x128xf32, #tpu.memory_space<vmem>>, vector<20x16x128xf32>
    %36 = arith.maximumf %34, %35 : vector<20x16x128xf32>
    %c0_26 = arith.constant 0 : index
    %c2_27 = arith.constant 2 : index
    %c0_28 = arith.constant 0 : index
    %37 = vector.load %arg8[%c0_26, %c2_27, %c0_28] : memref<20x24x128xf32, #tpu.memory_space<vmem>>, vector<20x16x128xf32>
    %38 = arith.maximumf %36, %37 : vector<20x16x128xf32>
    %c0_29 = arith.constant 0 : index
    %c3 = arith.constant 3 : index
    %c0_30 = arith.constant 0 : index
    %39 = vector.load %arg8[%c0_29, %c3, %c0_30] : memref<20x24x128xf32, #tpu.memory_space<vmem>>, vector<20x16x128xf32>
    %40 = arith.maximumf %38, %39 : vector<20x16x128xf32>
    %c0_31 = arith.constant 0 : index
    %c4 = arith.constant 4 : index
    %c0_32 = arith.constant 0 : index
    %41 = vector.load %arg8[%c0_31, %c4, %c0_32] : memref<20x24x128xf32, #tpu.memory_space<vmem>>, vector<20x16x128xf32>
    %42 = arith.maximumf %40, %41 : vector<20x16x128xf32>
    %43 = vector.extract_strided_slice %42 {offsets = [0, 0, 0], sizes = [16, 16, 128], strides = [1, 1, 1]} : vector<20x16x128xf32> to vector<16x16x128xf32>
    %44 = vector.extract_strided_slice %42 {offsets = [1, 0, 0], sizes = [16, 16, 128], strides = [1, 1, 1]} : vector<20x16x128xf32> to vector<16x16x128xf32>
    %45 = arith.maximumf %43, %44 : vector<16x16x128xf32>
    %46 = vector.extract_strided_slice %42 {offsets = [2, 0, 0], sizes = [16, 16, 128], strides = [1, 1, 1]} : vector<20x16x128xf32> to vector<16x16x128xf32>
    %47 = arith.maximumf %45, %46 : vector<16x16x128xf32>
    %48 = vector.extract_strided_slice %42 {offsets = [3, 0, 0], sizes = [16, 16, 128], strides = [1, 1, 1]} : vector<20x16x128xf32> to vector<16x16x128xf32>
    %49 = arith.maximumf %47, %48 : vector<16x16x128xf32>
    %50 = vector.extract_strided_slice %42 {offsets = [4, 0, 0], sizes = [16, 16, 128], strides = [1, 1, 1]} : vector<20x16x128xf32> to vector<16x16x128xf32>
    %51 = arith.maximumf %49, %50 : vector<16x16x128xf32>
    %c0_33 = arith.constant 0 : index
    %c2_34 = arith.constant 2 : index
    %c0_35 = arith.constant 0 : index
    %52 = vector.load %arg8[%c0_33, %c2_34, %c0_35] : memref<20x24x128xf32, #tpu.memory_space<vmem>>, vector<16x16x128xf32>
    tpu.vector_store %arg8[%c0_33, %c2_34, %c0_35], %51 {strides = array<i32>} : memref<20x24x128xf32, #tpu.memory_space<vmem>>, vector<16x16x128xf32>,
    %c0_36 = arith.constant 0 : index
    %c0_37 = arith.constant 0 : index
    %c0_38 = arith.constant 0 : index
    %53 = vector.load %arg8[%c0_36, %c0_37, %c0_38] : memref<20x24x128xf32, #tpu.memory_space<vmem>>, vector<16x16x128xf32>
    %c0_39 = arith.constant 0 : index
    %c1_40 = arith.constant 1 : index
    %c0_41 = arith.constant 0 : index
    %54 = vector.load %arg8[%c0_39, %c1_40, %c0_41] : memref<20x24x128xf32, #tpu.memory_space<vmem>>, vector<16x16x128xf32>
    %55 = arith.maximumf %53, %54 : vector<16x16x128xf32>
    %c0_42 = arith.constant 0 : index
    %c2_43 = arith.constant 2 : index
    %c0_44 = arith.constant 0 : index
    %56 = vector.load %arg8[%c0_42, %c2_43, %c0_44] : memref<20x24x128xf32, #tpu.memory_space<vmem>>, vector<16x16x128xf32>
    %57 = arith.maximumf %55, %56 : vector<16x16x128xf32>
    %c0_45 = arith.constant 0 : index
    %c3_46 = arith.constant 3 : index
    %c0_47 = arith.constant 0 : index
    %58 = vector.load %arg8[%c0_45, %c3_46, %c0_47] : memref<20x24x128xf32, #tpu.memory_space<vmem>>, vector<16x16x128xf32>
    %59 = arith.maximumf %57, %58 : vector<16x16x128xf32>
    %c0_48 = arith.constant 0 : index
    %c4_49 = arith.constant 4 : index
    %c0_50 = arith.constant 0 : index
    %60 = vector.load %arg8[%c0_48, %c4_49, %c0_50] : memref<20x24x128xf32, #tpu.memory_space<vmem>>, vector<16x16x128xf32>
    %61 = arith.maximumf %59, %60 : vector<16x16x128xf32>
    %62 = vector.extract_strided_slice %61 {offsets = [0, 0, 0], sizes = [12, 16, 128], strides = [1, 1, 1]} : vector<16x16x128xf32> to vector<12x16x128xf32>
    %63 = vector.extract_strided_slice %61 {offsets = [1, 0, 0], sizes = [12, 16, 128], strides = [1, 1, 1]} : vector<16x16x128xf32> to vector<12x16x128xf32>
    %64 = arith.maximumf %62, %63 : vector<12x16x128xf32>
    %65 = vector.extract_strided_slice %61 {offsets = [2, 0, 0], sizes = [12, 16, 128], strides = [1, 1, 1]} : vector<16x16x128xf32> to vector<12x16x128xf32>
    %66 = arith.maximumf %64, %65 : vector<12x16x128xf32>
    %67 = vector.extract_strided_slice %61 {offsets = [3, 0, 0], sizes = [12, 16, 128], strides = [1, 1, 1]} : vector<16x16x128xf32> to vector<12x16x128xf32>
    %68 = arith.maximumf %66, %67 : vector<12x16x128xf32>
    %69 = vector.extract_strided_slice %61 {offsets = [4, 0, 0], sizes = [12, 16, 128], strides = [1, 1, 1]} : vector<16x16x128xf32> to vector<12x16x128xf32>
    %70 = arith.maximumf %68, %69 : vector<12x16x128xf32>
    %c0_51 = arith.constant 0 : index
    %c2_52 = arith.constant 2 : index
    %c0_53 = arith.constant 0 : index
    %71 = vector.load %arg8[%c0_51, %c2_52, %c0_53] : memref<20x24x128xf32, #tpu.memory_space<vmem>>, vector<12x16x128xf32>
    tpu.vector_store %arg8[%c0_51, %c2_52, %c0_53], %70 {strides = array<i32>} : memref<20x24x128xf32, #tpu.memory_space<vmem>>, vector<12x16x128xf32>,
    %c0_54 = arith.constant 0 : index
    %c0_55 = arith.constant 0 : index
    %c0_56 = arith.constant 0 : index
    %72 = vector.load %arg8[%c0_54, %c0_55, %c0_56] : memref<20x24x128xf32, #tpu.memory_space<vmem>>, vector<12x16x128xf32>
    %c0_57 = arith.constant 0 : index
    %c1_58 = arith.constant 1 : index
    %c0_59 = arith.constant 0 : index
    %73 = vector.load %arg8[%c0_57, %c1_58, %c0_59] : memref<20x24x128xf32, #tpu.memory_space<vmem>>, vector<12x16x128xf32>
    %74 = arith.maximumf %72, %73 : vector<12x16x128xf32>
    %c0_60 = arith.constant 0 : index
    %c2_61 = arith.constant 2 : index
    %c0_62 = arith.constant 0 : index
    %75 = vector.load %arg8[%c0_60, %c2_61, %c0_62] : memref<20x24x128xf32, #tpu.memory_space<vmem>>, vector<12x16x128xf32>
    %76 = arith.maximumf %74, %75 : vector<12x16x128xf32>
    %c0_63 = arith.constant 0 : index
    %c3_64 = arith.constant 3 : index
    %c0_65 = arith.constant 0 : index
    %77 = vector.load %arg8[%c0_63, %c3_64, %c0_65] : memref<20x24x128xf32, #tpu.memory_space<vmem>>, vector<12x16x128xf32>
    %78 = arith.maximumf %76, %77 : vector<12x16x128xf32>
    %c0_66 = arith.constant 0 : index
    %c4_67 = arith.constant 4 : index
    %c0_68 = arith.constant 0 : index
    %79 = vector.load %arg8[%c0_66, %c4_67, %c0_68] : memref<20x24x128xf32, #tpu.memory_space<vmem>>, vector<12x16x128xf32>
    %80 = arith.maximumf %78, %79 : vector<12x16x128xf32>
    %81 = vector.extract_strided_slice %80 {offsets = [0, 0, 0], sizes = [8, 16, 128], strides = [1, 1, 1]} : vector<12x16x128xf32> to vector<8x16x128xf32>
    %82 = vector.extract_strided_slice %80 {offsets = [1, 0, 0], sizes = [8, 16, 128], strides = [1, 1, 1]} : vector<12x16x128xf32> to vector<8x16x128xf32>
    %83 = arith.maximumf %81, %82 : vector<8x16x128xf32>
    %84 = vector.extract_strided_slice %80 {offsets = [2, 0, 0], sizes = [8, 16, 128], strides = [1, 1, 1]} : vector<12x16x128xf32> to vector<8x16x128xf32>
    %85 = arith.maximumf %83, %84 : vector<8x16x128xf32>
    %86 = vector.extract_strided_slice %80 {offsets = [3, 0, 0], sizes = [8, 16, 128], strides = [1, 1, 1]} : vector<12x16x128xf32> to vector<8x16x128xf32>
    %87 = arith.maximumf %85, %86 : vector<8x16x128xf32>
    %88 = vector.extract_strided_slice %80 {offsets = [4, 0, 0], sizes = [8, 16, 128], strides = [1, 1, 1]} : vector<12x16x128xf32> to vector<8x16x128xf32>
    %89 = arith.maximumf %87, %88 : vector<8x16x128xf32>
    %90 = vector.extract_strided_slice %29 {offsets = [6, 0, 0], sizes = [8, 16, 128], strides = [1, 1, 1]} : vector<20x16x128xf32> to vector<8x16x128xf32>
    %91 = vector.extract_strided_slice %51 {offsets = [4, 0, 0], sizes = [8, 16, 128], strides = [1, 1, 1]} : vector<16x16x128xf32> to vector<8x16x128xf32>
    %92 = vector.extract_strided_slice %70 {offsets = [2, 0, 0], sizes = [8, 16, 128], strides = [1, 1, 1]} : vector<12x16x128xf32> to vector<8x16x128xf32>
    %93 = tpu.concatenate %90, %91, %92, %89 in 2 : vector<8x16x128xf32>, vector<8x16x128xf32>, vector<8x16x128xf32>, vector<8x16x128xf32> -> vector<8x16x512xf32>
    %94 = vector.shape_cast %93 : vector<8x16x512xf32> to vector<128x512xf32>
    %c0_69 = arith.constant 0 : index
    %c0_70 = arith.constant 0 : index
    %95 = vector.load %arg5[%c0_69, %c0_70] : memref<512x128xf32, #tpu.memory_space<vmem>>, vector<512x128xf32>
    %cst_71 = arith.constant dense<0.000000e+00> : vector<128x128xf32>
    %96 = tpu.matmul %94, %95, %cst_71 {dimension_numbers = #tpu.dot_dimension_numbers<[1], [0], [0], [1], [0, 0, 1, 1], [], []>} : vector<128x512xf32>, vector<512x128xf32>, vector<128x128xf32> -> vector<128x128xf32>
    %c0_72 = arith.constant 0 : index
    %c0_73 = arith.constant 0 : index
    %97 = vector.load %arg6[%c0_72, %c0_73] : memref<1x128xf32, #tpu.memory_space<vmem>>, vector<1x128xf32>
    %98 = vector.broadcast %97 : vector<1x128xf32> to vector<128x128xf32>
    %99 = arith.addf %96, %98 : vector<128x128xf32>
    %cst_74 = arith.constant 0.000000e+00 : f32
    %100 = vector.broadcast %cst_74 : f32 to vector<128x128xf32>
    %101 = arith.subf %100, %99 : vector<128x128xf32>
    %102 = math.exp %101 : vector<128x128xf32>
    %cst_75 = arith.constant 1.000000e+00 : f32
    %103 = vector.broadcast %cst_75 : f32 to vector<128x128xf32>
    %104 = arith.addf %103, %102 : vector<128x128xf32>
    %105 = tpu.reciprocal %104 : vector<128x128xf32> -> vector<128x128xf32>
    %106 = arith.mulf %99, %105 : vector<128x128xf32>
    %107 = vector.shape_cast %106 : vector<128x128xf32> to vector<8x16x128xf32>
    %c0_76 = arith.constant 0 : index
    %c0_77 = arith.constant 0 : index
    %c0_78 = arith.constant 0 : index
    %c0_79 = arith.constant 0 : index
    %108 = vector.load %arg7[%c0_76, %c0_77, %c0_78, %c0_79] : memref<1x8x16x128xf32, #tpu.memory_space<vmem>>, vector<1x8x16x128xf32>
    %109 = vector.shape_cast %108 : vector<1x8x16x128xf32> to vector<8x16x128xf32>
    %110 = vector.shape_cast %107 : vector<8x16x128xf32> to vector<1x8x16x128xf32>
    tpu.vector_store %arg7[%c0_76, %c0_77, %c0_78, %c0_79], %110 {strides = array<i32>} : memref<1x8x16x128xf32, #tpu.memory_space<vmem>>, vector<1x8x16x128xf32>,
    return
  }
  func.func @transform_0(%arg0: i32, %arg1: i32) -> (i32, i32, i32, i32, i32) {
    %c0_i32 = arith.constant 0 : i32
    %c0_i32_0 = arith.constant 0 : i32
    %c0_i32_1 = arith.constant 0 : i32
    %c0_i32_2 = arith.constant 0 : i32
    return %arg0, %arg1, %c0_i32, %c0_i32_0, %c0_i32_1 : i32, i32, i32, i32, i32
  }
  func.func @transform_1(%arg0: i32, %arg1: i32) -> (i32, i32) {
    %c0_i32 = arith.constant 0 : i32
    %c0_i32_0 = arith.constant 0 : i32
    %c0_i32_1 = arith.constant 0 : i32
    return %c0_i32, %c0_i32_0 : i32, i32
  }
  func.func @transform_2(%arg0: i32, %arg1: i32) -> (i32, i32) {
    %c0_i32 = arith.constant 0 : i32
    %c0_i32_0 = arith.constant 0 : i32
    %c0_i32_1 = arith.constant 0 : i32
    return %c0_i32, %c0_i32_0 : i32, i32
  }
  func.func @transform_3(%arg0: i32, %arg1: i32) -> (i32, i32) {
    %c0_i32 = arith.constant 0 : i32
    %c0_i32_0 = arith.constant 0 : i32
    %c0_i32_1 = arith.constant 0 : i32
    return %c0_i32, %c0_i32_0 : i32, i32
  }
  func.func @transform_4(%arg0: i32, %arg1: i32) -> (i32, i32) {
    %c0_i32 = arith.constant 0 : i32
    %c0_i32_0 = arith.constant 0 : i32
    %c0_i32_1 = arith.constant 0 : i32
    return %c0_i32, %c0_i32_0 : i32, i32
  }
  func.func @transform_5(%arg0: i32, %arg1: i32) -> (i32, i32, i32, i32) {
    %c0_i32 = arith.constant 0 : i32
    %c0_i32_0 = arith.constant 0 : i32
    %c0_i32_1 = arith.constant 0 : i32
    return %arg0, %arg1, %c0_i32, %c0_i32_0 : i32, i32, i32, i32
  }
}

</mosaic_0001>

<llo_original>
// kernel: tpu_custom_call.1
$region0: #{tpu_custom_call.1}
  #allocation0 [shape = 'u32[]', space=smem, size = 0x4, offset = 0x4, fixed_abs, tag = 'smem constant byte address 0x4 - core index']
  #allocation1 [shape = 'u32[144,128]{1,0:T(1,128)}', space=vmem, size = 0x12000, scoped, tag = 'internal scratch']
  #allocation2 [shape = 'f32[20,24,128]{2,1,0:T(8,128)}', space=vmem, size = 0x3c000, scoped, tag = 'scratch operand']
  %s0 = inlined_call_operand.hbm [shape: f32[2,2,20,16,128], index: 0, kind: input, shape index: {}]
  %s1 = inlined_call_operand.hbm [shape: f32[128,128], index: 1, kind: input, shape index: {}]
  %s2 = inlined_call_operand.vmem [shape: f32[1,128], index: 2, kind: input, shape index: {}]
  %s3 = inlined_call_operand.hbm [shape: f32[512,128], index: 3, kind: input, shape index: {}]
  %s4 = inlined_call_operand.vmem [shape: f32[1,128], index: 4, kind: input, shape index: {}]
  %s5 = inlined_call_operand.hbm [shape: f32[2,16,16,128], index: 5, kind: output, shape index: {}]
  %s6 = sld [smem:[#allocation0]]
  $region65: #{tpu_custom_call.1} parent=0
    _
  %s8 = ssub.s32 1, %s6
  %s9 = scalar_select 0, %s8, %s6
  $region1: #{tpu_custom_call.1} parent=0
    #allocation3 [shape = 'u8[327680]{0}', space=vmem, size = 0x50000, scoped, tag = 'input window, operand 0']
    #allocation4 [shape = 's32[2]{0}', space=sflag, size = 0x8, scoped, tag = 'scoped memory for tpu_custom_call.1']
    #allocation5 [shape = 's32[2]{0}', space=sflag, size = 0x8, scoped, tag = 'scoped memory for tpu_custom_call.1']
    #allocation6 [shape = 'u8[65536]{0}', space=vmem, size = 0x10000, scoped, tag = 'input window, operand 1, single buffered']
    #allocation7 [shape = 's32[1]{0}', space=sflag, size = 0x4, scoped, tag = 'scoped memory for tpu_custom_call.1']
    #allocation8 [shape = 'u8[262144]{0}', space=vmem, size = 0x40000, scoped, tag = 'input window, operand 3, single buffered']
    #allocation9 [shape = 'u8[131072]{0}', space=vmem, size = 0x20000, scoped, tag = 'output window, operand 0']
    %10 = vsyncpa [#allocation4], 0
    %s11 = scalar_lea.sflag [#allocation4], 1
    %12 = vsyncpa %s11, 0
    %13 = vsyncpa [#allocation7], 0
    %14 = vsyncpa [#allocation5], 0
    %s15 = scalar_lea.sflag [#allocation5], 1
    %16 = vsyncpa %s15, 0
    loop: start=0, step=1, limit=6
    $region2: #{tpu_custom_call.1} parent=1 // loop_pre_header
      _
    $region3: #{tpu_custom_call.1} parent=1 // loop_header
      %s18 = sphi 0, %s22
      %p19 = scmp.ge.s32.totalorder %s18, 6
      %s25 = sphi 0, %s37
      %s26 = sphi 0, %s33
      %s27 = sphi 0, %s25
      %s28 = sphi 0, %s26
      %s29 = sphi 0, %s27
      %s30 = sphi 0, %s28
      %s42 = sphi 0, %s44
      %s45 = sphi 0, %s42
      %s46 = sphi 0, %s45
      %s62 = sphi 0, %s46
      %s66 = sphi 0, %s66
      %s68 = sphi 0, %s66
      %s69 = sphi 0, %s68
      %s83 = sphi 0, %s69
      %s87 = sphi 0, %s87
      %s89 = sphi 0, %s87
      %s90 = sphi 0, %s89
      %s104 = sphi 0, %s90
      %s108 = sphi 0, %s108
      %s110 = sphi 0, %s108
      %s111 = sphi 0, %s110
      %s125 = sphi 0, %s111
      %s129 = sphi 0, %s129
      %s131 = sphi 0, %s129
      %s132 = sphi 0, %s131
      %s146 = sphi 0, %s132
      %s154 = sphi 0, %s156
      %s157 = sphi 0, %s154
      %s158 = sphi 0, %s157
      %s174 = sphi 0, %s158
    $region4: #{tpu_custom_call.1} parent=1 // loop_header_branch
      %21 = sbr.rel (%p19) target = $region8
    $region5: #{tpu_custom_call.1} parent=1 // loop_body
      %s23 = ssub.s32 %s18, 1
      %s24 = ssub.s32 %s18, 2
      %s31 = sadd.s32 1, %s26
      %p32 = scmp.ge.s32.totalorder %s31, 2
      %s33 = scalar_select %p32, 0, %s31
      %s34 = sadd.s32 1, %s25
      %s35 = scalar_select %p32, %s34, %s25
      %p36 = scmp.ge.s32.totalorder %s35, 2
      %s37 = scalar_select %p36, 0, %s35
      %s38 = ssub.s32 %s25, %s37
      %s39 = ssub.s32 %s26, %s33
      %s40 = sor.u32 %s38, %s39
      %p41 = scmp.eq.s32.totalorder %s40, 0
      %s43 = sadd.s32 %s42, 1
      %s44 = scalar_select %p41, %s42, %s43
      %p47 = pneg %p41
      %p48 = scmp.eq.s32.totalorder %s18, 3
      %p49 = por %p47, %p48
      %p50 = scmp.ne.s32.totalorder %s42, %s45
      %p51 = scmp.eq.s32.totalorder %s18, 0
      %p52 = por %p50, %p51
      %p53 = scmp.ne.s32.totalorder %s42, %s45
      %p54 = scmp.eq.s32.totalorder %s23, 3
      %p55 = por %p53, %p54
      %p56 = scmp.ne.s32.totalorder %s45, %s46
      %p57 = scmp.eq.s32.totalorder %s23, 0
      %p58 = por %p56, %p57
      %p59 = scmp.ne.s32.totalorder %s45, %s46
      %p60 = scmp.eq.s32.totalorder %s24, 3
      %p61 = por %p59, %p60
      %p63 = scmp.ne.s32.totalorder %s46, %s62
      %p64 = scmp.eq.s32.totalorder %s24, 0
      %p65 = por %p63, %p64
      %s67 = sadd.s32 %s66, 1
      %p70 = scmp.eq.s32.totalorder %s18, 3
      %p71 = scmp.ne.s32.totalorder %s66, %s68
      %p72 = scmp.eq.s32.totalorder %s18, 0
      %p73 = por %p71, %p72
      %p74 = scmp.ne.s32.totalorder %s66, %s68
      %p75 = scmp.eq.s32.totalorder %s23, 3
      %p76 = por %p74, %p75
      %p77 = scmp.ne.s32.totalorder %s68, %s69
      %p78 = scmp.eq.s32.totalorder %s23, 0
      %p79 = por %p77, %p78
      %p80 = scmp.ne.s32.totalorder %s68, %s69
      %p81 = scmp.eq.s32.totalorder %s24, 3
      %p82 = por %p80, %p81
      %p84 = scmp.ne.s32.totalorder %s69, %s83
      %p85 = scmp.eq.s32.totalorder %s24, 0
      %p86 = por %p84, %p85
      %s88 = sadd.s32 %s87, 1
      %p91 = scmp.eq.s32.totalorder %s18, 3
      %p92 = scmp.ne.s32.totalorder %s87, %s89
      %p93 = scmp.eq.s32.totalorder %s18, 0
      %p94 = por %p92, %p93
      %p95 = scmp.ne.s32.totalorder %s87, %s89
      %p96 = scmp.eq.s32.totalorder %s23, 3
      %p97 = por %p95, %p96
      %p98 = scmp.ne.s32.totalorder %s89, %s90
      %p99 = scmp.eq.s32.totalorder %s23, 0
      %p100 = por %p98, %p99
      %p101 = scmp.ne.s32.totalorder %s89, %s90
      %p102 = scmp.eq.s32.totalorder %s24, 3
      %p103 = por %p101, %p102
      %p105 = scmp.ne.s32.totalorder %s90, %s104
      %p106 = scmp.eq.s32.totalorder %s24, 0
      %p107 = por %p105, %p106
      %s109 = sadd.s32 %s108, 1
      %p112 = scmp.eq.s32.totalorder %s18, 3
      %p113 = scmp.ne.s32.totalorder %s108, %s110
      %p114 = scmp.eq.s32.totalorder %s18, 0
      %p115 = por %p113, %p114
      %p116 = scmp.ne.s32.totalorder %s108, %s110
      %p117 = scmp.eq.s32.totalorder %s23, 3
      %p118 = por %p116, %p117
      %p119 = scmp.ne.s32.totalorder %s110, %s111
      %p120 = scmp.eq.s32.totalorder %s23, 0
      %p121 = por %p119, %p120
      %p122 = scmp.ne.s32.totalorder %s110, %s111
      %p123 = scmp.eq.s32.totalorder %s24, 3
      %p124 = por %p122, %p123
      %p126 = scmp.ne.s32.totalorder %s111, %s125
      %p127 = scmp.eq.s32.totalorder %s24, 0
      %p128 = por %p126, %p127
      %s130 = sadd.s32 %s129, 1
      %p133 = scmp.eq.s32.totalorder %s18, 3
      %p134 = scmp.ne.s32.totalorder %s129, %s131
      %p135 = scmp.eq.s32.totalorder %s18, 0
      %p136 = por %p134, %p135
      %p137 = scmp.ne.s32.totalorder %s129, %s131
      %p138 = scmp.eq.s32.totalorder %s23, 3
      %p139 = por %p137, %p138
      %p140 = scmp.ne.s32.totalorder %s131, %s132
      %p141 = scmp.eq.s32.totalorder %s23, 0
      %p142 = por %p140, %p141
      %p143 = scmp.ne.s32.totalorder %s131, %s132
      %p144 = scmp.eq.s32.totalorder %s24, 3
      %p145 = por %p143, %p144
      %p147 = scmp.ne.s32.totalorder %s132, %s146
      %p148 = scmp.eq.s32.totalorder %s24, 0
      %p149 = por %p147, %p148
      %s150 = ssub.s32 %s25, %s37
      %s151 = ssub.s32 %s26, %s33
      %s152 = sor.u32 %s150, %s151
      %p153 = scmp.eq.s32.totalorder %s152, 0
      %s155 = sadd.s32 %s154, 1
      %s156 = scalar_select %p153, %s154, %s155
      %p159 = pneg %p153
      %p160 = scmp.eq.s32.totalorder %s18, 3
      %p161 = por %p159, %p160
      %p162 = scmp.ne.s32.totalorder %s154, %s157
      %p163 = scmp.eq.s32.totalorder %s18, 0
      %p164 = por %p162, %p163
      %p165 = scmp.ne.s32.totalorder %s154, %s157
      %p166 = scmp.eq.s32.totalorder %s23, 3
      %p167 = por %p165, %p166
      %p168 = scmp.ne.s32.totalorder %s157, %s158
      %p169 = scmp.eq.s32.totalorder %s23, 0
      %p170 = por %p168, %p169
      %p171 = scmp.ne.s32.totalorder %s157, %s158
      %p172 = scmp.eq.s32.totalorder %s24, 3
      %p173 = por %p171, %p172
      %p175 = scmp.ne.s32.totalorder %s158, %s174
      %p176 = scmp.eq.s32.totalorder %s24, 0
      %p177 = por %p175, %p176
      %p178 = scmp.le.s32.totalorder 1, %s18
      %p179 = scmp.lt.s32.totalorder %s18, 5
      %p180 = pnand %p178, %p179
      %p181 = pneg %p180
      // Predicated region
      $region9: #{tpu_custom_call.1} parent=5 // pred_check
        _
      $region10: #{tpu_custom_call.1} parent=5 // pred_check_branch
        %183 = sbr.rel (%p180) target = $region12
      $region11: #{tpu_custom_call.1} parent=5 // pred_region
        %s184 = ssub.s32 %s18, 1
        // Predicated region
        $region13: #{tpu_custom_call.1} parent=11 // pred_check
          %p185 = pneg %p79
        $region14: #{tpu_custom_call.1} parent=11 // pred_check_branch
          %187 = sbr.rel (%p185) target = $region16
        $region15: #{tpu_custom_call.1} parent=11 // pred_region
          %s189 = ssub.s32 2048, 2048
          %190 = vsyncadd [#allocation7], %s189
          %s191 = sshll.u32 [#allocation6], 4
          %s192 = int_to_ptr.vmem [resolvable:$true] %s191
          %197 = dma.hbm_to_vmem [thread:$0]  %s1, 2048, %s192, [#allocation7], 128, 128, 8
        $region16: #{tpu_custom_call.1} parent=11 // pred_fallthru
          _
        // Predicated region
        $region17: #{tpu_custom_call.1} parent=11 // pred_check
          %p198 = pneg %p100
        $region18: #{tpu_custom_call.1} parent=11 // pred_check_branch
          %200 = sbr.rel (%p198) target = $region20
        $region19: #{tpu_custom_call.1} parent=11 // pred_region
          _
        $region20: #{tpu_custom_call.1} parent=11 // pred_fallthru
          _
        // Predicated region
        $region21: #{tpu_custom_call.1} parent=11 // pred_check
          %p201 = pneg %p121
        $region22: #{tpu_custom_call.1} parent=11 // pred_check_branch
          %203 = sbr.rel (%p201) target = $region24
        $region23: #{tpu_custom_call.1} parent=11 // pred_region
          %s205 = ssub.s32 8192, 8192
          %206 = vsyncadd [#allocation7], %s205
          %s207 = sshll.u32 [#allocation8], 4
          %s208 = int_to_ptr.vmem [resolvable:$true] %s207
          %213 = dma.hbm_to_vmem [thread:$0]  %s3, 8192, %s208, [#allocation7], 128, 128, 8
        $region24: #{tpu_custom_call.1} parent=11 // pred_fallthru
          _
        // Predicated region
        $region25: #{tpu_custom_call.1} parent=11 // pred_check
          %p214 = pneg %p142
        $region26: #{tpu_custom_call.1} parent=11 // pred_check_branch
          %216 = sbr.rel (%p214) target = $region28
        $region27: #{tpu_custom_call.1} parent=11 // pred_region
          _
        $region28: #{tpu_custom_call.1} parent=11 // pred_fallthru
          _
      $region12: #{tpu_custom_call.1} parent=5 // pred_fallthru
        _
      %p217 = scmp.lt.s32.totalorder %s18, 4
      // Predicated region
      $region29: #{tpu_custom_call.1} parent=5 // pred_check
        %p218 = pneg %p217
      $region30: #{tpu_custom_call.1} parent=5 // pred_check_branch
        %220 = sbr.rel (%p218) target = $region32
      $region31: #{tpu_custom_call.1} parent=5 // pred_region
        // Predicated region
        $region33: #{tpu_custom_call.1} parent=31 // pred_check
          %p221 = pneg %p52
        $region34: #{tpu_custom_call.1} parent=31 // pred_check_branch
          %223 = sbr.rel (%p221) target = $region36
        $region35: #{tpu_custom_call.1} parent=31 // pred_region
          %s224 = sand.u32 %s42, 1
          %s225 = scalar_lea.sflag [#allocation4], %s224
          %s226 = sand.u32 %s42, 1
          %s227 = smul.addr %s226, 320
          %s228 = scalar_lea.vmem [#allocation3], %s227
          %s230 = ssub.s32 5120, 5120
          %231 = vsyncadd %s225, %s230
          %s232 = smul.addr %s26, 40
          %s233 = smul.addr %s25, 80
          %s234 = sadd.s32 %s232, %s233
          %s235 = smul.addr %s234, 128
          %s236 = scalar_lea.hbm %s0, %s235
          %s237 = sshll.u32 %s228, 4
          %s238 = int_to_ptr.vmem [resolvable:$true] %s237
          %243 = dma.hbm_to_vmem [thread:$0]  %s236, 5120, %s238, %s225, 128, 128, 8
        $region36: #{tpu_custom_call.1} parent=31 // pred_fallthru
          _
      $region32: #{tpu_custom_call.1} parent=5 // pred_fallthru
        _
      %p244 = scmp.le.s32.totalorder 1, %s18
      %p245 = scmp.lt.s32.totalorder %s18, 5
      %p246 = pnand %p244, %p245
      %p247 = pneg %p246
      // Predicated region
      $region37: #{tpu_custom_call.1} parent=5 // pred_check
        _
      $region38: #{tpu_custom_call.1} parent=5 // pred_check_branch
        %249 = sbr.rel (%p246) target = $region40
      $region39: #{tpu_custom_call.1} parent=5 // pred_region
        %s250 = ssub.s32 %s18, 1
        %s251 = sand.u32 %s45, 1
        %s252 = scalar_lea.sflag [#allocation4], %s251
        %s253 = sand.u32 %s45, 1
        %s254 = smul.addr %s253, 320
        %s255 = scalar_lea.vmem [#allocation3], %s254
        // Predicated region
        $region41: #{tpu_custom_call.1} parent=39 // pred_check
          %p256 = pneg %p58
        $region42: #{tpu_custom_call.1} parent=39 // pred_check_branch
          %258 = sbr.rel (%p256) target = $region44
        $region43: #{tpu_custom_call.1} parent=39 // pred_region
          %259 = dma.done %s252, 5120
        $region44: #{tpu_custom_call.1} parent=39 // pred_fallthru
          _
        // Predicated region
        $region45: #{tpu_custom_call.1} parent=39 // pred_check
          %p260 = pneg %p79
        $region46: #{tpu_custom_call.1} parent=39 // pred_check_branch
          %262 = sbr.rel (%p260) target = $region48
        $region47: #{tpu_custom_call.1} parent=39 // pred_region
          %263 = dma.done [#allocation7], 2048
        $region48: #{tpu_custom_call.1} parent=39 // pred_fallthru
          _
        // Predicated region
        $region49: #{tpu_custom_call.1} parent=39 // pred_check
          %p264 = pneg %p121
        $region50: #{tpu_custom_call.1} parent=39 // pred_check_branch
          %266 = sbr.rel (%p264) target = $region52
        $region51: #{tpu_custom_call.1} parent=39 // pred_region
          %267 = dma.done [#allocation7], 8192
        $region52: #{tpu_custom_call.1} parent=39 // pred_fallthru
          _
        %s268 = sand.u32 %s45, 1
        %s269 = scalar_lea.sflag [#allocation4], %s268
        %s270 = sand.u32 %s45, 1
        %s271 = smul.addr %s270, 320
        %s272 = scalar_lea.vmem [#allocation3], %s271
        %p273 = pneg %p58
        %p274 = pneg %p55
        %p275 = pneg %p79
        %p276 = pneg %p76
        %p277 = pneg %p100
        %p278 = pneg %p97
        %p279 = pneg %p121
        %p280 = pneg %p118
        %p281 = pneg %p142
        %p282 = pneg %p139
        %p283 = pneg %p170
        %p284 = pneg %p167
        %s285 = sand.u32 %s157, 1
        %s286 = scalar_lea.sflag [#allocation5], %s285
        %s287 = sand.u32 %s157, 1
        %s288 = smul.addr %s287, 128
        %s289 = scalar_lea.vmem [#allocation9], %s288
        %s290 = smul.u32 8, %s28
        %v291 = vld [vmem:[%s255] sm:$0xff]
        %v292 = vld [vmem:[%s255 + $0x8] sm:$0xff]
        %v293 = vld [vmem:[%s255 + $0x10] sm:$0xff]
        %v294 = vld [vmem:[%s255 + $0x18] sm:$0xff]
        %v295 = vld [vmem:[%s255 + $0x20] sm:$0xff]
        %v296 = vld [vmem:[%s255 + $0x28] sm:$0xff]
        %v297 = vld [vmem:[%s255 + $0x30] sm:$0xff]
        %v298 = vld [vmem:[%s255 + $0x38] sm:$0xff]
        %v299 = vld [vmem:[%s255 + $0x40] sm:$0xff]
        %v300 = vld [vmem:[%s255 + $0x48] sm:$0xff]
        %v301 = vld [vmem:[%s255 + $0x50] sm:$0xff]
        %v302 = vld [vmem:[%s255 + $0x58] sm:$0xff]
        %v303 = vld [vmem:[%s255 + $0x60] sm:$0xff]
        %v304 = vld [vmem:[%s255 + $0x68] sm:$0xff]
        %v305 = vld [vmem:[%s255 + $0x70] sm:$0xff]
        %v306 = vld [vmem:[%s255 + $0x78] sm:$0xff]
        %v307 = vld [vmem:[%s255 + $0x80] sm:$0xff]
        %v308 = vld [vmem:[%s255 + $0x88] sm:$0xff]
        %v309 = vld [vmem:[%s255 + $0x90] sm:$0xff]
        %v310 = vld [vmem:[%s255 + $0x98] sm:$0xff]
        %v311 = vld [vmem:[%s255 + $0xa0] sm:$0xff]
        %v312 = vld [vmem:[%s255 + $0xa8] sm:$0xff]
        %v313 = vld [vmem:[%s255 + $0xb0] sm:$0xff]
        %v314 = vld [vmem:[%s255 + $0xb8] sm:$0xff]
        %v315 = vld [vmem:[%s255 + $0xc0] sm:$0xff]
        %v316 = vld [vmem:[%s255 + $0xc8] sm:$0xff]
        %v317 = vld [vmem:[%s255 + $0xd0] sm:$0xff]
        %v318 = vld [vmem:[%s255 + $0xd8] sm:$0xff]
        %v319 = vld [vmem:[%s255 + $0xe0] sm:$0xff]
        %v320 = vld [vmem:[%s255 + $0xe8] sm:$0xff]
        %v321 = vld [vmem:[%s255 + $0xf0] sm:$0xff]
        %v322 = vld [vmem:[%s255 + $0xf8] sm:$0xff]
        %v323 = vld [vmem:[%s255 + $0x100] sm:$0xff]
        %v324 = vld [vmem:[%s255 + $0x108] sm:$0xff]
        %v325 = vld [vmem:[%s255 + $0x110] sm:$0xff]
        %v326 = vld [vmem:[%s255 + $0x118] sm:$0xff]
        %v327 = vld [vmem:[%s255 + $0x120] sm:$0xff]
        %v328 = vld [vmem:[%s255 + $0x128] sm:$0xff]
        %v329 = vld [vmem:[%s255 + $0x130] sm:$0xff]
        %v330 = vld [vmem:[%s255 + $0x138] sm:$0xff]
        %v331 = vld [vmem:[#allocation6] sm:$0xff]
        %v332 = vld [vmem:[#allocation6 + $0x8] sm:$0xff]
        %v333 = vld [vmem:[#allocation6 + $0x10] sm:$0xff]
        %v334 = vld [vmem:[#allocation6 + $0x18] sm:$0xff]
        %v335 = vld [vmem:[#allocation6 + $0x20] sm:$0xff]
        %v336 = vld [vmem:[#allocation6 + $0x28] sm:$0xff]
        %v337 = vld [vmem:[#allocation6 + $0x30] sm:$0xff]
        %v338 = vld [vmem:[#allocation6 + $0x38] sm:$0xff]
        %v339 = vld [vmem:[#allocation6 + $0x40] sm:$0xff]
        %v340 = vld [vmem:[#allocation6 + $0x48] sm:$0xff]
        %v341 = vld [vmem:[#allocation6 + $0x50] sm:$0xff]
        %v342 = vld [vmem:[#allocation6 + $0x58] sm:$0xff]
        %v343 = vld [vmem:[#allocation6 + $0x60] sm:$0xff]
        %v344 = vld [vmem:[#allocation6 + $0x68] sm:$0xff]
        %v345 = vld [vmem:[#allocation6 + $0x70] sm:$0xff]
        %v346 = vld [vmem:[#allocation6 + $0x78] sm:$0xff]
        %v347 = vld [vmem:[%s2] sm:$0x1]
        %v349 = vlaneseq
        %v350 = vshrl.u32 %v349, 7
        %v351 = vsub.s32 0, %v350
        %v352 = vrot.slane %v347, %v351
        %354 = vmatprep.subr.mxu0 0.0
        %355 = vmatpush1.msra.mxu0 %v331
        %356 = vmatprep.subr.mxu0 0.0
        %357 = vmatpush1.msra.mxu0 %v332
        %358 = vmatprep.subr.mxu0 0.0
        %359 = vmatpush1.msra.mxu0 %v333
        %360 = vmatprep.subr.mxu0 0.0
        %361 = vmatpush1.msra.mxu0 %v334
        %362 = vmatprep.subr.mxu0 0.0
        %363 = vmatpush1.msra.mxu0 %v335
        %364 = vmatprep.subr.mxu0 0.0
        %365 = vmatpush1.msra.mxu0 %v336
        %366 = vmatprep.subr.mxu0 0.0
        %367 = vmatpush1.msra.mxu0 %v337
        %368 = vmatprep.subr.mxu0 0.0
        %369 = vmatpush1.msra.mxu0 %v338
        %370 = vmatprep.subr.mxu0 0.0
        %371 = vmatpush1.msra.mxu0 %v339
        %372 = vmatprep.subr.mxu0 0.0
        %373 = vmatpush1.msra.mxu0 %v340
        %374 = vmatprep.subr.mxu0 0.0
        %375 = vmatpush1.msra.mxu0 %v341
        %376 = vmatprep.subr.mxu0 0.0
        %377 = vmatpush1.msra.mxu0 %v342
        %378 = vmatprep.subr.mxu0 0.0
        %379 = vmatpush1.msra.mxu0 %v343
        %380 = vmatprep.subr.mxu0 0.0
        %381 = vmatpush1.msra.mxu0 %v344
        %382 = vmatprep.subr.mxu0 0.0
        %383 = vmatpush1.msra.mxu0 %v345
        %384 = vmatprep.subr.mxu0 0.0
        %385 = vmatpush1.msra.mxu0 %v346
        %386 = vmatprep.subr.mxu0 0.0
        %387 = vmatpush1.msra.mxu0 0.0
        %388 = vmatprep.subr.mxu0 0.0
        %389 = vmatpush1.msra.mxu0 0.0
        %390 = vmatprep.subr.mxu0 0.0
        %391 = vmatpush1.msra.mxu0 0.0
        %392 = vmatprep.subr.mxu0 0.0
        %393 = vmatpush1.msra.mxu0 0.0
        %394 = vmatprep.subr.mxu0 0.0
        %395 = vmatpush1.msra.mxu0 0.0
        %396 = vmatprep.subr.mxu0 0.0
        %397 = vmatpush1.msra.mxu0 0.0
        %398 = vmatprep.subr.mxu0 0.0
        %399 = vmatpush1.msra.mxu0 0.0
        %400 = vmatprep.subr.mxu0 0.0
        %401 = vmatpush1.msra.mxu0 0.0
        %402 = vmatprep.subr.mxu0 0.0
        %403 = vmatpush1.msra.mxu0 0.0
        %404 = vmatprep.subr.mxu0 0.0
        %405 = vmatpush1.msra.mxu0 0.0
        %406 = vmatprep.subr.mxu0 0.0
        %407 = vmatpush1.msra.mxu0 0.0
        %408 = vmatprep.subr.mxu0 0.0
        %409 = vmatpush1.msra.mxu0 0.0
        %410 = vmatprep.subr.mxu0 0.0
        %411 = vmatpush1.msra.mxu0 0.0
        %412 = vmatprep.subr.mxu0 0.0
        %413 = vmatpush1.msra.mxu0 0.0
        %414 = vmatprep.subr.mxu0 0.0
        %415 = vmatpush1.msra.mxu0 0.0
        %416 = vmatprep.subr.mxu0 0.0
        %417 = vmatpush1.msra.mxu0 0.0
        %418 = vmatprep.mubr.f32.mxu0 0.0
        %419 = vmatmul.mubr.f32.gmra.mrb[0].mxu0 %v291
        %v420 = vpop.f32.mrb[0].mxu0
        %v421 = vadd.f32 %v352, %v420
        %v422 = vpop.f32.mrb[0].mxu0
        %423 = vmatprep.mubr.f32.mxu0 0.0
        %424 = vmatmul.mubr.f32.gmra.mrb[0].mxu0 %v292
        %v425 = vpop.f32.mrb[0].mxu0
        %v426 = vadd.f32 %v352, %v425
        %v427 = vpop.f32.mrb[0].mxu0
        %428 = vmatprep.mubr.f32.mxu0 0.0
        %429 = vmatmul.mubr.f32.gmra.mrb[0].mxu0 %v293
        %v430 = vpop.f32.mrb[0].mxu0
        %v431 = vadd.f32 %v352, %v430
        %v432 = vpop.f32.mrb[0].mxu0
        %433 = vmatprep.mubr.f32.mxu0 0.0
        %434 = vmatmul.mubr.f32.gmra.mrb[0].mxu0 %v294
        %v435 = vpop.f32.mrb[0].mxu0
        %v436 = vadd.f32 %v352, %v435
        %v437 = vpop.f32.mrb[0].mxu0
        %438 = vmatprep.mubr.f32.mxu0 0.0
        %439 = vmatmul.mubr.f32.gmra.mrb[0].mxu0 %v295
        %v440 = vpop.f32.mrb[0].mxu0
        %v441 = vadd.f32 %v352, %v440
        %v442 = vpop.f32.mrb[0].mxu0
        %443 = vmatprep.mubr.f32.mxu0 0.0
        %444 = vmatmul.mubr.f32.gmra.mrb[0].mxu0 %v296
        %v445 = vpop.f32.mrb[0].mxu0
        %v446 = vadd.f32 %v352, %v445
        %v447 = vpop.f32.mrb[0].mxu0
        %448 = vmatprep.mubr.f32.mxu0 0.0
        %449 = vmatmul.mubr.f32.gmra.mrb[0].mxu0 %v297
        %v450 = vpop.f32.mrb[0].mxu0
        %v451 = vadd.f32 %v352, %v450
        %v452 = vpop.f32.mrb[0].mxu0
        %453 = vmatprep.mubr.f32.mxu0 0.0
        %454 = vmatmul.mubr.f32.gmra.mrb[0].mxu0 %v298
        %v455 = vpop.f32.mrb[0].mxu0
        %v456 = vadd.f32 %v352, %v455
        %v457 = vpop.f32.mrb[0].mxu0
        %458 = vmatprep.mubr.f32.mxu0 0.0
        %459 = vmatmul.mubr.f32.gmra.mrb[0].mxu0 %v299
        %v460 = vpop.f32.mrb[0].mxu0
        %v461 = vadd.f32 %v352, %v460
        %v462 = vpop.f32.mrb[0].mxu0
        %463 = vmatprep.mubr.f32.mxu0 0.0
        %464 = vmatmul.mubr.f32.gmra.mrb[0].mxu0 %v300
        %v465 = vpop.f32.mrb[0].mxu0
        %v466 = vadd.f32 %v352, %v465
        %v467 = vpop.f32.mrb[0].mxu0
        %468 = vmatprep.mubr.f32.mxu0 0.0
        %469 = vmatmul.mubr.f32.gmra.mrb[0].mxu0 %v301
        %v470 = vpop.f32.mrb[0].mxu0
        %v471 = vadd.f32 %v352, %v470
        %v472 = vpop.f32.mrb[0].mxu0
        %473 = vmatprep.mubr.f32.mxu0 0.0
        %474 = vmatmul.mubr.f32.gmra.mrb[0].mxu0 %v302
        %v475 = vpop.f32.mrb[0].mxu0
        %v476 = vadd.f32 %v352, %v475
        %v477 = vpop.f32.mrb[0].mxu0
        %478 = vmatprep.mubr.f32.mxu0 0.0
        %479 = vmatmul.mubr.f32.gmra.mrb[0].mxu0 %v303
        %v480 = vpop.f32.mrb[0].mxu0
        %v481 = vadd.f32 %v352, %v480
        %v482 = vpop.f32.mrb[0].mxu0
        %483 = vmatprep.mubr.f32.mxu0 0.0
        %484 = vmatmul.mubr.f32.gmra.mrb[0].mxu0 %v304
        %v485 = vpop.f32.mrb[0].mxu0
        %v486 = vadd.f32 %v352, %v485
        %v487 = vpop.f32.mrb[0].mxu0
        %488 = vmatprep.mubr.f32.mxu0 0.0
        %489 = vmatmul.mubr.f32.gmra.mrb[0].mxu0 %v305
        %v490 = vpop.f32.mrb[0].mxu0
        %v491 = vadd.f32 %v352, %v490
        %v492 = vpop.f32.mrb[0].mxu0
        %493 = vmatprep.mubr.f32.mxu0 0.0
        %494 = vmatmul.mubr.f32.gmra.mrb[0].mxu0 %v306
        %v495 = vpop.f32.mrb[0].mxu0
        %v496 = vadd.f32 %v352, %v495
        %v497 = vpop.f32.mrb[0].mxu0
        %498 = vmatprep.mubr.f32.mxu0 0.0
        %499 = vmatmul.mubr.f32.gmra.mrb[0].mxu0 %v307
        %v500 = vpop.f32.mrb[0].mxu0
        %v501 = vadd.f32 %v352, %v500
        %v502 = vpop.f32.mrb[0].mxu0
        %503 = vmatprep.mubr.f32.mxu0 0.0
        %504 = vmatmul.mubr.f32.gmra.mrb[0].mxu0 %v308
        %v505 = vpop.f32.mrb[0].mxu0
        %v506 = vadd.f32 %v352, %v505
        %v507 = vpop.f32.mrb[0].mxu0
        %508 = vmatprep.mubr.f32.mxu0 0.0
        %509 = vmatmul.mubr.f32.gmra.mrb[0].mxu0 %v309
        %v510 = vpop.f32.mrb[0].mxu0
        %v511 = vadd.f32 %v352, %v510
        %v512 = vpop.f32.mrb[0].mxu0
        %513 = vmatprep.mubr.f32.mxu0 0.0
        %514 = vmatmul.mubr.f32.gmra.mrb[0].mxu0 %v310
        %v515 = vpop.f32.mrb[0].mxu0
        %v516 = vadd.f32 %v352, %v515
        %v517 = vpop.f32.mrb[0].mxu0
        %518 = vmatprep.mubr.f32.mxu0 0.0
        %519 = vmatmul.mubr.f32.gmra.mrb[0].mxu0 %v311
        %v520 = vpop.f32.mrb[0].mxu0
        %v521 = vadd.f32 %v352, %v520
        %v522 = vpop.f32.mrb[0].mxu0
        %523 = vmatprep.mubr.f32.mxu0 0.0
        %524 = vmatmul.mubr.f32.gmra.mrb[0].mxu0 %v312
        %v525 = vpop.f32.mrb[0].mxu0
        %v526 = vadd.f32 %v352, %v525
        %v527 = vpop.f32.mrb[0].mxu0
        %528 = vmatprep.mubr.f32.mxu0 0.0
        %529 = vmatmul.mubr.f32.gmra.mrb[0].mxu0 %v313
        %v530 = vpop.f32.mrb[0].mxu0
        %v531 = vadd.f32 %v352, %v530
        %v532 = vpop.f32.mrb[0].mxu0
        %533 = vmatprep.mubr.f32.mxu0 0.0
        %534 = vmatmul.mubr.f32.gmra.mrb[0].mxu0 %v314
        %v535 = vpop.f32.mrb[0].mxu0
        %v536 = vadd.f32 %v352, %v535
        %v537 = vpop.f32.mrb[0].mxu0
        %538 = vmatprep.mubr.f32.mxu0 0.0
        %539 = vmatmul.mubr.f32.gmra.mrb[0].mxu0 %v315
        %v540 = vpop.f32.mrb[0].mxu0
        %v541 = vadd.f32 %v352, %v540
        %v542 = vpop.f32.mrb[0].mxu0
        %543 = vmatprep.mubr.f32.mxu0 0.0
        %544 = vmatmul.mubr.f32.gmra.mrb[0].mxu0 %v316
        %v545 = vpop.f32.mrb[0].mxu0
        %v546 = vadd.f32 %v352, %v545
        %v547 = vpop.f32.mrb[0].mxu0
        %548 = vmatprep.mubr.f32.mxu0 0.0
        %549 = vmatmul.mubr.f32.gmra.mrb[0].mxu0 %v317
        %v550 = vpop.f32.mrb[0].mxu0
        %v551 = vadd.f32 %v352, %v550
        %v552 = vpop.f32.mrb[0].mxu0
        %553 = vmatprep.mubr.f32.mxu0 0.0
        %554 = vmatmul.mubr.f32.gmra.mrb[0].mxu0 %v318
        %v555 = vpop.f32.mrb[0].mxu0
        %v556 = vadd.f32 %v352, %v555
        %v557 = vpop.f32.mrb[0].mxu0
        %558 = vmatprep.mubr.f32.mxu0 0.0
        %559 = vmatmul.mubr.f32.gmra.mrb[0].mxu0 %v319
        %v560 = vpop.f32.mrb[0].mxu0
        %v561 = vadd.f32 %v352, %v560
        %v562 = vpop.f32.mrb[0].mxu0
        %563 = vmatprep.mubr.f32.mxu0 0.0
        %564 = vmatmul.mubr.f32.gmra.mrb[0].mxu0 %v320
        %v565 = vpop.f32.mrb[0].mxu0
        %v566 = vadd.f32 %v352, %v565
        %v567 = vpop.f32.mrb[0].mxu0
        %568 = vmatprep.mubr.f32.mxu0 0.0
        %569 = vmatmul.mubr.f32.gmra.mrb[0].mxu0 %v321
        %v570 = vpop.f32.mrb[0].mxu0
        %v571 = vadd.f32 %v352, %v570
        %v572 = vpop.f32.mrb[0].mxu0
        %573 = vmatprep.mubr.f32.mxu0 0.0
        %574 = vmatmul.mubr.f32.gmra.mrb[0].mxu0 %v322
        %v575 = vpop.f32.mrb[0].mxu0
        %v576 = vadd.f32 %v352, %v575
        %v577 = vpop.f32.mrb[0].mxu0
        %578 = vmatprep.mubr.f32.mxu0 0.0
        %579 = vmatmul.mubr.f32.gmra.mrb[0].mxu0 %v323
        %v580 = vpop.f32.mrb[0].mxu0
        %v581 = vadd.f32 %v352, %v580
        %v582 = vpop.f32.mrb[0].mxu0
        %583 = vmatprep.mubr.f32.mxu0 0.0
        %584 = vmatmul.mubr.f32.gmra.mrb[0].mxu0 %v324
        %v585 = vpop.f32.mrb[0].mxu0
        %v586 = vadd.f32 %v352, %v585
        %v587 = vpop.f32.mrb[0].mxu0
        %588 = vmatprep.mubr.f32.mxu0 0.0
        %589 = vmatmul.mubr.f32.gmra.mrb[0].mxu0 %v325
        %v590 = vpop.f32.mrb[0].mxu0
        %v591 = vadd.f32 %v352, %v590
        %v592 = vpop.f32.mrb[0].mxu0
        %593 = vmatprep.mubr.f32.mxu0 0.0
        %594 = vmatmul.mubr.f32.gmra.mrb[0].mxu0 %v326
        %v595 = vpop.f32.mrb[0].mxu0
        %v596 = vadd.f32 %v352, %v595
        %v597 = vpop.f32.mrb[0].mxu0
        %598 = vmatprep.mubr.f32.mxu0 0.0
        %599 = vmatmul.mubr.f32.gmra.mrb[0].mxu0 %v327
        %v600 = vpop.f32.mrb[0].mxu0
        %v601 = vadd.f32 %v352, %v600
        %v602 = vpop.f32.mrb[0].mxu0
        %603 = vmatprep.mubr.f32.mxu0 0.0
        %604 = vmatmul.mubr.f32.gmra.mrb[0].mxu0 %v328
        %v605 = vpop.f32.mrb[0].mxu0
        %v606 = vadd.f32 %v352, %v605
        %v607 = vpop.f32.mrb[0].mxu0
        %608 = vmatprep.mubr.f32.mxu0 0.0
        %609 = vmatmul.mubr.f32.gmra.mrb[0].mxu0 %v329
        %v610 = vpop.f32.mrb[0].mxu0
        %v611 = vadd.f32 %v352, %v610
        %v612 = vpop.f32.mrb[0].mxu0
        %613 = vmatprep.mubr.f32.mxu0 0.0
        %614 = vmatmul.mubr.f32.gmra.mrb[0].mxu0 %v330
        %v615 = vpop.f32.mrb[0].mxu0
        %v616 = vadd.f32 %v352, %v615
        %v617 = vpop.f32.mrb[0].mxu0
        %618 = vdwg.mxu0
        %v619 = vsub.f32 0.0, %v421
        %v620 = vsub.f32 0.0, %v426
        %v621 = vsub.f32 0.0, %v431
        %v622 = vsub.f32 0.0, %v436
        %v623 = vsub.f32 0.0, %v441
        %v624 = vsub.f32 0.0, %v446
        %v625 = vsub.f32 0.0, %v451
        %v626 = vsub.f32 0.0, %v456
        %v627 = vsub.f32 0.0, %v461
        %v628 = vsub.f32 0.0, %v466
        %v629 = vsub.f32 0.0, %v471
        %v630 = vsub.f32 0.0, %v476
        %v631 = vsub.f32 0.0, %v481
        %v632 = vsub.f32 0.0, %v486
        %v633 = vsub.f32 0.0, %v491
        %v634 = vsub.f32 0.0, %v496
        %v635 = vsub.f32 0.0, %v501
        %v636 = vsub.f32 0.0, %v506
        %v637 = vsub.f32 0.0, %v511
        %v638 = vsub.f32 0.0, %v516
        %v639 = vsub.f32 0.0, %v521
        %v640 = vsub.f32 0.0, %v526
        %v641 = vsub.f32 0.0, %v531
        %v642 = vsub.f32 0.0, %v536
        %v643 = vsub.f32 0.0, %v541
        %v644 = vsub.f32 0.0, %v546
        %v645 = vsub.f32 0.0, %v551
        %v646 = vsub.f32 0.0, %v556
        %v647 = vsub.f32 0.0, %v561
        %v648 = vsub.f32 0.0, %v566
        %v649 = vsub.f32 0.0, %v571
        %v650 = vsub.f32 0.0, %v576
        %v651 = vsub.f32 0.0, %v581
        %v652 = vsub.f32 0.0, %v586
        %v653 = vsub.f32 0.0, %v591
        %v654 = vsub.f32 0.0, %v596
        %v655 = vsub.f32 0.0, %v601
        %v656 = vsub.f32 0.0, %v606
        %v657 = vsub.f32 0.0, %v611
        %v658 = vsub.f32 0.0, %v616
        %v659 = vmul.f32 %v619, 1.442695
        %v660 = vpow.pop %v659
        %v661 = vmul.f32 %v620, 1.442695
        %v662 = vpow.pop %v661
        %v663 = vmul.f32 %v621, 1.442695
        %v664 = vpow.pop %v663
        %v665 = vmul.f32 %v622, 1.442695
        %v666 = vpow.pop %v665
        %v667 = vmul.f32 %v623, 1.442695
        %v668 = vpow.pop %v667
        %v669 = vmul.f32 %v624, 1.442695
        %v670 = vpow.pop %v669
        %v671 = vmul.f32 %v625, 1.442695
        %v672 = vpow.pop %v671
        %v673 = vmul.f32 %v626, 1.442695
        %v674 = vpow.pop %v673
        %v675 = vmul.f32 %v627, 1.442695
        %v676 = vpow.pop %v675
        %v677 = vmul.f32 %v628, 1.442695
        %v678 = vpow.pop %v677
        %v679 = vmul.f32 %v629, 1.442695
        %v680 = vpow.pop %v679
        %v681 = vmul.f32 %v630, 1.442695
        %v682 = vpow.pop %v681
        %v683 = vmul.f32 %v631, 1.442695
        %v684 = vpow.pop %v683
        %v685 = vmul.f32 %v632, 1.442695
        %v686 = vpow.pop %v685
        %v687 = vmul.f32 %v633, 1.442695
        %v688 = vpow.pop %v687
        %v689 = vmul.f32 %v634, 1.442695
        %v690 = vpow.pop %v689
        %v691 = vmul.f32 %v635, 1.442695
        %v692 = vpow.pop %v691
        %v693 = vmul.f32 %v636, 1.442695
        %v694 = vpow.pop %v693
        %v695 = vmul.f32 %v637, 1.442695
        %v696 = vpow.pop %v695
        %v697 = vmul.f32 %v638, 1.442695
        %v698 = vpow.pop %v697
        %v699 = vmul.f32 %v639, 1.442695
        %v700 = vpow.pop %v699
        %v701 = vmul.f32 %v640, 1.442695
        %v702 = vpow.pop %v701
        %v703 = vmul.f32 %v641, 1.442695
        %v704 = vpow.pop %v703
        %v705 = vmul.f32 %v642, 1.442695
        %v706 = vpow.pop %v705
        %v707 = vmul.f32 %v643, 1.442695
        %v708 = vpow.pop %v707
        %v709 = vmul.f32 %v644, 1.442695
        %v710 = vpow.pop %v709
        %v711 = vmul.f32 %v645, 1.442695
        %v712 = vpow.pop %v711
        %v713 = vmul.f32 %v646, 1.442695
        %v714 = vpow.pop %v713
        %v715 = vmul.f32 %v647, 1.442695
        %v716 = vpow.pop %v715
        %v717 = vmul.f32 %v648, 1.442695
        %v718 = vpow.pop %v717
        %v719 = vmul.f32 %v649, 1.442695
        %v720 = vpow.pop %v719
        %v721 = vmul.f32 %v650, 1.442695
        %v722 = vpow.pop %v721
        %v723 = vmul.f32 %v651, 1.442695
        %v724 = vpow.pop %v723
        %v725 = vmul.f32 %v652, 1.442695
        %v726 = vpow.pop %v725
        %v727 = vmul.f32 %v653, 1.442695
        %v728 = vpow.pop %v727
        %v729 = vmul.f32 %v654, 1.442695
        %v730 = vpow.pop %v729
        %v731 = vmul.f32 %v655, 1.442695
        %v732 = vpow.pop %v731
        %v733 = vmul.f32 %v656, 1.442695
        %v734 = vpow.pop %v733
        %v735 = vmul.f32 %v657, 1.442695
        %v736 = vpow.pop %v735
        %v737 = vmul.f32 %v658, 1.442695
        %v738 = vpow.pop %v737
        %v739 = vadd.f32 %v660, 1.0
        %v740 = vadd.f32 %v662, 1.0
        %v741 = vadd.f32 %v664, 1.0
        %v742 = vadd.f32 %v666, 1.0
        %v743 = vadd.f32 %v668, 1.0
        %v744 = vadd.f32 %v670, 1.0
        %v745 = vadd.f32 %v672, 1.0
        %v746 = vadd.f32 %v674, 1.0
        %v747 = vadd.f32 %v676, 1.0
        %v748 = vadd.f32 %v678, 1.0
        %v749 = vadd.f32 %v680, 1.0
        %v750 = vadd.f32 %v682, 1.0
        %v751 = vadd.f32 %v684, 1.0
        %v752 = vadd.f32 %v686, 1.0
        %v753 = vadd.f32 %v688, 1.0
        %v754 = vadd.f32 %v690, 1.0
        %v755 = vadd.f32 %v692, 1.0
        %v756 = vadd.f32 %v694, 1.0
        %v757 = vadd.f32 %v696, 1.0
        %v758 = vadd.f32 %v698, 1.0
        %v759 = vadd.f32 %v700, 1.0
        %v760 = vadd.f32 %v702, 1.0
        %v761 = vadd.f32 %v704, 1.0
        %v762 = vadd.f32 %v706, 1.0
        %v763 = vadd.f32 %v708, 1.0
        %v764 = vadd.f32 %v710, 1.0
        %v765 = vadd.f32 %v712, 1.0
        %v766 = vadd.f32 %v714, 1.0
        %v767 = vadd.f32 %v716, 1.0
        %v768 = vadd.f32 %v718, 1.0
        %v769 = vadd.f32 %v720, 1.0
        %v770 = vadd.f32 %v722, 1.0
        %v771 = vadd.f32 %v724, 1.0
        %v772 = vadd.f32 %v726, 1.0
        %v773 = vadd.f32 %v728, 1.0
        %v774 = vadd.f32 %v730, 1.0
        %v775 = vadd.f32 %v732, 1.0
        %v776 = vadd.f32 %v734, 1.0
        %v777 = vadd.f32 %v736, 1.0
        %v778 = vadd.f32 %v738, 1.0
        %v779 = vrcp.pop %v739
        %v780 = vrcp.pop %v740
        %v781 = vrcp.pop %v741
        %v782 = vrcp.pop %v742
        %v783 = vrcp.pop %v743
        %v784 = vrcp.pop %v744
        %v785 = vrcp.pop %v745
        %v786 = vrcp.pop %v746
        %v787 = vrcp.pop %v747
        %v788 = vrcp.pop %v748
        %v789 = vrcp.pop %v749
        %v790 = vrcp.pop %v750
        %v791 = vrcp.pop %v751
        %v792 = vrcp.pop %v752
        %v793 = vrcp.pop %v753
        %v794 = vrcp.pop %v754
        %v795 = vrcp.pop %v755
        %v796 = vrcp.pop %v756
        %v797 = vrcp.pop %v757
        %v798 = vrcp.pop %v758
        %v799 = vrcp.pop %v759
        %v800 = vrcp.pop %v760
        %v801 = vrcp.pop %v761
        %v802 = vrcp.pop %v762
        %v803 = vrcp.pop %v763
        %v804 = vrcp.pop %v764
        %v805 = vrcp.pop %v765
        %v806 = vrcp.pop %v766
        %v807 = vrcp.pop %v767
        %v808 = vrcp.pop %v768
        %v809 = vrcp.pop %v769
        %v810 = vrcp.pop %v770
        %v811 = vrcp.pop %v771
        %v812 = vrcp.pop %v772
        %v813 = vrcp.pop %v773
        %v814 = vrcp.pop %v774
        %v815 = vrcp.pop %v775
        %v816 = vrcp.pop %v776
        %v817 = vrcp.pop %v777
        %v818 = vrcp.pop %v778
        %v819 = vmul.f32 %v421, %v779
        %v820 = vmul.f32 %v426, %v780
        %v821 = vmul.f32 %v431, %v781
        %v822 = vmul.f32 %v436, %v782
        %v823 = vmul.f32 %v441, %v783
        %v824 = vmul.f32 %v446, %v784
        %v825 = vmul.f32 %v451, %v785
        %v826 = vmul.f32 %v456, %v786
        %v827 = vmul.f32 %v461, %v787
        %v828 = vmul.f32 %v466, %v788
        %v829 = vmul.f32 %v471, %v789
        %v830 = vmul.f32 %v476, %v790
        %v831 = vmul.f32 %v481, %v791
        %v832 = vmul.f32 %v486, %v792
        %v833 = vmul.f32 %v491, %v793
        %v834 = vmul.f32 %v496, %v794
        %v835 = vmul.f32 %v501, %v795
        %v836 = vmul.f32 %v506, %v796
        %v837 = vmul.f32 %v511, %v797
        %v838 = vmul.f32 %v516, %v798
        %v839 = vmul.f32 %v521, %v799
        %v840 = vmul.f32 %v526, %v800
        %v841 = vmul.f32 %v531, %v801
        %v842 = vmul.f32 %v536, %v802
        %v843 = vmul.f32 %v541, %v803
        %v844 = vmul.f32 %v546, %v804
        %v845 = vmul.f32 %v551, %v805
        %v846 = vmul.f32 %v556, %v806
        %v847 = vmul.f32 %v561, %v807
        %v848 = vmul.f32 %v566, %v808
        %v849 = vmul.f32 %v571, %v809
        %v850 = vmul.f32 %v576, %v810
        %v851 = vmul.f32 %v581, %v811
        %v852 = vmul.f32 %v586, %v812
        %v853 = vmul.f32 %v591, %v813
        %v854 = vmul.f32 %v596, %v814
        %v855 = vmul.f32 %v601, %v815
        %v856 = vmul.f32 %v606, %v816
        %v857 = vmul.f32 %v611, %v817
        %v858 = vmul.f32 %v616, %v818
        %v859 = vlaneseq
        %v860 = vshrl.u32 %v859, 7
        %v861 = vadd.s32 %v860, 8
        %v862 = vadd.s32 %v860, 16
        %v863 = vadd.s32 %v860, 24
        %v864 = vadd.s32 %v860, 32
        %v865 = vadd.s32 %v860, 40
        %v866 = vadd.s32 %v860, 48
        %v867 = vadd.s32 %v860, 56
        %v868 = vadd.s32 %v860, 64
        %v869 = vadd.s32 %v860, 72
        %v870 = vadd.s32 %v860, 80
        %v871 = vadd.s32 %v860, 88
        %v872 = vadd.s32 %v860, 96
        %v873 = vadd.s32 %v860, 104
        %v874 = vadd.s32 %v860, 112
        %v875 = vadd.s32 %v860, 120
        %v876 = vadd.s32 %v860, 128
        %v877 = vadd.s32 %v860, 136
        %v878 = vadd.s32 %v860, 144
        %v879 = vadd.s32 %v860, 152
        %v880 = vadd.s32 %v860, 160
        %v881 = vadd.s32 %v860, 168
        %v882 = vadd.s32 %v860, 176
        %v883 = vadd.s32 %v860, 184
        %v884 = vadd.s32 %v860, 192
        %v885 = vadd.s32 %v860, 200
        %v886 = vadd.s32 %v860, 208
        %v887 = vadd.s32 %v860, 216
        %v888 = vadd.s32 %v860, 224
        %v889 = vadd.s32 %v860, 232
        %v890 = vadd.s32 %v860, 240
        %v891 = vadd.s32 %v860, 248
        %v892 = vadd.s32 %v860, 256
        %v893 = vadd.s32 %v860, 264
        %v894 = vadd.s32 %v860, 272
        %v895 = vadd.s32 %v860, 280
        %v896 = vadd.s32 %v860, 288
        %v897 = vadd.s32 %v860, 296
        %v898 = vadd.s32 %v860, 304
        %v899 = vadd.s32 %v860, 312
        %s900 = smul.u32 %s28, 8
        %s901 = ssub.s32 6, %s900
        %s902 = smul.u32 %s901, 16
        %s903 = ssub.s32 22, %s900
        %s904 = smul.u32 %s903, 16
        %v905 = vstv %s902
        %vm906 = vcmp.ge.s32.totalorder %v860, %v905
        %vm907 = vcmp.ge.s32.totalorder %v861, %v905
        %vm908 = vcmp.ge.s32.totalorder %v862, %v905
        %vm909 = vcmp.ge.s32.totalorder %v863, %v905
        %vm910 = vcmp.ge.s32.totalorder %v864, %v905
        %vm911 = vcmp.ge.s32.totalorder %v865, %v905
        %vm912 = vcmp.ge.s32.totalorder %v866, %v905
        %vm913 = vcmp.ge.s32.totalorder %v867, %v905
        %vm914 = vcmp.ge.s32.totalorder %v868, %v905
        %vm915 = vcmp.ge.s32.totalorder %v869, %v905
        %vm916 = vcmp.ge.s32.totalorder %v870, %v905
        %vm917 = vcmp.ge.s32.totalorder %v871, %v905
        %vm918 = vcmp.ge.s32.totalorder %v872, %v905
        %vm919 = vcmp.ge.s32.totalorder %v873, %v905
        %vm920 = vcmp.ge.s32.totalorder %v874, %v905
        %vm921 = vcmp.ge.s32.totalorder %v875, %v905
        %vm922 = vcmp.ge.s32.totalorder %v876, %v905
        %vm923 = vcmp.ge.s32.totalorder %v877, %v905
        %vm924 = vcmp.ge.s32.totalorder %v878, %v905
        %vm925 = vcmp.ge.s32.totalorder %v879, %v905
        %vm926 = vcmp.ge.s32.totalorder %v880, %v905
        %vm927 = vcmp.ge.s32.totalorder %v881, %v905
        %vm928 = vcmp.ge.s32.totalorder %v882, %v905
        %vm929 = vcmp.ge.s32.totalorder %v883, %v905
        %vm930 = vcmp.ge.s32.totalorder %v884, %v905
        %vm931 = vcmp.ge.s32.totalorder %v885, %v905
        %vm932 = vcmp.ge.s32.totalorder %v886, %v905
        %vm933 = vcmp.ge.s32.totalorder %v887, %v905
        %vm934 = vcmp.ge.s32.totalorder %v888, %v905
        %vm935 = vcmp.ge.s32.totalorder %v889, %v905
        %vm936 = vcmp.ge.s32.totalorder %v890, %v905
        %vm937 = vcmp.ge.s32.totalorder %v891, %v905
        %vm938 = vcmp.ge.s32.totalorder %v892, %v905
        %vm939 = vcmp.ge.s32.totalorder %v893, %v905
        %vm940 = vcmp.ge.s32.totalorder %v894, %v905
        %vm941 = vcmp.ge.s32.totalorder %v895, %v905
        %vm942 = vcmp.ge.s32.totalorder %v896, %v905
        %vm943 = vcmp.ge.s32.totalorder %v897, %v905
        %vm944 = vcmp.ge.s32.totalorder %v898, %v905
        %vm945 = vcmp.ge.s32.totalorder %v899, %v905
        %v946 = vstv %s904
        %vm947 = vcmp.lt.s32.totalorder %v860, %v946
        %vm948 = vcmp.lt.s32.totalorder %v861, %v946
        %vm949 = vcmp.lt.s32.totalorder %v862, %v946
        %vm950 = vcmp.lt.s32.totalorder %v863, %v946
        %vm951 = vcmp.lt.s32.totalorder %v864, %v946
        %vm952 = vcmp.lt.s32.totalorder %v865, %v946
        %vm953 = vcmp.lt.s32.totalorder %v866, %v946
        %vm954 = vcmp.lt.s32.totalorder %v867, %v946
        %vm955 = vcmp.lt.s32.totalorder %v868, %v946
        %vm956 = vcmp.lt.s32.totalorder %v869, %v946
        %vm957 = vcmp.lt.s32.totalorder %v870, %v946
        %vm958 = vcmp.lt.s32.totalorder %v871, %v946
        %vm959 = vcmp.lt.s32.totalorder %v872, %v946
        %vm960 = vcmp.lt.s32.totalorder %v873, %v946
        %vm961 = vcmp.lt.s32.totalorder %v874, %v946
        %vm962 = vcmp.lt.s32.totalorder %v875, %v946
        %vm963 = vcmp.lt.s32.totalorder %v876, %v946
        %vm964 = vcmp.lt.s32.totalorder %v877, %v946
        %vm965 = vcmp.lt.s32.totalorder %v878, %v946
        %vm966 = vcmp.lt.s32.totalorder %v879, %v946
        %vm967 = vcmp.lt.s32.totalorder %v880, %v946
        %vm968 = vcmp.lt.s32.totalorder %v881, %v946
        %vm969 = vcmp.lt.s32.totalorder %v882, %v946
        %vm970 = vcmp.lt.s32.totalorder %v883, %v946
        %vm971 = vcmp.lt.s32.totalorder %v884, %v946
        %vm972 = vcmp.lt.s32.totalorder %v885, %v946
        %vm973 = vcmp.lt.s32.totalorder %v886, %v946
        %vm974 = vcmp.lt.s32.totalorder %v887, %v946
        %vm975 = vcmp.lt.s32.totalorder %v888, %v946
        %vm976 = vcmp.lt.s32.totalorder %v889, %v946
        %vm977 = vcmp.lt.s32.totalorder %v890, %v946
        %vm978 = vcmp.lt.s32.totalorder %v891, %v946
        %vm979 = vcmp.lt.s32.totalorder %v892, %v946
        %vm980 = vcmp.lt.s32.totalorder %v893, %v946
        %vm981 = vcmp.lt.s32.totalorder %v894, %v946
        %vm982 = vcmp.lt.s32.totalorder %v895, %v946
        %vm983 = vcmp.lt.s32.totalorder %v896, %v946
        %vm984 = vcmp.lt.s32.totalorder %v897, %v946
        %vm985 = vcmp.lt.s32.totalorder %v898, %v946
        %vm986 = vcmp.lt.s32.totalorder %v899, %v946
        %vm987 = vmand %vm906, %vm947
        %vm988 = vmand %vm907, %vm948
        %vm989 = vmand %vm908, %vm949
        %vm990 = vmand %vm909, %vm950
        %vm991 = vmand %vm910, %vm951
        %vm992 = vmand %vm911, %vm952
        %vm993 = vmand %vm912, %vm953
        %vm994 = vmand %vm913, %vm954
        %vm995 = vmand %vm914, %vm955
        %vm996 = vmand %vm915, %vm956
        %vm997 = vmand %vm916, %vm957
        %vm998 = vmand %vm917, %vm958
        %vm999 = vmand %vm918, %vm959
        %vm1000 = vmand %vm919, %vm960
        %vm1001 = vmand %vm920, %vm961
        %vm1002 = vmand %vm921, %vm962
        %vm1003 = vmand %vm922, %vm963
        %vm1004 = vmand %vm923, %vm964
        %vm1005 = vmand %vm924, %vm965
        %vm1006 = vmand %vm925, %vm966
        %vm1007 = vmand %vm926, %vm967
        %vm1008 = vmand %vm927, %vm968
        %vm1009 = vmand %vm928, %vm969
        %vm1010 = vmand %vm929, %vm970
        %vm1011 = vmand %vm930, %vm971
        %vm1012 = vmand %vm931, %vm972
        %vm1013 = vmand %vm932, %vm973
        %vm1014 = vmand %vm933, %vm974
        %vm1015 = vmand %vm934, %vm975
        %vm1016 = vmand %vm935, %vm976
        %vm1017 = vmand %vm936, %vm977
        %vm1018 = vmand %vm937, %vm978
        %vm1019 = vmand %vm938, %vm979
        %vm1020 = vmand %vm939, %vm980
        %vm1021 = vmand %vm940, %vm981
        %vm1022 = vmand %vm941, %vm982
        %vm1023 = vmand %vm942, %vm983
        %vm1024 = vmand %vm943, %vm984
        %vm1025 = vmand %vm944, %vm985
        %vm1026 = vmand %vm945, %vm986
        %v1027 = vsel %vm987, %v819, -inf
        %v1028 = vsel %vm988, %v820, -inf
        %v1029 = vsel %vm989, %v821, -inf
        %v1030 = vsel %vm990, %v822, -inf
        %v1031 = vsel %vm991, %v823, -inf
        %v1032 = vsel %vm992, %v824, -inf
        %v1033 = vsel %vm993, %v825, -inf
        %v1034 = vsel %vm994, %v826, -inf
        %v1035 = vsel %vm995, %v827, -inf
        %v1036 = vsel %vm996, %v828, -inf
        %v1037 = vsel %vm997, %v829, -inf
        %v1038 = vsel %vm998, %v830, -inf
        %v1039 = vsel %vm999, %v831, -inf
        %v1040 = vsel %vm1000, %v832, -inf
        %v1041 = vsel %vm1001, %v833, -inf
        %v1042 = vsel %vm1002, %v834, -inf
        %v1043 = vsel %vm1003, %v835, -inf
        %v1044 = vsel %vm1004, %v836, -inf
        %v1045 = vsel %vm1005, %v837, -inf
        %v1046 = vsel %vm1006, %v838, -inf
        %v1047 = vsel %vm1007, %v839, -inf
        %v1048 = vsel %vm1008, %v840, -inf
        %v1049 = vsel %vm1009, %v841, -inf
        %v1050 = vsel %vm1010, %v842, -inf
        %v1051 = vsel %vm1011, %v843, -inf
        %v1052 = vsel %vm1012, %v844, -inf
        %v1053 = vsel %vm1013, %v845, -inf
        %v1054 = vsel %vm1014, %v846, -inf
        %v1055 = vsel %vm1015, %v847, -inf
        %v1056 = vsel %vm1016, %v848, -inf
        %v1057 = vsel %vm1017, %v849, -inf
        %v1058 = vsel %vm1018, %v850, -inf
        %v1059 = vsel %vm1019, %v851, -inf
        %v1060 = vsel %vm1020, %v852, -inf
        %v1061 = vsel %vm1021, %v853, -inf
        %v1062 = vsel %vm1022, %v854, -inf
        %v1063 = vsel %vm1023, %v855, -inf
        %v1064 = vsel %vm1024, %v856, -inf
        %v1065 = vsel %vm1025, %v857, -inf
        %v1066 = vsel %vm1026, %v858, -inf
        %1067 = vst [vmem:[#allocation2] sm:$0x3] -inf
        %1068 = vst [vmem:[#allocation2 + $0x18] sm:$0x3] -inf
        %1069 = vst [vmem:[#allocation2 + $0x30] sm:$0x3] -inf
        %1070 = vst [vmem:[#allocation2 + $0x48] sm:$0x3] -inf
        %1071 = vst [vmem:[#allocation2 + $0x60] sm:$0x3] -inf
        %1072 = vst [vmem:[#allocation2 + $0x78] sm:$0x3] -inf
        %1073 = vst [vmem:[#allocation2 + $0x90] sm:$0x3] -inf
        %1074 = vst [vmem:[#allocation2 + $0xa8] sm:$0x3] -inf
        %1075 = vst [vmem:[#allocation2 + $0xc0] sm:$0x3] -inf
        %1076 = vst [vmem:[#allocation2 + $0xd8] sm:$0x3] -inf
        %1077 = vst [vmem:[#allocation2 + $0xf0] sm:$0x3] -inf
        %1078 = vst [vmem:[#allocation2 + $0x108] sm:$0x3] -inf
        %1079 = vst [vmem:[#allocation2 + $0x120] sm:$0x3] -inf
        %1080 = vst [vmem:[#allocation2 + $0x138] sm:$0x3] -inf
        %1081 = vst [vmem:[#allocation2 + $0x150] sm:$0x3] -inf
        %1082 = vst [vmem:[#allocation2 + $0x168] sm:$0x3] -inf
        %1083 = vst [vmem:[#allocation2 + $0x180] sm:$0x3] -inf
        %1084 = vst [vmem:[#allocation2 + $0x198] sm:$0x3] -inf
        %1085 = vst [vmem:[#allocation2 + $0x1b0] sm:$0x3] -inf
        %1086 = vst [vmem:[#allocation2 + $0x1c8] sm:$0x3] -inf
        %1087 = vst [vmem:[#allocation2 + $0x12] sm:$0x3] -inf
        %1088 = vst [vmem:[#allocation2 + $0x2a] sm:$0x3] -inf
        %1089 = vst [vmem:[#allocation2 + $0x42] sm:$0x3] -inf
        %1090 = vst [vmem:[#allocation2 + $0x5a] sm:$0x3] -inf
        %1091 = vst [vmem:[#allocation2 + $0x72] sm:$0x3] -inf
        %1092 = vst [vmem:[#allocation2 + $0x8a] sm:$0x3] -inf
        %1093 = vst [vmem:[#allocation2 + $0xa2] sm:$0x3] -inf
        %1094 = vst [vmem:[#allocation2 + $0xba] sm:$0x3] -inf
        %1095 = vst [vmem:[#allocation2 + $0xd2] sm:$0x3] -inf
        %1096 = vst [vmem:[#allocation2 + $0xea] sm:$0x3] -inf
        %1097 = vst [vmem:[#allocation2 + $0x102] sm:$0x3] -inf
        %1098 = vst [vmem:[#allocation2 + $0x11a] sm:$0x3] -inf
        %1099 = vst [vmem:[#allocation2 + $0x132] sm:$0x3] -inf
        %1100 = vst [vmem:[#allocation2 + $0x14a] sm:$0x3] -inf
        %1101 = vst [vmem:[#allocation2 + $0x162] sm:$0x3] -inf
        %1102 = vst [vmem:[#allocation2 + $0x17a] sm:$0x3] -inf
        %1103 = vst [vmem:[#allocation2 + $0x192] sm:$0x3] -inf
        %1104 = vst [vmem:[#allocation2 + $0x1aa] sm:$0x3] -inf
        %1105 = vst [vmem:[#allocation2 + $0x1c2] sm:$0x3] -inf
        %1106 = vst [vmem:[#allocation2 + $0x1da] sm:$0x3] -inf
        %1107 = vst [vmem:[#allocation2 + $0x2] sm:$0xff] %v1027
        %1108 = vst [vmem:[#allocation2 + $0xa] sm:$0xff] %v1028
        %1109 = vst [vmem:[#allocation2 + $0x1a] sm:$0xff] %v1029
        %1110 = vst [vmem:[#allocation2 + $0x22] sm:$0xff] %v1030
        %1111 = vst [vmem:[#allocation2 + $0x32] sm:$0xff] %v1031
        %1112 = vst [vmem:[#allocation2 + $0x3a] sm:$0xff] %v1032
        %1113 = vst [vmem:[#allocation2 + $0x4a] sm:$0xff] %v1033
        %1114 = vst [vmem:[#allocation2 + $0x52] sm:$0xff] %v1034
        %1115 = vst [vmem:[#allocation2 + $0x62] sm:$0xff] %v1035
        %1116 = vst [vmem:[#allocation2 + $0x6a] sm:$0xff] %v1036
        %1117 = vst [vmem:[#allocation2 + $0x7a] sm:$0xff] %v1037
        %1118 = vst [vmem:[#allocation2 + $0x82] sm:$0xff] %v1038
        %1119 = vst [vmem:[#allocation2 + $0x92] sm:$0xff] %v1039
        %1120 = vst [vmem:[#allocation2 + $0x9a] sm:$0xff] %v1040
        %1121 = vst [vmem:[#allocation2 + $0xaa] sm:$0xff] %v1041
        %1122 = vst [vmem:[#allocation2 + $0xb2] sm:$0xff] %v1042
        %1123 = vst [vmem:[#allocation2 + $0xc2] sm:$0xff] %v1043
        %1124 = vst [vmem:[#allocation2 + $0xca] sm:$0xff] %v1044
        %1125 = vst [vmem:[#allocation2 + $0xda] sm:$0xff] %v1045
        %1126 = vst [vmem:[#allocation2 + $0xe2] sm:$0xff] %v1046
        %1127 = vst [vmem:[#allocation2 + $0xf2] sm:$0xff] %v1047
        %1128 = vst [vmem:[#allocation2 + $0xfa] sm:$0xff] %v1048
        %1129 = vst [vmem:[#allocation2 + $0x10a] sm:$0xff] %v1049
        %1130 = vst [vmem:[#allocation2 + $0x112] sm:$0xff] %v1050
        %1131 = vst [vmem:[#allocation2 + $0x122] sm:$0xff] %v1051
        %1132 = vst [vmem:[#allocation2 + $0x12a] sm:$0xff] %v1052
        %1133 = vst [vmem:[#allocation2 + $0x13a] sm:$0xff] %v1053
        %1134 = vst [vmem:[#allocation2 + $0x142] sm:$0xff] %v1054
        %1135 = vst [vmem:[#allocation2 + $0x152] sm:$0xff] %v1055
        %1136 = vst [vmem:[#allocation2 + $0x15a] sm:$0xff] %v1056
        %1137 = vst [vmem:[#allocation2 + $0x16a] sm:$0xff] %v1057
        %1138 = vst [vmem:[#allocation2 + $0x172] sm:$0xff] %v1058
        %1139 = vst [vmem:[#allocation2 + $0x182] sm:$0xff] %v1059
        %1140 = vst [vmem:[#allocation2 + $0x18a] sm:$0xff] %v1060
        %1141 = vst [vmem:[#allocation2 + $0x19a] sm:$0xff] %v1061
        %1142 = vst [vmem:[#allocation2 + $0x1a2] sm:$0xff] %v1062
        %1143 = vst [vmem:[#allocation2 + $0x1b2] sm:$0xff] %v1063
        %1144 = vst [vmem:[#allocation2 + $0x1ba] sm:$0xff] %v1064
        %1145 = vst [vmem:[#allocation2 + $0x1ca] sm:$0xff] %v1065
        %1146 = vst [vmem:[#allocation2 + $0x1d2] sm:$0xff] %v1066
        %v1147 = vld [vmem:[#allocation2] sm:$0xff]
        %v1148 = vld [vmem:[#allocation2 + $0x8] sm:$0xff]
        %v1149 = vld [vmem:[#allocation2 + $0x18] sm:$0xff]
        %v1150 = vld [vmem:[#allocation2 + $0x20] sm:$0xff]
        %v1151 = vld [vmem:[#allocation2 + $0x30] sm:$0xff]
        %v1152 = vld [vmem:[#allocation2 + $0x38] sm:$0xff]
        %v1153 = vld [vmem:[#allocation2 + $0x48] sm:$0xff]
        %v1154 = vld [vmem:[#allocation2 + $0x50] sm:$0xff]
        %v1155 = vld [vmem:[#allocation2 + $0x60] sm:$0xff]
        %v1156 = vld [vmem:[#allocation2 + $0x68] sm:$0xff]
        %v1157 = vld [vmem:[#allocation2 + $0x78] sm:$0xff]
        %v1158 = vld [vmem:[#allocation2 + $0x80] sm:$0xff]
        %v1159 = vld [vmem:[#allocation2 + $0x90] sm:$0xff]
        %v1160 = vld [vmem:[#allocation2 + $0x98] sm:$0xff]
        %v1161 = vld [vmem:[#allocation2 + $0xa8] sm:$0xff]
        %v1162 = vld [vmem:[#allocation2 + $0xb0] sm:$0xff]
        %v1163 = vld [vmem:[#allocation2 + $0xc0] sm:$0xff]
        %v1164 = vld [vmem:[#allocation2 + $0xc8] sm:$0xff]
        %v1165 = vld [vmem:[#allocation2 + $0xd8] sm:$0xff]
        %v1166 = vld [vmem:[#allocation2 + $0xe0] sm:$0xff]
        %v1167 = vld [vmem:[#allocation2 + $0xf0] sm:$0xff]
        %v1168 = vld [vmem:[#allocation2 + $0xf8] sm:$0xff]
        %v1169 = vld [vmem:[#allocation2 + $0x108] sm:$0xff]
        %v1170 = vld [vmem:[#allocation2 + $0x110] sm:$0xff]
        %v1171 = vld [vmem:[#allocation2 + $0x120] sm:$0xff]
        %v1172 = vld [vmem:[#allocation2 + $0x128] sm:$0xff]
        %v1173 = vld [vmem:[#allocation2 + $0x138] sm:$0xff]
        %v1174 = vld [vmem:[#allocation2 + $0x140] sm:$0xff]
        %v1175 = vld [vmem:[#allocation2 + $0x150] sm:$0xff]
        %v1176 = vld [vmem:[#allocation2 + $0x158] sm:$0xff]
        %v1177 = vld [vmem:[#allocation2 + $0x168] sm:$0xff]
        %v1178 = vld [vmem:[#allocation2 + $0x170] sm:$0xff]
        %v1179 = vld [vmem:[#allocation2 + $0x180] sm:$0xff]
        %v1180 = vld [vmem:[#allocation2 + $0x188] sm:$0xff]
        %v1181 = vld [vmem:[#allocation2 + $0x198] sm:$0xff]
        %v1182 = vld [vmem:[#allocation2 + $0x1a0] sm:$0xff]
        %v1183 = vld [vmem:[#allocation2 + $0x1b0] sm:$0xff]
        %v1184 = vld [vmem:[#allocation2 + $0x1b8] sm:$0xff]
        %v1185 = vld [vmem:[#allocation2 + $0x1c8] sm:$0xff]
        %v1186 = vld [vmem:[#allocation2 + $0x1d0] sm:$0xff]
        %v1187 = vld [vmem:[#allocation2 + $0x1] sm:$0xff]
        %v1188 = vld [vmem:[#allocation2 + $0x9] sm:$0xff]
        %v1189 = vld [vmem:[#allocation2 + $0x19] sm:$0xff]
        %v1190 = vld [vmem:[#allocation2 + $0x21] sm:$0xff]
        %v1191 = vld [vmem:[#allocation2 + $0x31] sm:$0xff]
        %v1192 = vld [vmem:[#allocation2 + $0x39] sm:$0xff]
        %v1193 = vld [vmem:[#allocation2 + $0x49] sm:$0xff]
        %v1194 = vld [vmem:[#allocation2 + $0x51] sm:$0xff]
        %v1195 = vld [vmem:[#allocation2 + $0x61] sm:$0xff]
        %v1196 = vld [vmem:[#allocation2 + $0x69] sm:$0xff]
        %v1197 = vld [vmem:[#allocation2 + $0x79] sm:$0xff]
        %v1198 = vld [vmem:[#allocation2 + $0x81] sm:$0xff]
        %v1199 = vld [vmem:[#allocation2 + $0x91] sm:$0xff]
        %v1200 = vld [vmem:[#allocation2 + $0x99] sm:$0xff]
        %v1201 = vld [vmem:[#allocation2 + $0xa9] sm:$0xff]
        %v1202 = vld [vmem:[#allocation2 + $0xb1] sm:$0xff]
        %v1203 = vld [vmem:[#allocation2 + $0xc1] sm:$0xff]
        %v1204 = vld [vmem:[#allocation2 + $0xc9] sm:$0xff]
        %v1205 = vld [vmem:[#allocation2 + $0xd9] sm:$0xff]
        %v1206 = vld [vmem:[#allocation2 + $0xe1] sm:$0xff]
        %v1207 = vld [vmem:[#allocation2 + $0xf1] sm:$0xff]
        %v1208 = vld [vmem:[#allocation2 + $0xf9] sm:$0xff]
        %v1209 = vld [vmem:[#allocation2 + $0x109] sm:$0xff]
        %v1210 = vld [vmem:[#allocation2 + $0x111] sm:$0xff]
        %v1211 = vld [vmem:[#allocation2 + $0x121] sm:$0xff]
        %v1212 = vld [vmem:[#allocation2 + $0x129] sm:$0xff]
        %v1213 = vld [vmem:[#allocation2 + $0x139] sm:$0xff]
        %v1214 = vld [vmem:[#allocation2 + $0x141] sm:$0xff]
        %v1215 = vld [vmem:[#allocation2 + $0x151] sm:$0xff]
        %v1216 = vld [vmem:[#allocation2 + $0x159] sm:$0xff]
        %v1217 = vld [vmem:[#allocation2 + $0x169] sm:$0xff]
        %v1218 = vld [vmem:[#allocation2 + $0x171] sm:$0xff]
        %v1219 = vld [vmem:[#allocation2 + $0x181] sm:$0xff]
        %v1220 = vld [vmem:[#allocation2 + $0x189] sm:$0xff]
        %v1221 = vld [vmem:[#allocation2 + $0x199] sm:$0xff]
        %v1222 = vld [vmem:[#allocation2 + $0x1a1] sm:$0xff]
        %v1223 = vld [vmem:[#allocation2 + $0x1b1] sm:$0xff]
        %v1224 = vld [vmem:[#allocation2 + $0x1b9] sm:$0xff]
        %v1225 = vld [vmem:[#allocation2 + $0x1c9] sm:$0xff]
        %v1226 = vld [vmem:[#allocation2 + $0x1d1] sm:$0xff]
        %v1227 = vmax.f32 %v1147, %v1187
        %v1228 = vmax.f32 %v1148, %v1188
        %v1229 = vmax.f32 %v1149, %v1189
        %v1230 = vmax.f32 %v1150, %v1190
        %v1231 = vmax.f32 %v1151, %v1191
        %v1232 = vmax.f32 %v1152, %v1192
        %v1233 = vmax.f32 %v1153, %v1193
        %v1234 = vmax.f32 %v1154, %v1194
        %v1235 = vmax.f32 %v1155, %v1195
        %v1236 = vmax.f32 %v1156, %v1196
        %v1237 = vmax.f32 %v1157, %v1197
        %v1238 = vmax.f32 %v1158, %v1198
        %v1239 = vmax.f32 %v1159, %v1199
        %v1240 = vmax.f32 %v1160, %v1200
        %v1241 = vmax.f32 %v1161, %v1201
        %v1242 = vmax.f32 %v1162, %v1202
        %v1243 = vmax.f32 %v1163, %v1203
        %v1244 = vmax.f32 %v1164, %v1204
        %v1245 = vmax.f32 %v1165, %v1205
        %v1246 = vmax.f32 %v1166, %v1206
        %v1247 = vmax.f32 %v1167, %v1207
        %v1248 = vmax.f32 %v1168, %v1208
        %v1249 = vmax.f32 %v1169, %v1209
        %v1250 = vmax.f32 %v1170, %v1210
        %v1251 = vmax.f32 %v1171, %v1211
        %v1252 = vmax.f32 %v1172, %v1212
        %v1253 = vmax.f32 %v1173, %v1213
        %v1254 = vmax.f32 %v1174, %v1214
        %v1255 = vmax.f32 %v1175, %v1215
        %v1256 = vmax.f32 %v1176, %v1216
        %v1257 = vmax.f32 %v1177, %v1217
        %v1258 = vmax.f32 %v1178, %v1218
        %v1259 = vmax.f32 %v1179, %v1219
        %v1260 = vmax.f32 %v1180, %v1220
        %v1261 = vmax.f32 %v1181, %v1221
        %v1262 = vmax.f32 %v1182, %v1222
        %v1263 = vmax.f32 %v1183, %v1223
        %v1264 = vmax.f32 %v1184, %v1224
        %v1265 = vmax.f32 %v1185, %v1225
        %v1266 = vmax.f32 %v1186, %v1226
        %v1267 = vld [vmem:[#allocation2 + $0x2] sm:$0xff]
        %v1268 = vld [vmem:[#allocation2 + $0xa] sm:$0xff]
        %v1269 = vld [vmem:[#allocation2 + $0x1a] sm:$0xff]
        %v1270 = vld [vmem:[#allocation2 + $0x22] sm:$0xff]
        %v1271 = vld [vmem:[#allocation2 + $0x32] sm:$0xff]
        %v1272 = vld [vmem:[#allocation2 + $0x3a] sm:$0xff]
        %v1273 = vld [vmem:[#allocation2 + $0x4a] sm:$0xff]
        %v1274 = vld [vmem:[#allocation2 + $0x52] sm:$0xff]
        %v1275 = vld [vmem:[#allocation2 + $0x62] sm:$0xff]
        %v1276 = vld [vmem:[#allocation2 + $0x6a] sm:$0xff]
        %v1277 = vld [vmem:[#allocation2 + $0x7a] sm:$0xff]
        %v1278 = vld [vmem:[#allocation2 + $0x82] sm:$0xff]
        %v1279 = vld [vmem:[#allocation2 + $0x92] sm:$0xff]
        %v1280 = vld [vmem:[#allocation2 + $0x9a] sm:$0xff]
        %v1281 = vld [vmem:[#allocation2 + $0xaa] sm:$0xff]
        %v1282 = vld [vmem:[#allocation2 + $0xb2] sm:$0xff]
        %v1283 = vld [vmem:[#allocation2 + $0xc2] sm:$0xff]
        %v1284 = vld [vmem:[#allocation2 + $0xca] sm:$0xff]
        %v1285 = vld [vmem:[#allocation2 + $0xda] sm:$0xff]
        %v1286 = vld [vmem:[#allocation2 + $0xe2] sm:$0xff]
        %v1287 = vld [vmem:[#allocation2 + $0xf2] sm:$0xff]
        %v1288 = vld [vmem:[#allocation2 + $0xfa] sm:$0xff]
        %v1289 = vld [vmem:[#allocation2 + $0x10a] sm:$0xff]
        %v1290 = vld [vmem:[#allocation2 + $0x112] sm:$0xff]
        %v1291 = vld [vmem:[#allocation2 + $0x122] sm:$0xff]
        %v1292 = vld [vmem:[#allocation2 + $0x12a] sm:$0xff]
        %v1293 = vld [vmem:[#allocation2 + $0x13a] sm:$0xff]
        %v1294 = vld [vmem:[#allocation2 + $0x142] sm:$0xff]
        %v1295 = vld [vmem:[#allocation2 + $0x152] sm:$0xff]
        %v1296 = vld [vmem:[#allocation2 + $0x15a] sm:$0xff]
        %v1297 = vld [vmem:[#allocation2 + $0x16a] sm:$0xff]
        %v1298 = vld [vmem:[#allocation2 + $0x172] sm:$0xff]
        %v1299 = vld [vmem:[#allocation2 + $0x182] sm:$0xff]
        %v1300 = vld [vmem:[#allocation2 + $0x18a] sm:$0xff]
        %v1301 = vld [vmem:[#allocation2 + $0x19a] sm:$0xff]
        %v1302 = vld [vmem:[#allocation2 + $0x1a2] sm:$0xff]
        %v1303 = vld [vmem:[#allocation2 + $0x1b2] sm:$0xff]
        %v1304 = vld [vmem:[#allocation2 + $0x1ba] sm:$0xff]
        %v1305 = vld [vmem:[#allocation2 + $0x1ca] sm:$0xff]
        %v1306 = vld [vmem:[#allocation2 + $0x1d2] sm:$0xff]
        %v1307 = vmax.f32 %v1227, %v1267
        %v1308 = vmax.f32 %v1228, %v1268
        %v1309 = vmax.f32 %v1229, %v1269
        %v1310 = vmax.f32 %v1230, %v1270
        %v1311 = vmax.f32 %v1231, %v1271
        %v1312 = vmax.f32 %v1232, %v1272
        %v1313 = vmax.f32 %v1233, %v1273
        %v1314 = vmax.f32 %v1234, %v1274
        %v1315 = vmax.f32 %v1235, %v1275
        %v1316 = vmax.f32 %v1236, %v1276
        %v1317 = vmax.f32 %v1237, %v1277
        %v1318 = vmax.f32 %v1238, %v1278
        %v1319 = vmax.f32 %v1239, %v1279
        %v1320 = vmax.f32 %v1240, %v1280
        %v1321 = vmax.f32 %v1241, %v1281
        %v1322 = vmax.f32 %v1242, %v1282
        %v1323 = vmax.f32 %v1243, %v1283
        %v1324 = vmax.f32 %v1244, %v1284
        %v1325 = vmax.f32 %v1245, %v1285
        %v1326 = vmax.f32 %v1246, %v1286
        %v1327 = vmax.f32 %v1247, %v1287
        %v1328 = vmax.f32 %v1248, %v1288
        %v1329 = vmax.f32 %v1249, %v1289
        %v1330 = vmax.f32 %v1250, %v1290
        %v1331 = vmax.f32 %v1251, %v1291
        %v1332 = vmax.f32 %v1252, %v1292
        %v1333 = vmax.f32 %v1253, %v1293
        %v1334 = vmax.f32 %v1254, %v1294
        %v1335 = vmax.f32 %v1255, %v1295
        %v1336 = vmax.f32 %v1256, %v1296
        %v1337 = vmax.f32 %v1257, %v1297
        %v1338 = vmax.f32 %v1258, %v1298
        %v1339 = vmax.f32 %v1259, %v1299
        %v1340 = vmax.f32 %v1260, %v1300
        %v1341 = vmax.f32 %v1261, %v1301
        %v1342 = vmax.f32 %v1262, %v1302
        %v1343 = vmax.f32 %v1263, %v1303
        %v1344 = vmax.f32 %v1264, %v1304
        %v1345 = vmax.f32 %v1265, %v1305
        %v1346 = vmax.f32 %v1266, %v1306
        %v1347 = vld [vmem:[#allocation2 + $0x3] sm:$0xff]
        %v1348 = vld [vmem:[#allocation2 + $0xb] sm:$0xff]
        %v1349 = vld [vmem:[#allocation2 + $0x1b] sm:$0xff]
        %v1350 = vld [vmem:[#allocation2 + $0x23] sm:$0xff]
        %v1351 = vld [vmem:[#allocation2 + $0x33] sm:$0xff]
        %v1352 = vld [vmem:[#allocation2 + $0x3b] sm:$0xff]
        %v1353 = vld [vmem:[#allocation2 + $0x4b] sm:$0xff]
        %v1354 = vld [vmem:[#allocation2 + $0x53] sm:$0xff]
        %v1355 = vld [vmem:[#allocation2 + $0x63] sm:$0xff]
        %v1356 = vld [vmem:[#allocation2 + $0x6b] sm:$0xff]
        %v1357 = vld [vmem:[#allocation2 + $0x7b] sm:$0xff]
        %v1358 = vld [vmem:[#allocation2 + $0x83] sm:$0xff]
        %v1359 = vld [vmem:[#allocation2 + $0x93] sm:$0xff]
        %v1360 = vld [vmem:[#allocation2 + $0x9b] sm:$0xff]
        %v1361 = vld [vmem:[#allocation2 + $0xab] sm:$0xff]
        %v1362 = vld [vmem:[#allocation2 + $0xb3] sm:$0xff]
        %v1363 = vld [vmem:[#allocation2 + $0xc3] sm:$0xff]
        %v1364 = vld [vmem:[#allocation2 + $0xcb] sm:$0xff]
        %v1365 = vld [vmem:[#allocation2 + $0xdb] sm:$0xff]
        %v1366 = vld [vmem:[#allocation2 + $0xe3] sm:$0xff]
        %v1367 = vld [vmem:[#allocation2 + $0xf3] sm:$0xff]
        %v1368 = vld [vmem:[#allocation2 + $0xfb] sm:$0xff]
        %v1369 = vld [vmem:[#allocation2 + $0x10b] sm:$0xff]
        %v1370 = vld [vmem:[#allocation2 + $0x113] sm:$0xff]
        %v1371 = vld [vmem:[#allocation2 + $0x123] sm:$0xff]
        %v1372 = vld [vmem:[#allocation2 + $0x12b] sm:$0xff]
        %v1373 = vld [vmem:[#allocation2 + $0x13b] sm:$0xff]
        %v1374 = vld [vmem:[#allocation2 + $0x143] sm:$0xff]
        %v1375 = vld [vmem:[#allocation2 + $0x153] sm:$0xff]
        %v1376 = vld [vmem:[#allocation2 + $0x15b] sm:$0xff]
        %v1377 = vld [vmem:[#allocation2 + $0x16b] sm:$0xff]
        %v1378 = vld [vmem:[#allocation2 + $0x173] sm:$0xff]
        %v1379 = vld [vmem:[#allocation2 + $0x183] sm:$0xff]
        %v1380 = vld [vmem:[#allocation2 + $0x18b] sm:$0xff]
        %v1381 = vld [vmem:[#allocation2 + $0x19b] sm:$0xff]
        %v1382 = vld [vmem:[#allocation2 + $0x1a3] sm:$0xff]
        %v1383 = vld [vmem:[#allocation2 + $0x1b3] sm:$0xff]
        %v1384 = vld [vmem:[#allocation2 + $0x1bb] sm:$0xff]
        %v1385 = vld [vmem:[#allocation2 + $0x1cb] sm:$0xff]
        %v1386 = vld [vmem:[#allocation2 + $0x1d3] sm:$0xff]
        %v1387 = vmax.f32 %v1307, %v1347
        %v1388 = vmax.f32 %v1308, %v1348
        %v1389 = vmax.f32 %v1309, %v1349
        %v1390 = vmax.f32 %v1310, %v1350
        %v1391 = vmax.f32 %v1311, %v1351
        %v1392 = vmax.f32 %v1312, %v1352
        %v1393 = vmax.f32 %v1313, %v1353
        %v1394 = vmax.f32 %v1314, %v1354
        %v1395 = vmax.f32 %v1315, %v1355
        %v1396 = vmax.f32 %v1316, %v1356
        %v1397 = vmax.f32 %v1317, %v1357
        %v1398 = vmax.f32 %v1318, %v1358
        %v1399 = vmax.f32 %v1319, %v1359
        %v1400 = vmax.f32 %v1320, %v1360
        %v1401 = vmax.f32 %v1321, %v1361
        %v1402 = vmax.f32 %v1322, %v1362
        %v1403 = vmax.f32 %v1323, %v1363
        %v1404 = vmax.f32 %v1324, %v1364
        %v1405 = vmax.f32 %v1325, %v1365
        %v1406 = vmax.f32 %v1326, %v1366
        %v1407 = vmax.f32 %v1327, %v1367
        %v1408 = vmax.f32 %v1328, %v1368
        %v1409 = vmax.f32 %v1329, %v1369
        %v1410 = vmax.f32 %v1330, %v1370
        %v1411 = vmax.f32 %v1331, %v1371
        %v1412 = vmax.f32 %v1332, %v1372
        %v1413 = vmax.f32 %v1333, %v1373
        %v1414 = vmax.f32 %v1334, %v1374
        %v1415 = vmax.f32 %v1335, %v1375
        %v1416 = vmax.f32 %v1336, %v1376
        %v1417 = vmax.f32 %v1337, %v1377
        %v1418 = vmax.f32 %v1338, %v1378
        %v1419 = vmax.f32 %v1339, %v1379
        %v1420 = vmax.f32 %v1340, %v1380
        %v1421 = vmax.f32 %v1341, %v1381
        %v1422 = vmax.f32 %v1342, %v1382
        %v1423 = vmax.f32 %v1343, %v1383
        %v1424 = vmax.f32 %v1344, %v1384
        %v1425 = vmax.f32 %v1345, %v1385
        %v1426 = vmax.f32 %v1346, %v1386
        %v1427 = vld [vmem:[#allocation2 + $0x4] sm:$0xff]
        %v1428 = vld [vmem:[#allocation2 + $0xc] sm:$0xff]
        %v1429 = vld [vmem:[#allocation2 + $0x1c] sm:$0xff]
        %v1430 = vld [vmem:[#allocation2 + $0x24] sm:$0xff]
        %v1431 = vld [vmem:[#allocation2 + $0x34] sm:$0xff]
        %v1432 = vld [vmem:[#allocation2 + $0x3c] sm:$0xff]
        %v1433 = vld [vmem:[#allocation2 + $0x4c] sm:$0xff]
        %v1434 = vld [vmem:[#allocation2 + $0x54] sm:$0xff]
        %v1435 = vld [vmem:[#allocation2 + $0x64] sm:$0xff]
        %v1436 = vld [vmem:[#allocation2 + $0x6c] sm:$0xff]
        %v1437 = vld [vmem:[#allocation2 + $0x7c] sm:$0xff]
        %v1438 = vld [vmem:[#allocation2 + $0x84] sm:$0xff]
        %v1439 = vld [vmem:[#allocation2 + $0x94] sm:$0xff]
        %v1440 = vld [vmem:[#allocation2 + $0x9c] sm:$0xff]
        %v1441 = vld [vmem:[#allocation2 + $0xac] sm:$0xff]
        %v1442 = vld [vmem:[#allocation2 + $0xb4] sm:$0xff]
        %v1443 = vld [vmem:[#allocation2 + $0xc4] sm:$0xff]
        %v1444 = vld [vmem:[#allocation2 + $0xcc] sm:$0xff]
        %v1445 = vld [vmem:[#allocation2 + $0xdc] sm:$0xff]
        %v1446 = vld [vmem:[#allocation2 + $0xe4] sm:$0xff]
        %v1447 = vld [vmem:[#allocation2 + $0xf4] sm:$0xff]
        %v1448 = vld [vmem:[#allocation2 + $0xfc] sm:$0xff]
        %v1449 = vld [vmem:[#allocation2 + $0x10c] sm:$0xff]
        %v1450 = vld [vmem:[#allocation2 + $0x114] sm:$0xff]
        %v1451 = vld [vmem:[#allocation2 + $0x124] sm:$0xff]
        %v1452 = vld [vmem:[#allocation2 + $0x12c] sm:$0xff]
        %v1453 = vld [vmem:[#allocation2 + $0x13c] sm:$0xff]
        %v1454 = vld [vmem:[#allocation2 + $0x144] sm:$0xff]
        %v1455 = vld [vmem:[#allocation2 + $0x154] sm:$0xff]
        %v1456 = vld [vmem:[#allocation2 + $0x15c] sm:$0xff]
        %v1457 = vld [vmem:[#allocation2 + $0x16c] sm:$0xff]
        %v1458 = vld [vmem:[#allocation2 + $0x174] sm:$0xff]
        %v1459 = vld [vmem:[#allocation2 + $0x184] sm:$0xff]
        %v1460 = vld [vmem:[#allocation2 + $0x18c] sm:$0xff]
        %v1461 = vld [vmem:[#allocation2 + $0x19c] sm:$0xff]
        %v1462 = vld [vmem:[#allocation2 + $0x1a4] sm:$0xff]
        %v1463 = vld [vmem:[#allocation2 + $0x1b4] sm:$0xff]
        %v1464 = vld [vmem:[#allocation2 + $0x1bc] sm:$0xff]
        %v1465 = vld [vmem:[#allocation2 + $0x1cc] sm:$0xff]
        %v1466 = vld [vmem:[#allocation2 + $0x1d4] sm:$0xff]
        %v1467 = vmax.f32 %v1387, %v1427
        %v1468 = vmax.f32 %v1388, %v1428
        %v1469 = vmax.f32 %v1389, %v1429
        %v1470 = vmax.f32 %v1390, %v1430
        %v1471 = vmax.f32 %v1391, %v1431
        %v1472 = vmax.f32 %v1392, %v1432
        %v1473 = vmax.f32 %v1393, %v1433
        %v1474 = vmax.f32 %v1394, %v1434
        %v1475 = vmax.f32 %v1395, %v1435
        %v1476 = vmax.f32 %v1396, %v1436
        %v1477 = vmax.f32 %v1397, %v1437
        %v1478 = vmax.f32 %v1398, %v1438
        %v1479 = vmax.f32 %v1399, %v1439
        %v1480 = vmax.f32 %v1400, %v1440
        %v1481 = vmax.f32 %v1401, %v1441
        %v1482 = vmax.f32 %v1402, %v1442
        %v1483 = vmax.f32 %v1403, %v1443
        %v1484 = vmax.f32 %v1404, %v1444
        %v1485 = vmax.f32 %v1405, %v1445
        %v1486 = vmax.f32 %v1406, %v1446
        %v1487 = vmax.f32 %v1407, %v1447
        %v1488 = vmax.f32 %v1408, %v1448
        %v1489 = vmax.f32 %v1409, %v1449
        %v1490 = vmax.f32 %v1410, %v1450
        %v1491 = vmax.f32 %v1411, %v1451
        %v1492 = vmax.f32 %v1412, %v1452
        %v1493 = vmax.f32 %v1413, %v1453
        %v1494 = vmax.f32 %v1414, %v1454
        %v1495 = vmax.f32 %v1415, %v1455
        %v1496 = vmax.f32 %v1416, %v1456
        %v1497 = vmax.f32 %v1417, %v1457
        %v1498 = vmax.f32 %v1418, %v1458
        %v1499 = vmax.f32 %v1419, %v1459
        %v1500 = vmax.f32 %v1420, %v1460
        %v1501 = vmax.f32 %v1421, %v1461
        %v1502 = vmax.f32 %v1422, %v1462
        %v1503 = vmax.f32 %v1423, %v1463
        %v1504 = vmax.f32 %v1424, %v1464
        %v1505 = vmax.f32 %v1425, %v1465
        %v1506 = vmax.f32 %v1426, %v1466
        %v1507 = vmax.f32 %v1467, %v1469
        %v1508 = vmax.f32 %v1468, %v1470
        %v1509 = vmax.f32 %v1469, %v1471
        %v1510 = vmax.f32 %v1470, %v1472
        %v1511 = vmax.f32 %v1471, %v1473
        %v1512 = vmax.f32 %v1472, %v1474
        %v1513 = vmax.f32 %v1473, %v1475
        %v1514 = vmax.f32 %v1474, %v1476
        %v1515 = vmax.f32 %v1475, %v1477
        %v1516 = vmax.f32 %v1476, %v1478
        %v1517 = vmax.f32 %v1477, %v1479
        %v1518 = vmax.f32 %v1478, %v1480
        %v1519 = vmax.f32 %v1479, %v1481
        %v1520 = vmax.f32 %v1480, %v1482
        %v1521 = vmax.f32 %v1481, %v1483
        %v1522 = vmax.f32 %v1482, %v1484
        %v1523 = vmax.f32 %v1483, %v1485
        %v1524 = vmax.f32 %v1484, %v1486
        %v1525 = vmax.f32 %v1485, %v1487
        %v1526 = vmax.f32 %v1486, %v1488
        %v1527 = vmax.f32 %v1487, %v1489
        %v1528 = vmax.f32 %v1488, %v1490
        %v1529 = vmax.f32 %v1489, %v1491
        %v1530 = vmax.f32 %v1490, %v1492
        %v1531 = vmax.f32 %v1491, %v1493
        %v1532 = vmax.f32 %v1492, %v1494
        %v1533 = vmax.f32 %v1493, %v1495
        %v1534 = vmax.f32 %v1494, %v1496
        %v1535 = vmax.f32 %v1495, %v1497
        %v1536 = vmax.f32 %v1496, %v1498
        %v1537 = vmax.f32 %v1497, %v1499
        %v1538 = vmax.f32 %v1498, %v1500
        %v1539 = vmax.f32 %v1507, %v1471
        %v1540 = vmax.f32 %v1508, %v1472
        %v1541 = vmax.f32 %v1509, %v1473
        %v1542 = vmax.f32 %v1510, %v1474
        %v1543 = vmax.f32 %v1511, %v1475
        %v1544 = vmax.f32 %v1512, %v1476
        %v1545 = vmax.f32 %v1513, %v1477
        %v1546 = vmax.f32 %v1514, %v1478
        %v1547 = vmax.f32 %v1515, %v1479
        %v1548 = vmax.f32 %v1516, %v1480
        %v1549 = vmax.f32 %v1517, %v1481
        %v1550 = vmax.f32 %v1518, %v1482
        %v1551 = vmax.f32 %v1519, %v1483
        %v1552 = vmax.f32 %v1520, %v1484
        %v1553 = vmax.f32 %v1521, %v1485
        %v1554 = vmax.f32 %v1522, %v1486
        %v1555 = vmax.f32 %v1523, %v1487
        %v1556 = vmax.f32 %v1524, %v1488
        %v1557 = vmax.f32 %v1525, %v1489
        %v1558 = vmax.f32 %v1526, %v1490
        %v1559 = vmax.f32 %v1527, %v1491
        %v1560 = vmax.f32 %v1528, %v1492
        %v1561 = vmax.f32 %v1529, %v1493
        %v1562 = vmax.f32 %v1530, %v1494
        %v1563 = vmax.f32 %v1531, %v1495
        %v1564 = vmax.f32 %v1532, %v1496
        %v1565 = vmax.f32 %v1533, %v1497
        %v1566 = vmax.f32 %v1534, %v1498
        %v1567 = vmax.f32 %v1535, %v1499
        %v1568 = vmax.f32 %v1536, %v1500
        %v1569 = vmax.f32 %v1537, %v1501
        %v1570 = vmax.f32 %v1538, %v1502
        %v1571 = vmax.f32 %v1539, %v1473
        %v1572 = vmax.f32 %v1540, %v1474
        %v1573 = vmax.f32 %v1541, %v1475
        %v1574 = vmax.f32 %v1542, %v1476
        %v1575 = vmax.f32 %v1543, %v1477
        %v1576 = vmax.f32 %v1544, %v1478
        %v1577 = vmax.f32 %v1545, %v1479
        %v1578 = vmax.f32 %v1546, %v1480
        %v1579 = vmax.f32 %v1547, %v1481
        %v1580 = vmax.f32 %v1548, %v1482
        %v1581 = vmax.f32 %v1549, %v1483
        %v1582 = vmax.f32 %v1550, %v1484
        %v1583 = vmax.f32 %v1551, %v1485
        %v1584 = vmax.f32 %v1552, %v1486
        %v1585 = vmax.f32 %v1553, %v1487
        %v1586 = vmax.f32 %v1554, %v1488
        %v1587 = vmax.f32 %v1555, %v1489
        %v1588 = vmax.f32 %v1556, %v1490
        %v1589 = vmax.f32 %v1557, %v1491
        %v1590 = vmax.f32 %v1558, %v1492
        %v1591 = vmax.f32 %v1559, %v1493
        %v1592 = vmax.f32 %v1560, %v1494
        %v1593 = vmax.f32 %v1561, %v1495
        %v1594 = vmax.f32 %v1562, %v1496
        %v1595 = vmax.f32 %v1563, %v1497
        %v1596 = vmax.f32 %v1564, %v1498
        %v1597 = vmax.f32 %v1565, %v1499
        %v1598 = vmax.f32 %v1566, %v1500
        %v1599 = vmax.f32 %v1567, %v1501
        %v1600 = vmax.f32 %v1568, %v1502
        %v1601 = vmax.f32 %v1569, %v1503
        %v1602 = vmax.f32 %v1570, %v1504
        %v1603 = vmax.f32 %v1571, %v1475
        %v1604 = vmax.f32 %v1572, %v1476
        %v1605 = vmax.f32 %v1573, %v1477
        %v1606 = vmax.f32 %v1574, %v1478
        %v1607 = vmax.f32 %v1575, %v1479
        %v1608 = vmax.f32 %v1576, %v1480
        %v1609 = vmax.f32 %v1577, %v1481
        %v1610 = vmax.f32 %v1578, %v1482
        %v1611 = vmax.f32 %v1579, %v1483
        %v1612 = vmax.f32 %v1580, %v1484
        %v1613 = vmax.f32 %v1581, %v1485
        %v1614 = vmax.f32 %v1582, %v1486
        %v1615 = vmax.f32 %v1583, %v1487
        %v1616 = vmax.f32 %v1584, %v1488
        %v1617 = vmax.f32 %v1585, %v1489
        %v1618 = vmax.f32 %v1586, %v1490
        %v1619 = vmax.f32 %v1587, %v1491
        %v1620 = vmax.f32 %v1588, %v1492
        %v1621 = vmax.f32 %v1589, %v1493
        %v1622 = vmax.f32 %v1590, %v1494
        %v1623 = vmax.f32 %v1591, %v1495
        %v1624 = vmax.f32 %v1592, %v1496
        %v1625 = vmax.f32 %v1593, %v1497
        %v1626 = vmax.f32 %v1594, %v1498
        %v1627 = vmax.f32 %v1595, %v1499
        %v1628 = vmax.f32 %v1596, %v1500
        %v1629 = vmax.f32 %v1597, %v1501
        %v1630 = vmax.f32 %v1598, %v1502
        %v1631 = vmax.f32 %v1599, %v1503
        %v1632 = vmax.f32 %v1600, %v1504
        %v1633 = vmax.f32 %v1601, %v1505
        %v1634 = vmax.f32 %v1602, %v1506
        %1635 = vst [vmem:[#allocation2 + $0x2] sm:$0xff] %v1603
        %1636 = vst [vmem:[#allocation2 + $0xa] sm:$0xff] %v1604
        %1637 = vst [vmem:[#allocation2 + $0x1a] sm:$0xff] %v1605
        %1638 = vst [vmem:[#allocation2 + $0x22] sm:$0xff] %v1606
        %1639 = vst [vmem:[#allocation2 + $0x32] sm:$0xff] %v1607
        %1640 = vst [vmem:[#allocation2 + $0x3a] sm:$0xff] %v1608
        %1641 = vst [vmem:[#allocation2 + $0x4a] sm:$0xff] %v1609
        %1642 = vst [vmem:[#allocation2 + $0x52] sm:$0xff] %v1610
        %1643 = vst [vmem:[#allocation2 + $0x62] sm:$0xff] %v1611
        %1644 = vst [vmem:[#allocation2 + $0x6a] sm:$0xff] %v1612
        %1645 = vst [vmem:[#allocation2 + $0x7a] sm:$0xff] %v1613
        %1646 = vst [vmem:[#allocation2 + $0x82] sm:$0xff] %v1614
        %1647 = vst [vmem:[#allocation2 + $0x92] sm:$0xff] %v1615
        %1648 = vst [vmem:[#allocation2 + $0x9a] sm:$0xff] %v1616
        %1649 = vst [vmem:[#allocation2 + $0xaa] sm:$0xff] %v1617
        %1650 = vst [vmem:[#allocation2 + $0xb2] sm:$0xff] %v1618
        %1651 = vst [vmem:[#allocation2 + $0xc2] sm:$0xff] %v1619
        %1652 = vst [vmem:[#allocation2 + $0xca] sm:$0xff] %v1620
        %1653 = vst [vmem:[#allocation2 + $0xda] sm:$0xff] %v1621
        %1654 = vst [vmem:[#allocation2 + $0xe2] sm:$0xff] %v1622
        %1655 = vst [vmem:[#allocation2 + $0xf2] sm:$0xff] %v1623
        %1656 = vst [vmem:[#allocation2 + $0xfa] sm:$0xff] %v1624
        %1657 = vst [vmem:[#allocation2 + $0x10a] sm:$0xff] %v1625
        %1658 = vst [vmem:[#allocation2 + $0x112] sm:$0xff] %v1626
        %1659 = vst [vmem:[#allocation2 + $0x122] sm:$0xff] %v1627
        %1660 = vst [vmem:[#allocation2 + $0x12a] sm:$0xff] %v1628
        %1661 = vst [vmem:[#allocation2 + $0x13a] sm:$0xff] %v1629
        %1662 = vst [vmem:[#allocation2 + $0x142] sm:$0xff] %v1630
        %1663 = vst [vmem:[#allocation2 + $0x152] sm:$0xff] %v1631
        %1664 = vst [vmem:[#allocation2 + $0x15a] sm:$0xff] %v1632
        %1665 = vst [vmem:[#allocation2 + $0x16a] sm:$0xff] %v1633
        %1666 = vst [vmem:[#allocation2 + $0x172] sm:$0xff] %v1634
        %v1667 = vld [vmem:[#allocation2] sm:$0xff]
        %v1668 = vld [vmem:[#allocation2 + $0x8] sm:$0xff]
        %v1669 = vld [vmem:[#allocation2 + $0x18] sm:$0xff]
        %v1670 = vld [vmem:[#allocation2 + $0x20] sm:$0xff]
        %v1671 = vld [vmem:[#allocation2 + $0x30] sm:$0xff]
        %v1672 = vld [vmem:[#allocation2 + $0x38] sm:$0xff]
        %v1673 = vld [vmem:[#allocation2 + $0x48] sm:$0xff]
        %v1674 = vld [vmem:[#allocation2 + $0x50] sm:$0xff]
        %v1675 = vld [vmem:[#allocation2 + $0x60] sm:$0xff]
        %v1676 = vld [vmem:[#allocation2 + $0x68] sm:$0xff]
        %v1677 = vld [vmem:[#allocation2 + $0x78] sm:$0xff]
        %v1678 = vld [vmem:[#allocation2 + $0x80] sm:$0xff]
        %v1679 = vld [vmem:[#allocation2 + $0x90] sm:$0xff]
        %v1680 = vld [vmem:[#allocation2 + $0x98] sm:$0xff]
        %v1681 = vld [vmem:[#allocation2 + $0xa8] sm:$0xff]
        %v1682 = vld [vmem:[#allocation2 + $0xb0] sm:$0xff]
        %v1683 = vld [vmem:[#allocation2 + $0xc0] sm:$0xff]
        %v1684 = vld [vmem:[#allocation2 + $0xc8] sm:$0xff]
        %v1685 = vld [vmem:[#allocation2 + $0xd8] sm:$0xff]
        %v1686 = vld [vmem:[#allocation2 + $0xe0] sm:$0xff]
        %v1687 = vld [vmem:[#allocation2 + $0xf0] sm:$0xff]
        %v1688 = vld [vmem:[#allocation2 + $0xf8] sm:$0xff]
        %v1689 = vld [vmem:[#allocation2 + $0x108] sm:$0xff]
        %v1690 = vld [vmem:[#allocation2 + $0x110] sm:$0xff]
        %v1691 = vld [vmem:[#allocation2 + $0x120] sm:$0xff]
        %v1692 = vld [vmem:[#allocation2 + $0x128] sm:$0xff]
        %v1693 = vld [vmem:[#allocation2 + $0x138] sm:$0xff]
        %v1694 = vld [vmem:[#allocation2 + $0x140] sm:$0xff]
        %v1695 = vld [vmem:[#allocation2 + $0x150] sm:$0xff]
        %v1696 = vld [vmem:[#allocation2 + $0x158] sm:$0xff]
        %v1697 = vld [vmem:[#allocation2 + $0x168] sm:$0xff]
        %v1698 = vld [vmem:[#allocation2 + $0x170] sm:$0xff]
        %v1699 = vld [vmem:[#allocation2 + $0x1] sm:$0xff]
        %v1700 = vld [vmem:[#allocation2 + $0x9] sm:$0xff]
        %v1701 = vld [vmem:[#allocation2 + $0x19] sm:$0xff]
        %v1702 = vld [vmem:[#allocation2 + $0x21] sm:$0xff]
        %v1703 = vld [vmem:[#allocation2 + $0x31] sm:$0xff]
        %v1704 = vld [vmem:[#allocation2 + $0x39] sm:$0xff]
        %v1705 = vld [vmem:[#allocation2 + $0x49] sm:$0xff]
        %v1706 = vld [vmem:[#allocation2 + $0x51] sm:$0xff]
        %v1707 = vld [vmem:[#allocation2 + $0x61] sm:$0xff]
        %v1708 = vld [vmem:[#allocation2 + $0x69] sm:$0xff]
        %v1709 = vld [vmem:[#allocation2 + $0x79] sm:$0xff]
        %v1710 = vld [vmem:[#allocation2 + $0x81] sm:$0xff]
        %v1711 = vld [vmem:[#allocation2 + $0x91] sm:$0xff]
        %v1712 = vld [vmem:[#allocation2 + $0x99] sm:$0xff]
        %v1713 = vld [vmem:[#allocation2 + $0xa9] sm:$0xff]
        %v1714 = vld [vmem:[#allocation2 + $0xb1] sm:$0xff]
        %v1715 = vld [vmem:[#allocation2 + $0xc1] sm:$0xff]
        %v1716 = vld [vmem:[#allocation2 + $0xc9] sm:$0xff]
        %v1717 = vld [vmem:[#allocation2 + $0xd9] sm:$0xff]
        %v1718 = vld [vmem:[#allocation2 + $0xe1] sm:$0xff]
        %v1719 = vld [vmem:[#allocation2 + $0xf1] sm:$0xff]
        %v1720 = vld [vmem:[#allocation2 + $0xf9] sm:$0xff]
        %v1721 = vld [vmem:[#allocation2 + $0x109] sm:$0xff]
        %v1722 = vld [vmem:[#allocation2 + $0x111] sm:$0xff]
        %v1723 = vld [vmem:[#allocation2 + $0x121] sm:$0xff]
        %v1724 = vld [vmem:[#allocation2 + $0x129] sm:$0xff]
        %v1725 = vld [vmem:[#allocation2 + $0x139] sm:$0xff]
        %v1726 = vld [vmem:[#allocation2 + $0x141] sm:$0xff]
        %v1727 = vld [vmem:[#allocation2 + $0x151] sm:$0xff]
        %v1728 = vld [vmem:[#allocation2 + $0x159] sm:$0xff]
        %v1729 = vld [vmem:[#allocation2 + $0x169] sm:$0xff]
        %v1730 = vld [vmem:[#allocation2 + $0x171] sm:$0xff]
        %v1731 = vmax.f32 %v1667, %v1699
        %v1732 = vmax.f32 %v1668, %v1700
        %v1733 = vmax.f32 %v1669, %v1701
        %v1734 = vmax.f32 %v1670, %v1702
        %v1735 = vmax.f32 %v1671, %v1703
        %v1736 = vmax.f32 %v1672, %v1704
        %v1737 = vmax.f32 %v1673, %v1705
        %v1738 = vmax.f32 %v1674, %v1706
        %v1739 = vmax.f32 %v1675, %v1707
        %v1740 = vmax.f32 %v1676, %v1708
        %v1741 = vmax.f32 %v1677, %v1709
        %v1742 = vmax.f32 %v1678, %v1710
        %v1743 = vmax.f32 %v1679, %v1711
        %v1744 = vmax.f32 %v1680, %v1712
        %v1745 = vmax.f32 %v1681, %v1713
        %v1746 = vmax.f32 %v1682, %v1714
        %v1747 = vmax.f32 %v1683, %v1715
        %v1748 = vmax.f32 %v1684, %v1716
        %v1749 = vmax.f32 %v1685, %v1717
        %v1750 = vmax.f32 %v1686, %v1718
        %v1751 = vmax.f32 %v1687, %v1719
        %v1752 = vmax.f32 %v1688, %v1720
        %v1753 = vmax.f32 %v1689, %v1721
        %v1754 = vmax.f32 %v1690, %v1722
        %v1755 = vmax.f32 %v1691, %v1723
        %v1756 = vmax.f32 %v1692, %v1724
        %v1757 = vmax.f32 %v1693, %v1725
        %v1758 = vmax.f32 %v1694, %v1726
        %v1759 = vmax.f32 %v1695, %v1727
        %v1760 = vmax.f32 %v1696, %v1728
        %v1761 = vmax.f32 %v1697, %v1729
        %v1762 = vmax.f32 %v1698, %v1730
        %v1763 = vld [vmem:[#allocation2 + $0x2] sm:$0xff]
        %v1764 = vld [vmem:[#allocation2 + $0xa] sm:$0xff]
        %v1765 = vld [vmem:[#allocation2 + $0x1a] sm:$0xff]
        %v1766 = vld [vmem:[#allocation2 + $0x22] sm:$0xff]
        %v1767 = vld [vmem:[#allocation2 + $0x32] sm:$0xff]
        %v1768 = vld [vmem:[#allocation2 + $0x3a] sm:$0xff]
        %v1769 = vld [vmem:[#allocation2 + $0x4a] sm:$0xff]
        %v1770 = vld [vmem:[#allocation2 + $0x52] sm:$0xff]
        %v1771 = vld [vmem:[#allocation2 + $0x62] sm:$0xff]
        %v1772 = vld [vmem:[#allocation2 + $0x6a] sm:$0xff]
        %v1773 = vld [vmem:[#allocation2 + $0x7a] sm:$0xff]
        %v1774 = vld [vmem:[#allocation2 + $0x82] sm:$0xff]
        %v1775 = vld [vmem:[#allocation2 + $0x92] sm:$0xff]
        %v1776 = vld [vmem:[#allocation2 + $0x9a] sm:$0xff]
        %v1777 = vld [vmem:[#allocation2 + $0xaa] sm:$0xff]
        %v1778 = vld [vmem:[#allocation2 + $0xb2] sm:$0xff]
        %v1779 = vld [vmem:[#allocation2 + $0xc2] sm:$0xff]
        %v1780 = vld [vmem:[#allocation2 + $0xca] sm:$0xff]
        %v1781 = vld [vmem:[#allocation2 + $0xda] sm:$0xff]
        %v1782 = vld [vmem:[#allocation2 + $0xe2] sm:$0xff]
        %v1783 = vld [vmem:[#allocation2 + $0xf2] sm:$0xff]
        %v1784 = vld [vmem:[#allocation2 + $0xfa] sm:$0xff]
        %v1785 = vld [vmem:[#allocation2 + $0x10a] sm:$0xff]
        %v1786 = vld [vmem:[#allocation2 + $0x112] sm:$0xff]
        %v1787 = vld [vmem:[#allocation2 + $0x122] sm:$0xff]
        %v1788 = vld [vmem:[#allocation2 + $0x12a] sm:$0xff]
        %v1789 = vld [vmem:[#allocation2 + $0x13a] sm:$0xff]
        %v1790 = vld [vmem:[#allocation2 + $0x142] sm:$0xff]
        %v1791 = vld [vmem:[#allocation2 + $0x152] sm:$0xff]
        %v1792 = vld [vmem:[#allocation2 + $0x15a] sm:$0xff]
        %v1793 = vld [vmem:[#allocation2 + $0x16a] sm:$0xff]
        %v1794 = vld [vmem:[#allocation2 + $0x172] sm:$0xff]
        %v1795 = vmax.f32 %v1731, %v1763
        %v1796 = vmax.f32 %v1732, %v1764
        %v1797 = vmax.f32 %v1733, %v1765
        %v1798 = vmax.f32 %v1734, %v1766
        %v1799 = vmax.f32 %v1735, %v1767
        %v1800 = vmax.f32 %v1736, %v1768
        %v1801 = vmax.f32 %v1737, %v1769
        %v1802 = vmax.f32 %v1738, %v1770
        %v1803 = vmax.f32 %v1739, %v1771
        %v1804 = vmax.f32 %v1740, %v1772
        %v1805 = vmax.f32 %v1741, %v1773
        %v1806 = vmax.f32 %v1742, %v1774
        %v1807 = vmax.f32 %v1743, %v1775
        %v1808 = vmax.f32 %v1744, %v1776
        %v1809 = vmax.f32 %v1745, %v1777
        %v1810 = vmax.f32 %v1746, %v1778
        %v1811 = vmax.f32 %v1747, %v1779
        %v1812 = vmax.f32 %v1748, %v1780
        %v1813 = vmax.f32 %v1749, %v1781
        %v1814 = vmax.f32 %v1750, %v1782
        %v1815 = vmax.f32 %v1751, %v1783
        %v1816 = vmax.f32 %v1752, %v1784
        %v1817 = vmax.f32 %v1753, %v1785
        %v1818 = vmax.f32 %v1754, %v1786
        %v1819 = vmax.f32 %v1755, %v1787
        %v1820 = vmax.f32 %v1756, %v1788
        %v1821 = vmax.f32 %v1757, %v1789
        %v1822 = vmax.f32 %v1758, %v1790
        %v1823 = vmax.f32 %v1759, %v1791
        %v1824 = vmax.f32 %v1760, %v1792
        %v1825 = vmax.f32 %v1761, %v1793
        %v1826 = vmax.f32 %v1762, %v1794
        %v1827 = vld [vmem:[#allocation2 + $0x3] sm:$0xff]
        %v1828 = vld [vmem:[#allocation2 + $0xb] sm:$0xff]
        %v1829 = vld [vmem:[#allocation2 + $0x1b] sm:$0xff]
        %v1830 = vld [vmem:[#allocation2 + $0x23] sm:$0xff]
        %v1831 = vld [vmem:[#allocation2 + $0x33] sm:$0xff]
        %v1832 = vld [vmem:[#allocation2 + $0x3b] sm:$0xff]
        %v1833 = vld [vmem:[#allocation2 + $0x4b] sm:$0xff]
        %v1834 = vld [vmem:[#allocation2 + $0x53] sm:$0xff]
        %v1835 = vld [vmem:[#allocation2 + $0x63] sm:$0xff]
        %v1836 = vld [vmem:[#allocation2 + $0x6b] sm:$0xff]
        %v1837 = vld [vmem:[#allocation2 + $0x7b] sm:$0xff]
        %v1838 = vld [vmem:[#allocation2 + $0x83] sm:$0xff]
        %v1839 = vld [vmem:[#allocation2 + $0x93] sm:$0xff]
        %v1840 = vld [vmem:[#allocation2 + $0x9b] sm:$0xff]
        %v1841 = vld [vmem:[#allocation2 + $0xab] sm:$0xff]
        %v1842 = vld [vmem:[#allocation2 + $0xb3] sm:$0xff]
        %v1843 = vld [vmem:[#allocation2 + $0xc3] sm:$0xff]
        %v1844 = vld [vmem:[#allocation2 + $0xcb] sm:$0xff]
        %v1845 = vld [vmem:[#allocation2 + $0xdb] sm:$0xff]
        %v1846 = vld [vmem:[#allocation2 + $0xe3] sm:$0xff]
        %v1847 = vld [vmem:[#allocation2 + $0xf3] sm:$0xff]
        %v1848 = vld [vmem:[#allocation2 + $0xfb] sm:$0xff]
        %v1849 = vld [vmem:[#allocation2 + $0x10b] sm:$0xff]
        %v1850 = vld [vmem:[#allocation2 + $0x113] sm:$0xff]
        %v1851 = vld [vmem:[#allocation2 + $0x123] sm:$0xff]
        %v1852 = vld [vmem:[#allocation2 + $0x12b] sm:$0xff]
        %v1853 = vld [vmem:[#allocation2 + $0x13b] sm:$0xff]
        %v1854 = vld [vmem:[#allocation2 + $0x143] sm:$0xff]
        %v1855 = vld [vmem:[#allocation2 + $0x153] sm:$0xff]
        %v1856 = vld [vmem:[#allocation2 + $0x15b] sm:$0xff]
        %v1857 = vld [vmem:[#allocation2 + $0x16b] sm:$0xff]
        %v1858 = vld [vmem:[#allocation2 + $0x173] sm:$0xff]
        %v1859 = vmax.f32 %v1795, %v1827
        %v1860 = vmax.f32 %v1796, %v1828
        %v1861 = vmax.f32 %v1797, %v1829
        %v1862 = vmax.f32 %v1798, %v1830
        %v1863 = vmax.f32 %v1799, %v1831
        %v1864 = vmax.f32 %v1800, %v1832
        %v1865 = vmax.f32 %v1801, %v1833
        %v1866 = vmax.f32 %v1802, %v1834
        %v1867 = vmax.f32 %v1803, %v1835
        %v1868 = vmax.f32 %v1804, %v1836
        %v1869 = vmax.f32 %v1805, %v1837
        %v1870 = vmax.f32 %v1806, %v1838
        %v1871 = vmax.f32 %v1807, %v1839
        %v1872 = vmax.f32 %v1808, %v1840
        %v1873 = vmax.f32 %v1809, %v1841
        %v1874 = vmax.f32 %v1810, %v1842
        %v1875 = vmax.f32 %v1811, %v1843
        %v1876 = vmax.f32 %v1812, %v1844
        %v1877 = vmax.f32 %v1813, %v1845
        %v1878 = vmax.f32 %v1814, %v1846
        %v1879 = vmax.f32 %v1815, %v1847
        %v1880 = vmax.f32 %v1816, %v1848
        %v1881 = vmax.f32 %v1817, %v1849
        %v1882 = vmax.f32 %v1818, %v1850
        %v1883 = vmax.f32 %v1819, %v1851
        %v1884 = vmax.f32 %v1820, %v1852
        %v1885 = vmax.f32 %v1821, %v1853
        %v1886 = vmax.f32 %v1822, %v1854
        %v1887 = vmax.f32 %v1823, %v1855
        %v1888 = vmax.f32 %v1824, %v1856
        %v1889 = vmax.f32 %v1825, %v1857
        %v1890 = vmax.f32 %v1826, %v1858
        %v1891 = vld [vmem:[#allocation2 + $0x4] sm:$0xff]
        %v1892 = vld [vmem:[#allocation2 + $0xc] sm:$0xff]
        %v1893 = vld [vmem:[#allocation2 + $0x1c] sm:$0xff]
        %v1894 = vld [vmem:[#allocation2 + $0x24] sm:$0xff]
        %v1895 = vld [vmem:[#allocation2 + $0x34] sm:$0xff]
        %v1896 = vld [vmem:[#allocation2 + $0x3c] sm:$0xff]
        %v1897 = vld [vmem:[#allocation2 + $0x4c] sm:$0xff]
        %v1898 = vld [vmem:[#allocation2 + $0x54] sm:$0xff]
        %v1899 = vld [vmem:[#allocation2 + $0x64] sm:$0xff]
        %v1900 = vld [vmem:[#allocation2 + $0x6c] sm:$0xff]
        %v1901 = vld [vmem:[#allocation2 + $0x7c] sm:$0xff]
        %v1902 = vld [vmem:[#allocation2 + $0x84] sm:$0xff]
        %v1903 = vld [vmem:[#allocation2 + $0x94] sm:$0xff]
        %v1904 = vld [vmem:[#allocation2 + $0x9c] sm:$0xff]
        %v1905 = vld [vmem:[#allocation2 + $0xac] sm:$0xff]
        %v1906 = vld [vmem:[#allocation2 + $0xb4] sm:$0xff]
        %v1907 = vld [vmem:[#allocation2 + $0xc4] sm:$0xff]
        %v1908 = vld [vmem:[#allocation2 + $0xcc] sm:$0xff]
        %v1909 = vld [vmem:[#allocation2 + $0xdc] sm:$0xff]
        %v1910 = vld [vmem:[#allocation2 + $0xe4] sm:$0xff]
        %v1911 = vld [vmem:[#allocation2 + $0xf4] sm:$0xff]
        %v1912 = vld [vmem:[#allocation2 + $0xfc] sm:$0xff]
        %v1913 = vld [vmem:[#allocation2 + $0x10c] sm:$0xff]
        %v1914 = vld [vmem:[#allocation2 + $0x114] sm:$0xff]
        %v1915 = vld [vmem:[#allocation2 + $0x124] sm:$0xff]
        %v1916 = vld [vmem:[#allocation2 + $0x12c] sm:$0xff]
        %v1917 = vld [vmem:[#allocation2 + $0x13c] sm:$0xff]
        %v1918 = vld [vmem:[#allocation2 + $0x144] sm:$0xff]
        %v1919 = vld [vmem:[#allocation2 + $0x154] sm:$0xff]
        %v1920 = vld [vmem:[#allocation2 + $0x15c] sm:$0xff]
        %v1921 = vld [vmem:[#allocation2 + $0x16c] sm:$0xff]
        %v1922 = vld [vmem:[#allocation2 + $0x174] sm:$0xff]
        %v1923 = vmax.f32 %v1859, %v1891
        %v1924 = vmax.f32 %v1860, %v1892
        %v1925 = vmax.f32 %v1861, %v1893
        %v1926 = vmax.f32 %v1862, %v1894
        %v1927 = vmax.f32 %v1863, %v1895
        %v1928 = vmax.f32 %v1864, %v1896
        %v1929 = vmax.f32 %v1865, %v1897
        %v1930 = vmax.f32 %v1866, %v1898
        %v1931 = vmax.f32 %v1867, %v1899
        %v1932 = vmax.f32 %v1868, %v1900
        %v1933 = vmax.f32 %v1869, %v1901
        %v1934 = vmax.f32 %v1870, %v1902
        %v1935 = vmax.f32 %v1871, %v1903
        %v1936 = vmax.f32 %v1872, %v1904
        %v1937 = vmax.f32 %v1873, %v1905
        %v1938 = vmax.f32 %v1874, %v1906
        %v1939 = vmax.f32 %v1875, %v1907
        %v1940 = vmax.f32 %v1876, %v1908
        %v1941 = vmax.f32 %v1877, %v1909
        %v1942 = vmax.f32 %v1878, %v1910
        %v1943 = vmax.f32 %v1879, %v1911
        %v1944 = vmax.f32 %v1880, %v1912
        %v1945 = vmax.f32 %v1881, %v1913
        %v1946 = vmax.f32 %v1882, %v1914
        %v1947 = vmax.f32 %v1883, %v1915
        %v1948 = vmax.f32 %v1884, %v1916
        %v1949 = vmax.f32 %v1885, %v1917
        %v1950 = vmax.f32 %v1886, %v1918
        %v1951 = vmax.f32 %v1887, %v1919
        %v1952 = vmax.f32 %v1888, %v1920
        %v1953 = vmax.f32 %v1889, %v1921
        %v1954 = vmax.f32 %v1890, %v1922
        %v1955 = vmax.f32 %v1923, %v1925
        %v1956 = vmax.f32 %v1924, %v1926
        %v1957 = vmax.f32 %v1925, %v1927
        %v1958 = vmax.f32 %v1926, %v1928
        %v1959 = vmax.f32 %v1927, %v1929
        %v1960 = vmax.f32 %v1928, %v1930
        %v1961 = vmax.f32 %v1929, %v1931
        %v1962 = vmax.f32 %v1930, %v1932
        %v1963 = vmax.f32 %v1931, %v1933
        %v1964 = vmax.f32 %v1932, %v1934
        %v1965 = vmax.f32 %v1933, %v1935
        %v1966 = vmax.f32 %v1934, %v1936
        %v1967 = vmax.f32 %v1935, %v1937
        %v1968 = vmax.f32 %v1936, %v1938
        %v1969 = vmax.f32 %v1937, %v1939
        %v1970 = vmax.f32 %v1938, %v1940
        %v1971 = vmax.f32 %v1939, %v1941
        %v1972 = vmax.f32 %v1940, %v1942
        %v1973 = vmax.f32 %v1941, %v1943
        %v1974 = vmax.f32 %v1942, %v1944
        %v1975 = vmax.f32 %v1943, %v1945
        %v1976 = vmax.f32 %v1944, %v1946
        %v1977 = vmax.f32 %v1945, %v1947
        %v1978 = vmax.f32 %v1946, %v1948
        %v1979 = vmax.f32 %v1955, %v1927
        %v1980 = vmax.f32 %v1956, %v1928
        %v1981 = vmax.f32 %v1957, %v1929
        %v1982 = vmax.f32 %v1958, %v1930
        %v1983 = vmax.f32 %v1959, %v1931
        %v1984 = vmax.f32 %v1960, %v1932
        %v1985 = vmax.f32 %v1961, %v1933
        %v1986 = vmax.f32 %v1962, %v1934
        %v1987 = vmax.f32 %v1963, %v1935
        %v1988 = vmax.f32 %v1964, %v1936
        %v1989 = vmax.f32 %v1965, %v1937
        %v1990 = vmax.f32 %v1966, %v1938
        %v1991 = vmax.f32 %v1967, %v1939
        %v1992 = vmax.f32 %v1968, %v1940
        %v1993 = vmax.f32 %v1969, %v1941
        %v1994 = vmax.f32 %v1970, %v1942
        %v1995 = vmax.f32 %v1971, %v1943
        %v1996 = vmax.f32 %v1972, %v1944
        %v1997 = vmax.f32 %v1973, %v1945
        %v1998 = vmax.f32 %v1974, %v1946
        %v1999 = vmax.f32 %v1975, %v1947
        %v2000 = vmax.f32 %v1976, %v1948
        %v2001 = vmax.f32 %v1977, %v1949
        %v2002 = vmax.f32 %v1978, %v1950
        %v2003 = vmax.f32 %v1979, %v1929
        %v2004 = vmax.f32 %v1980, %v1930
        %v2005 = vmax.f32 %v1981, %v1931
        %v2006 = vmax.f32 %v1982, %v1932
        %v2007 = vmax.f32 %v1983, %v1933
        %v2008 = vmax.f32 %v1984, %v1934
        %v2009 = vmax.f32 %v1985, %v1935
        %v2010 = vmax.f32 %v1986, %v1936
        %v2011 = vmax.f32 %v1987, %v1937
        %v2012 = vmax.f32 %v1988, %v1938
        %v2013 = vmax.f32 %v1989, %v1939
        %v2014 = vmax.f32 %v1990, %v1940
        %v2015 = vmax.f32 %v1991, %v1941
        %v2016 = vmax.f32 %v1992, %v1942
        %v2017 = vmax.f32 %v1993, %v1943
        %v2018 = vmax.f32 %v1994, %v1944
        %v2019 = vmax.f32 %v1995, %v1945
        %v2020 = vmax.f32 %v1996, %v1946
        %v2021 = vmax.f32 %v1997, %v1947
        %v2022 = vmax.f32 %v1998, %v1948
        %v2023 = vmax.f32 %v1999, %v1949
        %v2024 = vmax.f32 %v2000, %v1950
        %v2025 = vmax.f32 %v2001, %v1951
        %v2026 = vmax.f32 %v2002, %v1952
        %v2027 = vmax.f32 %v2003, %v1931
        %v2028 = vmax.f32 %v2004, %v1932
        %v2029 = vmax.f32 %v2005, %v1933
        %v2030 = vmax.f32 %v2006, %v1934
        %v2031 = vmax.f32 %v2007, %v1935
        %v2032 = vmax.f32 %v2008, %v1936
        %v2033 = vmax.f32 %v2009, %v1937
        %v2034 = vmax.f32 %v2010, %v1938
        %v2035 = vmax.f32 %v2011, %v1939
        %v2036 = vmax.f32 %v2012, %v1940
        %v2037 = vmax.f32 %v2013, %v1941
        %v2038 = vmax.f32 %v2014, %v1942
        %v2039 = vmax.f32 %v2015, %v1943
        %v2040 = vmax.f32 %v2016, %v1944
        %v2041 = vmax.f32 %v2017, %v1945
        %v2042 = vmax.f32 %v2018, %v1946
        %v2043 = vmax.f32 %v2019, %v1947
        %v2044 = vmax.f32 %v2020, %v1948
        %v2045 = vmax.f32 %v2021, %v1949
        %v2046 = vmax.f32 %v2022, %v1950
        %v2047 = vmax.f32 %v2023, %v1951
        %v2048 = vmax.f32 %v2024, %v1952
        %v2049 = vmax.f32 %v2025, %v1953
        %v2050 = vmax.f32 %v2026, %v1954
        %2051 = vst [vmem:[#allocation2 + $0x2] sm:$0xff] %v2027
        %2052 = vst [vmem:[#allocation2 + $0xa] sm:$0xff] %v2028
        %2053 = vst [vmem:[#allocation2 + $0x1a] sm:$0xff] %v2029
        %2054 = vst [vmem:[#allocation2 + $0x22] sm:$0xff] %v2030
        %2055 = vst [vmem:[#allocation2 + $0x32] sm:$0xff] %v2031
        %2056 = vst [vmem:[#allocation2 + $0x3a] sm:$0xff] %v2032
        %2057 = vst [vmem:[#allocation2 + $0x4a] sm:$0xff] %v2033
        %2058 = vst [vmem:[#allocation2 + $0x52] sm:$0xff] %v2034
        %2059 = vst [vmem:[#allocation2 + $0x62] sm:$0xff] %v2035
        %2060 = vst [vmem:[#allocation2 + $0x6a] sm:$0xff] %v2036
        %2061 = vst [vmem:[#allocation2 + $0x7a] sm:$0xff] %v2037
        %2062 = vst [vmem:[#allocation2 + $0x82] sm:$0xff] %v2038
        %2063 = vst [vmem:[#allocation2 + $0x92] sm:$0xff] %v2039
        %2064 = vst [vmem:[#allocation2 + $0x9a] sm:$0xff] %v2040
        %2065 = vst [vmem:[#allocation2 + $0xaa] sm:$0xff] %v2041
        %2066 = vst [vmem:[#allocation2 + $0xb2] sm:$0xff] %v2042
        %2067 = vst [vmem:[#allocation2 + $0xc2] sm:$0xff] %v2043
        %2068 = vst [vmem:[#allocation2 + $0xca] sm:$0xff] %v2044
        %2069 = vst [vmem:[#allocation2 + $0xda] sm:$0xff] %v2045
        %2070 = vst [vmem:[#allocation2 + $0xe2] sm:$0xff] %v2046
        %2071 = vst [vmem:[#allocation2 + $0xf2] sm:$0xff] %v2047
        %2072 = vst [vmem:[#allocation2 + $0xfa] sm:$0xff] %v2048
        %2073 = vst [vmem:[#allocation2 + $0x10a] sm:$0xff] %v2049
        %2074 = vst [vmem:[#allocation2 + $0x112] sm:$0xff] %v2050
        %v2075 = vld [vmem:[#allocation2] sm:$0xff]
        %v2076 = vld [vmem:[#allocation2 + $0x8] sm:$0xff]
        %v2077 = vld [vmem:[#allocation2 + $0x18] sm:$0xff]
        %v2078 = vld [vmem:[#allocation2 + $0x20] sm:$0xff]
        %v2079 = vld [vmem:[#allocation2 + $0x30] sm:$0xff]
        %v2080 = vld [vmem:[#allocation2 + $0x38] sm:$0xff]
        %v2081 = vld [vmem:[#allocation2 + $0x48] sm:$0xff]
        %v2082 = vld [vmem:[#allocation2 + $0x50] sm:$0xff]
        %v2083 = vld [vmem:[#allocation2 + $0x60] sm:$0xff]
        %v2084 = vld [vmem:[#allocation2 + $0x68] sm:$0xff]
        %v2085 = vld [vmem:[#allocation2 + $0x78] sm:$0xff]
        %v2086 = vld [vmem:[#allocation2 + $0x80] sm:$0xff]
        %v2087 = vld [vmem:[#allocation2 + $0x90] sm:$0xff]
        %v2088 = vld [vmem:[#allocation2 + $0x98] sm:$0xff]
        %v2089 = vld [vmem:[#allocation2 + $0xa8] sm:$0xff]
        %v2090 = vld [vmem:[#allocation2 + $0xb0] sm:$0xff]
        %v2091 = vld [vmem:[#allocation2 + $0xc0] sm:$0xff]
        %v2092 = vld [vmem:[#allocation2 + $0xc8] sm:$0xff]
        %v2093 = vld [vmem:[#allocation2 + $0xd8] sm:$0xff]
        %v2094 = vld [vmem:[#allocation2 + $0xe0] sm:$0xff]
        %v2095 = vld [vmem:[#allocation2 + $0xf0] sm:$0xff]
        %v2096 = vld [vmem:[#allocation2 + $0xf8] sm:$0xff]
        %v2097 = vld [vmem:[#allocation2 + $0x108] sm:$0xff]
        %v2098 = vld [vmem:[#allocation2 + $0x110] sm:$0xff]
        %v2099 = vld [vmem:[#allocation2 + $0x1] sm:$0xff]
        %v2100 = vld [vmem:[#allocation2 + $0x9] sm:$0xff]
        %v2101 = vld [vmem:[#allocation2 + $0x19] sm:$0xff]
        %v2102 = vld [vmem:[#allocation2 + $0x21] sm:$0xff]
        %v2103 = vld [vmem:[#allocation2 + $0x31] sm:$0xff]
        %v2104 = vld [vmem:[#allocation2 + $0x39] sm:$0xff]
        %v2105 = vld [vmem:[#allocation2 + $0x49] sm:$0xff]
        %v2106 = vld [vmem:[#allocation2 + $0x51] sm:$0xff]
        %v2107 = vld [vmem:[#allocation2 + $0x61] sm:$0xff]
        %v2108 = vld [vmem:[#allocation2 + $0x69] sm:$0xff]
        %v2109 = vld [vmem:[#allocation2 + $0x79] sm:$0xff]
        %v2110 = vld [vmem:[#allocation2 + $0x81] sm:$0xff]
        %v2111 = vld [vmem:[#allocation2 + $0x91] sm:$0xff]
        %v2112 = vld [vmem:[#allocation2 + $0x99] sm:$0xff]
        %v2113 = vld [vmem:[#allocation2 + $0xa9] sm:$0xff]
        %v2114 = vld [vmem:[#allocation2 + $0xb1] sm:$0xff]
        %v2115 = vld [vmem:[#allocation2 + $0xc1] sm:$0xff]
        %v2116 = vld [vmem:[#allocation2 + $0xc9] sm:$0xff]
        %v2117 = vld [vmem:[#allocation2 + $0xd9] sm:$0xff]
        %v2118 = vld [vmem:[#allocation2 + $0xe1] sm:$0xff]
        %v2119 = vld [vmem:[#allocation2 + $0xf1] sm:$0xff]
        %v2120 = vld [vmem:[#allocation2 + $0xf9] sm:$0xff]
        %v2121 = vld [vmem:[#allocation2 + $0x109] sm:$0xff]
        %v2122 = vld [vmem:[#allocation2 + $0x111] sm:$0xff]
        %v2123 = vmax.f32 %v2075, %v2099
        %v2124 = vmax.f32 %v2076, %v2100
        %v2125 = vmax.f32 %v2077, %v2101
        %v2126 = vmax.f32 %v2078, %v2102
        %v2127 = vmax.f32 %v2079, %v2103
        %v2128 = vmax.f32 %v2080, %v2104
        %v2129 = vmax.f32 %v2081, %v2105
        %v2130 = vmax.f32 %v2082, %v2106
        %v2131 = vmax.f32 %v2083, %v2107
        %v2132 = vmax.f32 %v2084, %v2108
        %v2133 = vmax.f32 %v2085, %v2109
        %v2134 = vmax.f32 %v2086, %v2110
        %v2135 = vmax.f32 %v2087, %v2111
        %v2136 = vmax.f32 %v2088, %v2112
        %v2137 = vmax.f32 %v2089, %v2113
        %v2138 = vmax.f32 %v2090, %v2114
        %v2139 = vmax.f32 %v2091, %v2115
        %v2140 = vmax.f32 %v2092, %v2116
        %v2141 = vmax.f32 %v2093, %v2117
        %v2142 = vmax.f32 %v2094, %v2118
        %v2143 = vmax.f32 %v2095, %v2119
        %v2144 = vmax.f32 %v2096, %v2120
        %v2145 = vmax.f32 %v2097, %v2121
        %v2146 = vmax.f32 %v2098, %v2122
        %v2147 = vld [vmem:[#allocation2 + $0x2] sm:$0xff]
        %v2148 = vld [vmem:[#allocation2 + $0xa] sm:$0xff]
        %v2149 = vld [vmem:[#allocation2 + $0x1a] sm:$0xff]
        %v2150 = vld [vmem:[#allocation2 + $0x22] sm:$0xff]
        %v2151 = vld [vmem:[#allocation2 + $0x32] sm:$0xff]
        %v2152 = vld [vmem:[#allocation2 + $0x3a] sm:$0xff]
        %v2153 = vld [vmem:[#allocation2 + $0x4a] sm:$0xff]
        %v2154 = vld [vmem:[#allocation2 + $0x52] sm:$0xff]
        %v2155 = vld [vmem:[#allocation2 + $0x62] sm:$0xff]
        %v2156 = vld [vmem:[#allocation2 + $0x6a] sm:$0xff]
        %v2157 = vld [vmem:[#allocation2 + $0x7a] sm:$0xff]
        %v2158 = vld [vmem:[#allocation2 + $0x82] sm:$0xff]
        %v2159 = vld [vmem:[#allocation2 + $0x92] sm:$0xff]
        %v2160 = vld [vmem:[#allocation2 + $0x9a] sm:$0xff]
        %v2161 = vld [vmem:[#allocation2 + $0xaa] sm:$0xff]
        %v2162 = vld [vmem:[#allocation2 + $0xb2] sm:$0xff]
        %v2163 = vld [vmem:[#allocation2 + $0xc2] sm:$0xff]
        %v2164 = vld [vmem:[#allocation2 + $0xca] sm:$0xff]
        %v2165 = vld [vmem:[#allocation2 + $0xda] sm:$0xff]
        %v2166 = vld [vmem:[#allocation2 + $0xe2] sm:$0xff]
        %v2167 = vld [vmem:[#allocation2 + $0xf2] sm:$0xff]
        %v2168 = vld [vmem:[#allocation2 + $0xfa] sm:$0xff]
        %v2169 = vld [vmem:[#allocation2 + $0x10a] sm:$0xff]
        %v2170 = vld [vmem:[#allocation2 + $0x112] sm:$0xff]
        %v2171 = vmax.f32 %v2123, %v2147
        %v2172 = vmax.f32 %v2124, %v2148
        %v2173 = vmax.f32 %v2125, %v2149
        %v2174 = vmax.f32 %v2126, %v2150
        %v2175 = vmax.f32 %v2127, %v2151
        %v2176 = vmax.f32 %v2128, %v2152
        %v2177 = vmax.f32 %v2129, %v2153
        %v2178 = vmax.f32 %v2130, %v2154
        %v2179 = vmax.f32 %v2131, %v2155
        %v2180 = vmax.f32 %v2132, %v2156
        %v2181 = vmax.f32 %v2133, %v2157
        %v2182 = vmax.f32 %v2134, %v2158
        %v2183 = vmax.f32 %v2135, %v2159
        %v2184 = vmax.f32 %v2136, %v2160
        %v2185 = vmax.f32 %v2137, %v2161
        %v2186 = vmax.f32 %v2138, %v2162
        %v2187 = vmax.f32 %v2139, %v2163
        %v2188 = vmax.f32 %v2140, %v2164
        %v2189 = vmax.f32 %v2141, %v2165
        %v2190 = vmax.f32 %v2142, %v2166
        %v2191 = vmax.f32 %v2143, %v2167
        %v2192 = vmax.f32 %v2144, %v2168
        %v2193 = vmax.f32 %v2145, %v2169
        %v2194 = vmax.f32 %v2146, %v2170
        %v2195 = vld [vmem:[#allocation2 + $0x3] sm:$0xff]
        %v2196 = vld [vmem:[#allocation2 + $0xb] sm:$0xff]
        %v2197 = vld [vmem:[#allocation2 + $0x1b] sm:$0xff]
        %v2198 = vld [vmem:[#allocation2 + $0x23] sm:$0xff]
        %v2199 = vld [vmem:[#allocation2 + $0x33] sm:$0xff]
        %v2200 = vld [vmem:[#allocation2 + $0x3b] sm:$0xff]
        %v2201 = vld [vmem:[#allocation2 + $0x4b] sm:$0xff]
        %v2202 = vld [vmem:[#allocation2 + $0x53] sm:$0xff]
        %v2203 = vld [vmem:[#allocation2 + $0x63] sm:$0xff]
        %v2204 = vld [vmem:[#allocation2 + $0x6b] sm:$0xff]
        %v2205 = vld [vmem:[#allocation2 + $0x7b] sm:$0xff]
        %v2206 = vld [vmem:[#allocation2 + $0x83] sm:$0xff]
        %v2207 = vld [vmem:[#allocation2 + $0x93] sm:$0xff]
        %v2208 = vld [vmem:[#allocation2 + $0x9b] sm:$0xff]
        %v2209 = vld [vmem:[#allocation2 + $0xab] sm:$0xff]
        %v2210 = vld [vmem:[#allocation2 + $0xb3] sm:$0xff]
        %v2211 = vld [vmem:[#allocation2 + $0xc3] sm:$0xff]
        %v2212 = vld [vmem:[#allocation2 + $0xcb] sm:$0xff]
        %v2213 = vld [vmem:[#allocation2 + $0xdb] sm:$0xff]
        %v2214 = vld [vmem:[#allocation2 + $0xe3] sm:$0xff]
        %v2215 = vld [vmem:[#allocation2 + $0xf3] sm:$0xff]
        %v2216 = vld [vmem:[#allocation2 + $0xfb] sm:$0xff]
        %v2217 = vld [vmem:[#allocation2 + $0x10b] sm:$0xff]
        %v2218 = vld [vmem:[#allocation2 + $0x113] sm:$0xff]
        %v2219 = vmax.f32 %v2171, %v2195
        %v2220 = vmax.f32 %v2172, %v2196
        %v2221 = vmax.f32 %v2173, %v2197
        %v2222 = vmax.f32 %v2174, %v2198
        %v2223 = vmax.f32 %v2175, %v2199
        %v2224 = vmax.f32 %v2176, %v2200
        %v2225 = vmax.f32 %v2177, %v2201
        %v2226 = vmax.f32 %v2178, %v2202
        %v2227 = vmax.f32 %v2179, %v2203
        %v2228 = vmax.f32 %v2180, %v2204
        %v2229 = vmax.f32 %v2181, %v2205
        %v2230 = vmax.f32 %v2182, %v2206
        %v2231 = vmax.f32 %v2183, %v2207
        %v2232 = vmax.f32 %v2184, %v2208
        %v2233 = vmax.f32 %v2185, %v2209
        %v2234 = vmax.f32 %v2186, %v2210
        %v2235 = vmax.f32 %v2187, %v2211
        %v2236 = vmax.f32 %v2188, %v2212
        %v2237 = vmax.f32 %v2189, %v2213
        %v2238 = vmax.f32 %v2190, %v2214
        %v2239 = vmax.f32 %v2191, %v2215
        %v2240 = vmax.f32 %v2192, %v2216
        %v2241 = vmax.f32 %v2193, %v2217
        %v2242 = vmax.f32 %v2194, %v2218
        %v2243 = vld [vmem:[#allocation2 + $0x4] sm:$0xff]
        %v2244 = vld [vmem:[#allocation2 + $0xc] sm:$0xff]
        %v2245 = vld [vmem:[#allocation2 + $0x1c] sm:$0xff]
        %v2246 = vld [vmem:[#allocation2 + $0x24] sm:$0xff]
        %v2247 = vld [vmem:[#allocation2 + $0x34] sm:$0xff]
        %v2248 = vld [vmem:[#allocation2 + $0x3c] sm:$0xff]
        %v2249 = vld [vmem:[#allocation2 + $0x4c] sm:$0xff]
        %v2250 = vld [vmem:[#allocation2 + $0x54] sm:$0xff]
        %v2251 = vld [vmem:[#allocation2 + $0x64] sm:$0xff]
        %v2252 = vld [vmem:[#allocation2 + $0x6c] sm:$0xff]
        %v2253 = vld [vmem:[#allocation2 + $0x7c] sm:$0xff]
        %v2254 = vld [vmem:[#allocation2 + $0x84] sm:$0xff]
        %v2255 = vld [vmem:[#allocation2 + $0x94] sm:$0xff]
        %v2256 = vld [vmem:[#allocation2 + $0x9c] sm:$0xff]
        %v2257 = vld [vmem:[#allocation2 + $0xac] sm:$0xff]
        %v2258 = vld [vmem:[#allocation2 + $0xb4] sm:$0xff]
        %v2259 = vld [vmem:[#allocation2 + $0xc4] sm:$0xff]
        %v2260 = vld [vmem:[#allocation2 + $0xcc] sm:$0xff]
        %v2261 = vld [vmem:[#allocation2 + $0xdc] sm:$0xff]
        %v2262 = vld [vmem:[#allocation2 + $0xe4] sm:$0xff]
        %v2263 = vld [vmem:[#allocation2 + $0xf4] sm:$0xff]
        %v2264 = vld [vmem:[#allocation2 + $0xfc] sm:$0xff]
        %v2265 = vld [vmem:[#allocation2 + $0x10c] sm:$0xff]
        %v2266 = vld [vmem:[#allocation2 + $0x114] sm:$0xff]
        %v2267 = vmax.f32 %v2219, %v2243
        %v2268 = vmax.f32 %v2220, %v2244
        %v2269 = vmax.f32 %v2221, %v2245
        %v2270 = vmax.f32 %v2222, %v2246
        %v2271 = vmax.f32 %v2223, %v2247
        %v2272 = vmax.f32 %v2224, %v2248
        %v2273 = vmax.f32 %v2225, %v2249
        %v2274 = vmax.f32 %v2226, %v2250
        %v2275 = vmax.f32 %v2227, %v2251
        %v2276 = vmax.f32 %v2228, %v2252
        %v2277 = vmax.f32 %v2229, %v2253
        %v2278 = vmax.f32 %v2230, %v2254
        %v2279 = vmax.f32 %v2231, %v2255
        %v2280 = vmax.f32 %v2232, %v2256
        %v2281 = vmax.f32 %v2233, %v2257
        %v2282 = vmax.f32 %v2234, %v2258
        %v2283 = vmax.f32 %v2235, %v2259
        %v2284 = vmax.f32 %v2236, %v2260
        %v2285 = vmax.f32 %v2237, %v2261
        %v2286 = vmax.f32 %v2238, %v2262
        %v2287 = vmax.f32 %v2239, %v2263
        %v2288 = vmax.f32 %v2240, %v2264
        %v2289 = vmax.f32 %v2241, %v2265
        %v2290 = vmax.f32 %v2242, %v2266
        %v2291 = vmax.f32 %v2267, %v2269
        %v2292 = vmax.f32 %v2268, %v2270
        %v2293 = vmax.f32 %v2269, %v2271
        %v2294 = vmax.f32 %v2270, %v2272
        %v2295 = vmax.f32 %v2271, %v2273
        %v2296 = vmax.f32 %v2272, %v2274
        %v2297 = vmax.f32 %v2273, %v2275
        %v2298 = vmax.f32 %v2274, %v2276
        %v2299 = vmax.f32 %v2275, %v2277
        %v2300 = vmax.f32 %v2276, %v2278
        %v2301 = vmax.f32 %v2277, %v2279
        %v2302 = vmax.f32 %v2278, %v2280
        %v2303 = vmax.f32 %v2279, %v2281
        %v2304 = vmax.f32 %v2280, %v2282
        %v2305 = vmax.f32 %v2281, %v2283
        %v2306 = vmax.f32 %v2282, %v2284
        %v2307 = vmax.f32 %v2291, %v2271
        %v2308 = vmax.f32 %v2292, %v2272
        %v2309 = vmax.f32 %v2293, %v2273
        %v2310 = vmax.f32 %v2294, %v2274
        %v2311 = vmax.f32 %v2295, %v2275
        %v2312 = vmax.f32 %v2296, %v2276
        %v2313 = vmax.f32 %v2297, %v2277
        %v2314 = vmax.f32 %v2298, %v2278
        %v2315 = vmax.f32 %v2299, %v2279
        %v2316 = vmax.f32 %v2300, %v2280
        %v2317 = vmax.f32 %v2301, %v2281
        %v2318 = vmax.f32 %v2302, %v2282
        %v2319 = vmax.f32 %v2303, %v2283
        %v2320 = vmax.f32 %v2304, %v2284
        %v2321 = vmax.f32 %v2305, %v2285
        %v2322 = vmax.f32 %v2306, %v2286
        %v2323 = vmax.f32 %v2307, %v2273
        %v2324 = vmax.f32 %v2308, %v2274
        %v2325 = vmax.f32 %v2309, %v2275
        %v2326 = vmax.f32 %v2310, %v2276
        %v2327 = vmax.f32 %v2311, %v2277
        %v2328 = vmax.f32 %v2312, %v2278
        %v2329 = vmax.f32 %v2313, %v2279
        %v2330 = vmax.f32 %v2314, %v2280
        %v2331 = vmax.f32 %v2315, %v2281
        %v2332 = vmax.f32 %v2316, %v2282
        %v2333 = vmax.f32 %v2317, %v2283
        %v2334 = vmax.f32 %v2318, %v2284
        %v2335 = vmax.f32 %v2319, %v2285
        %v2336 = vmax.f32 %v2320, %v2286
        %v2337 = vmax.f32 %v2321, %v2287
        %v2338 = vmax.f32 %v2322, %v2288
        %v2339 = vmax.f32 %v2323, %v2275
        %v2340 = vmax.f32 %v2324, %v2276
        %v2341 = vmax.f32 %v2325, %v2277
        %v2342 = vmax.f32 %v2326, %v2278
        %v2343 = vmax.f32 %v2327, %v2279
        %v2344 = vmax.f32 %v2328, %v2280
        %v2345 = vmax.f32 %v2329, %v2281
        %v2346 = vmax.f32 %v2330, %v2282
        %v2347 = vmax.f32 %v2331, %v2283
        %v2348 = vmax.f32 %v2332, %v2284
        %v2349 = vmax.f32 %v2333, %v2285
        %v2350 = vmax.f32 %v2334, %v2286
        %v2351 = vmax.f32 %v2335, %v2287
        %v2352 = vmax.f32 %v2336, %v2288
        %v2353 = vmax.f32 %v2337, %v2289
        %v2354 = vmax.f32 %v2338, %v2290
        %v2355 = vld [vmem:[#allocation8] sm:$0xff]
        %v2356 = vld [vmem:[#allocation8 + $0x8] sm:$0xff]
        %v2357 = vld [vmem:[#allocation8 + $0x10] sm:$0xff]
        %v2358 = vld [vmem:[#allocation8 + $0x18] sm:$0xff]
        %v2359 = vld [vmem:[#allocation8 + $0x20] sm:$0xff]
        %v2360 = vld [vmem:[#allocation8 + $0x28] sm:$0xff]
        %v2361 = vld [vmem:[#allocation8 + $0x30] sm:$0xff]
        %v2362 = vld [vmem:[#allocation8 + $0x38] sm:$0xff]
        %v2363 = vld [vmem:[#allocation8 + $0x40] sm:$0xff]
        %v2364 = vld [vmem:[#allocation8 + $0x48] sm:$0xff]
        %v2365 = vld [vmem:[#allocation8 + $0x50] sm:$0xff]
        %v2366 = vld [vmem:[#allocation8 + $0x58] sm:$0xff]
        %v2367 = vld [vmem:[#allocation8 + $0x60] sm:$0xff]
        %v2368 = vld [vmem:[#allocation8 + $0x68] sm:$0xff]
        %v2369 = vld [vmem:[#allocation8 + $0x70] sm:$0xff]
        %v2370 = vld [vmem:[#allocation8 + $0x78] sm:$0xff]
        %v2371 = vld [vmem:[#allocation8 + $0x80] sm:$0xff]
        %v2372 = vld [vmem:[#allocation8 + $0x88] sm:$0xff]
        %v2373 = vld [vmem:[#allocation8 + $0x90] sm:$0xff]
        %v2374 = vld [vmem:[#allocation8 + $0x98] sm:$0xff]
        %v2375 = vld [vmem:[#allocation8 + $0xa0] sm:$0xff]
        %v2376 = vld [vmem:[#allocation8 + $0xa8] sm:$0xff]
        %v2377 = vld [vmem:[#allocation8 + $0xb0] sm:$0xff]
        %v2378 = vld [vmem:[#allocation8 + $0xb8] sm:$0xff]
        %v2379 = vld [vmem:[#allocation8 + $0xc0] sm:$0xff]
        %v2380 = vld [vmem:[#allocation8 + $0xc8] sm:$0xff]
        %v2381 = vld [vmem:[#allocation8 + $0xd0] sm:$0xff]
        %v2382 = vld [vmem:[#allocation8 + $0xd8] sm:$0xff]
        %v2383 = vld [vmem:[#allocation8 + $0xe0] sm:$0xff]
        %v2384 = vld [vmem:[#allocation8 + $0xe8] sm:$0xff]
        %v2385 = vld [vmem:[#allocation8 + $0xf0] sm:$0xff]
        %v2386 = vld [vmem:[#allocation8 + $0xf8] sm:$0xff]
        %v2387 = vld [vmem:[#allocation8 + $0x100] sm:$0xff]
        %v2388 = vld [vmem:[#allocation8 + $0x108] sm:$0xff]
        %v2389 = vld [vmem:[#allocation8 + $0x110] sm:$0xff]
        %v2390 = vld [vmem:[#allocation8 + $0x118] sm:$0xff]
        %v2391 = vld [vmem:[#allocation8 + $0x120] sm:$0xff]
        %v2392 = vld [vmem:[#allocation8 + $0x128] sm:$0xff]
        %v2393 = vld [vmem:[#allocation8 + $0x130] sm:$0xff]
        %v2394 = vld [vmem:[#allocation8 + $0x138] sm:$0xff]
        %v2395 = vld [vmem:[#allocation8 + $0x140] sm:$0xff]
        %v2396 = vld [vmem:[#allocation8 + $0x148] sm:$0xff]
        %v2397 = vld [vmem:[#allocation8 + $0x150] sm:$0xff]
        %v2398 = vld [vmem:[#allocation8 + $0x158] sm:$0xff]
        %v2399 = vld [vmem:[#allocation8 + $0x160] sm:$0xff]
        %v2400 = vld [vmem:[#allocation8 + $0x168] sm:$0xff]
        %v2401 = vld [vmem:[#allocation8 + $0x170] sm:$0xff]
        %v2402 = vld [vmem:[#allocation8 + $0x178] sm:$0xff]
        %v2403 = vld [vmem:[#allocation8 + $0x180] sm:$0xff]
        %v2404 = vld [vmem:[#allocation8 + $0x188] sm:$0xff]
        %v2405 = vld [vmem:[#allocation8 + $0x190] sm:$0xff]
        %v2406 = vld [vmem:[#allocation8 + $0x198] sm:$0xff]
        %v2407 = vld [vmem:[#allocation8 + $0x1a0] sm:$0xff]
        %v2408 = vld [vmem:[#allocation8 + $0x1a8] sm:$0xff]
        %v2409 = vld [vmem:[#allocation8 + $0x1b0] sm:$0xff]
        %v2410 = vld [vmem:[#allocation8 + $0x1b8] sm:$0xff]
        %v2411 = vld [vmem:[#allocation8 + $0x1c0] sm:$0xff]
        %v2412 = vld [vmem:[#allocation8 + $0x1c8] sm:$0xff]
        %v2413 = vld [vmem:[#allocation8 + $0x1d0] sm:$0xff]
        %v2414 = vld [vmem:[#allocation8 + $0x1d8] sm:$0xff]
        %v2415 = vld [vmem:[#allocation8 + $0x1e0] sm:$0xff]
        %v2416 = vld [vmem:[#allocation8 + $0x1e8] sm:$0xff]
        %v2417 = vld [vmem:[#allocation8 + $0x1f0] sm:$0xff]
        %v2418 = vld [vmem:[#allocation8 + $0x1f8] sm:$0xff]
        %v2419 = vld [vmem:[%s4] sm:$0x1]
        %v2421 = vlaneseq
        %v2422 = vshrl.u32 %v2421, 7
        %v2423 = vsub.s32 0, %v2422
        %v2424 = vrot.slane %v2419, %v2423
        %2426 = vmatprep.subr.mxu0 0.0
        %2427 = vmatpush1.msra.mxu0 %v2355
        %2428 = vmatprep.subr.mxu0 0.0
        %2429 = vmatpush1.msra.mxu0 %v2356
        %2430 = vmatprep.subr.mxu0 0.0
        %2431 = vmatpush1.msra.mxu0 %v2357
        %2432 = vmatprep.subr.mxu0 0.0
        %2433 = vmatpush1.msra.mxu0 %v2358
        %2434 = vmatprep.subr.mxu0 0.0
        %2435 = vmatpush1.msra.mxu0 %v2359
        %2436 = vmatprep.subr.mxu0 0.0
        %2437 = vmatpush1.msra.mxu0 %v2360
        %2438 = vmatprep.subr.mxu0 0.0
        %2439 = vmatpush1.msra.mxu0 %v2361
        %2440 = vmatprep.subr.mxu0 0.0
        %2441 = vmatpush1.msra.mxu0 %v2362
        %2442 = vmatprep.subr.mxu0 0.0
        %2443 = vmatpush1.msra.mxu0 %v2363
        %2444 = vmatprep.subr.mxu0 0.0
        %2445 = vmatpush1.msra.mxu0 %v2364
        %2446 = vmatprep.subr.mxu0 0.0
        %2447 = vmatpush1.msra.mxu0 %v2365
        %2448 = vmatprep.subr.mxu0 0.0
        %2449 = vmatpush1.msra.mxu0 %v2366
        %2450 = vmatprep.subr.mxu0 0.0
        %2451 = vmatpush1.msra.mxu0 %v2367
        %2452 = vmatprep.subr.mxu0 0.0
        %2453 = vmatpush1.msra.mxu0 %v2368
        %2454 = vmatprep.subr.mxu0 0.0
        %2455 = vmatpush1.msra.mxu0 %v2369
        %2456 = vmatprep.subr.mxu0 0.0
        %2457 = vmatpush1.msra.mxu0 %v2370
        %2458 = vmatprep.subr.mxu0 0.0
        %2459 = vmatpush1.msra.mxu0 %v2371
        %2460 = vmatprep.subr.mxu0 0.0
        %2461 = vmatpush1.msra.mxu0 %v2372
        %2462 = vmatprep.subr.mxu0 0.0
        %2463 = vmatpush1.msra.mxu0 %v2373
        %2464 = vmatprep.subr.mxu0 0.0
        %2465 = vmatpush1.msra.mxu0 %v2374
        %2466 = vmatprep.subr.mxu0 0.0
        %2467 = vmatpush1.msra.mxu0 %v2375
        %2468 = vmatprep.subr.mxu0 0.0
        %2469 = vmatpush1.msra.mxu0 %v2376
        %2470 = vmatprep.subr.mxu0 0.0
        %2471 = vmatpush1.msra.mxu0 %v2377
        %2472 = vmatprep.subr.mxu0 0.0
        %2473 = vmatpush1.msra.mxu0 %v2378
        %2474 = vmatprep.subr.mxu0 0.0
        %2475 = vmatpush1.msra.mxu0 %v2379
        %2476 = vmatprep.subr.mxu0 0.0
        %2477 = vmatpush1.msra.mxu0 %v2380
        %2478 = vmatprep.subr.mxu0 0.0
        %2479 = vmatpush1.msra.mxu0 %v2381
        %2480 = vmatprep.subr.mxu0 0.0
        %2481 = vmatpush1.msra.mxu0 %v2382
        %2482 = vmatprep.subr.mxu0 0.0
        %2483 = vmatpush1.msra.mxu0 %v2383
        %2484 = vmatprep.subr.mxu0 0.0
        %2485 = vmatpush1.msra.mxu0 %v2384
        %2486 = vmatprep.subr.mxu0 0.0
        %2487 = vmatpush1.msra.mxu0 %v2385
        %2488 = vmatprep.subr.mxu0 0.0
        %2489 = vmatpush1.msra.mxu0 %v2386
        %2490 = vmatprep.mubr.f32.mxu0 %v1611
        %2491 = vmatmul.mubr.f32.gmra.mrb[0].mxu0 %v1039
        %v2492 = vpop.f32.mrb[0].mxu0
        %v2493 = vadd.f32 %v2424, %v2492
        %v2494 = vpop.f32.mrb[0].mxu0
        %2495 = vmatprep.mubr.f32.mxu0 %v1612
        %2496 = vmatmul.mubr.f32.gmra.mrb[0].mxu0 %v1040
        %v2497 = vpop.f32.mrb[0].mxu0
        %v2498 = vadd.f32 %v2424, %v2497
        %v2499 = vpop.f32.mrb[0].mxu0
        %2500 = vmatprep.mubr.f32.mxu0 %v1613
        %2501 = vmatmul.mubr.f32.gmra.mrb[0].mxu0 %v1041
        %v2502 = vpop.f32.mrb[0].mxu0
        %v2503 = vadd.f32 %v2424, %v2502
        %v2504 = vpop.f32.mrb[0].mxu0
        %2505 = vmatprep.mubr.f32.mxu0 %v1614
        %2506 = vmatmul.mubr.f32.gmra.mrb[0].mxu0 %v1042
        %v2507 = vpop.f32.mrb[0].mxu0
        %v2508 = vadd.f32 %v2424, %v2507
        %v2509 = vpop.f32.mrb[0].mxu0
        %2510 = vmatprep.mubr.f32.mxu0 %v1615
        %2511 = vmatmul.mubr.f32.gmra.mrb[0].mxu0 %v1043
        %v2512 = vpop.f32.mrb[0].mxu0
        %v2513 = vadd.f32 %v2424, %v2512
        %v2514 = vpop.f32.mrb[0].mxu0
        %2515 = vmatprep.mubr.f32.mxu0 %v1616
        %2516 = vmatmul.mubr.f32.gmra.mrb[0].mxu0 %v1044
        %v2517 = vpop.f32.mrb[0].mxu0
        %v2518 = vadd.f32 %v2424, %v2517
        %v2519 = vpop.f32.mrb[0].mxu0
        %2520 = vmatprep.mubr.f32.mxu0 %v1617
        %2521 = vmatmul.mubr.f32.gmra.mrb[0].mxu0 %v1045
        %v2522 = vpop.f32.mrb[0].mxu0
        %v2523 = vadd.f32 %v2424, %v2522
        %v2524 = vpop.f32.mrb[0].mxu0
        %2525 = vmatprep.mubr.f32.mxu0 %v1618
        %2526 = vmatmul.mubr.f32.gmra.mrb[0].mxu0 %v1046
        %v2527 = vpop.f32.mrb[0].mxu0
        %v2528 = vadd.f32 %v2424, %v2527
        %v2529 = vpop.f32.mrb[0].mxu0
        %2530 = vmatprep.mubr.f32.mxu0 %v1619
        %2531 = vmatmul.mubr.f32.gmra.mrb[0].mxu0 %v1047
        %v2532 = vpop.f32.mrb[0].mxu0
        %v2533 = vadd.f32 %v2424, %v2532
        %v2534 = vpop.f32.mrb[0].mxu0
        %2535 = vmatprep.mubr.f32.mxu0 %v1620
        %2536 = vmatmul.mubr.f32.gmra.mrb[0].mxu0 %v1048
        %v2537 = vpop.f32.mrb[0].mxu0
        %v2538 = vadd.f32 %v2424, %v2537
        %v2539 = vpop.f32.mrb[0].mxu0
        %2540 = vmatprep.mubr.f32.mxu0 %v1621
        %2541 = vmatmul.mubr.f32.gmra.mrb[0].mxu0 %v1049
        %v2542 = vpop.f32.mrb[0].mxu0
        %v2543 = vadd.f32 %v2424, %v2542
        %v2544 = vpop.f32.mrb[0].mxu0
        %2545 = vmatprep.mubr.f32.mxu0 %v1622
        %2546 = vmatmul.mubr.f32.gmra.mrb[0].mxu0 %v1050
        %v2547 = vpop.f32.mrb[0].mxu0
        %v2548 = vadd.f32 %v2424, %v2547
        %v2549 = vpop.f32.mrb[0].mxu0
        %2550 = vmatprep.mubr.f32.mxu0 %v1623
        %2551 = vmatmul.mubr.f32.gmra.mrb[0].mxu0 %v1051
        %v2552 = vpop.f32.mrb[0].mxu0
        %v2553 = vadd.f32 %v2424, %v2552
        %v2554 = vpop.f32.mrb[0].mxu0
        %2555 = vmatprep.mubr.f32.mxu0 %v1624
        %2556 = vmatmul.mubr.f32.gmra.mrb[0].mxu0 %v1052
        %v2557 = vpop.f32.mrb[0].mxu0
        %v2558 = vadd.f32 %v2424, %v2557
        %v2559 = vpop.f32.mrb[0].mxu0
        %2560 = vmatprep.mubr.f32.mxu0 %v1625
        %2561 = vmatmul.mubr.f32.gmra.mrb[0].mxu0 %v1053
        %v2562 = vpop.f32.mrb[0].mxu0
        %v2563 = vadd.f32 %v2424, %v2562
        %v2564 = vpop.f32.mrb[0].mxu0
        %2565 = vmatprep.mubr.f32.mxu0 %v1626
        %2566 = vmatmul.mubr.f32.gmra.mrb[0].mxu0 %v1054
        %v2567 = vpop.f32.mrb[0].mxu0
        %v2568 = vadd.f32 %v2424, %v2567
        %v2569 = vpop.f32.mrb[0].mxu0
        %2570 = vdwg.mxu0
        %2571 = vmatprep.subr.mxu0 0.0
        %2572 = vmatpush1.msra.mxu0 %v2387
        %2573 = vmatprep.subr.mxu0 0.0
        %2574 = vmatpush1.msra.mxu0 %v2388
        %2575 = vmatprep.subr.mxu0 0.0
        %2576 = vmatpush1.msra.mxu0 %v2389
        %2577 = vmatprep.subr.mxu0 0.0
        %2578 = vmatpush1.msra.mxu0 %v2390
        %2579 = vmatprep.subr.mxu0 0.0
        %2580 = vmatpush1.msra.mxu0 %v2391
        %2581 = vmatprep.subr.mxu0 0.0
        %2582 = vmatpush1.msra.mxu0 %v2392
        %2583 = vmatprep.subr.mxu0 0.0
        %2584 = vmatpush1.msra.mxu0 %v2393
        %2585 = vmatprep.subr.mxu0 0.0
        %2586 = vmatpush1.msra.mxu0 %v2394
        %2587 = vmatprep.subr.mxu0 0.0
        %2588 = vmatpush1.msra.mxu0 %v2395
        %2589 = vmatprep.subr.mxu0 0.0
        %2590 = vmatpush1.msra.mxu0 %v2396
        %2591 = vmatprep.subr.mxu0 0.0
        %2592 = vmatpush1.msra.mxu0 %v2397
        %2593 = vmatprep.subr.mxu0 0.0
        %2594 = vmatpush1.msra.mxu0 %v2398
        %2595 = vmatprep.subr.mxu0 0.0
        %2596 = vmatpush1.msra.mxu0 %v2399
        %2597 = vmatprep.subr.mxu0 0.0
        %2598 = vmatpush1.msra.mxu0 %v2400
        %2599 = vmatprep.subr.mxu0 0.0
        %2600 = vmatpush1.msra.mxu0 %v2401
        %2601 = vmatprep.subr.mxu0 0.0
        %2602 = vmatpush1.msra.mxu0 %v2402
        %2603 = vmatprep.subr.mxu0 0.0
        %2604 = vmatpush1.msra.mxu0 %v2403
        %2605 = vmatprep.subr.mxu0 0.0
        %2606 = vmatpush1.msra.mxu0 %v2404
        %2607 = vmatprep.subr.mxu0 0.0
        %2608 = vmatpush1.msra.mxu0 %v2405
        %2609 = vmatprep.subr.mxu0 0.0
        %2610 = vmatpush1.msra.mxu0 %v2406
        %2611 = vmatprep.subr.mxu0 0.0
        %2612 = vmatpush1.msra.mxu0 %v2407
        %2613 = vmatprep.subr.mxu0 0.0
        %2614 = vmatpush1.msra.mxu0 %v2408
        %2615 = vmatprep.subr.mxu0 0.0
        %2616 = vmatpush1.msra.mxu0 %v2409
        %2617 = vmatprep.subr.mxu0 0.0
        %2618 = vmatpush1.msra.mxu0 %v2410
        %2619 = vmatprep.subr.mxu0 0.0
        %2620 = vmatpush1.msra.mxu0 %v2411
        %2621 = vmatprep.subr.mxu0 0.0
        %2622 = vmatpush1.msra.mxu0 %v2412
        %2623 = vmatprep.subr.mxu0 0.0
        %2624 = vmatpush1.msra.mxu0 %v2413
        %2625 = vmatprep.subr.mxu0 0.0
        %2626 = vmatpush1.msra.mxu0 %v2414
        %2627 = vmatprep.subr.mxu0 0.0
        %2628 = vmatpush1.msra.mxu0 %v2415
        %2629 = vmatprep.subr.mxu0 0.0
        %2630 = vmatpush1.msra.mxu0 %v2416
        %2631 = vmatprep.subr.mxu0 0.0
        %2632 = vmatpush1.msra.mxu0 %v2417
        %2633 = vmatprep.subr.mxu0 0.0
        %2634 = vmatpush1.msra.mxu0 %v2418
        %2635 = vmatprep.mubr.f32.mxu0 %v2339
        %2636 = vmatmul.mubr.f32.gmra.mrb[0].mxu0 %v2031
        %v2637 = vpop.f32.mrb[0].mxu0
        %v2638 = vadd.f32 %v2493, %v2637
        %v2639 = vpop.f32.mrb[0].mxu0
        %2640 = vmatprep.mubr.f32.mxu0 %v2340
        %2641 = vmatmul.mubr.f32.gmra.mrb[0].mxu0 %v2032
        %v2642 = vpop.f32.mrb[0].mxu0
        %v2643 = vadd.f32 %v2498, %v2642
        %v2644 = vpop.f32.mrb[0].mxu0
        %2645 = vmatprep.mubr.f32.mxu0 %v2341
        %2646 = vmatmul.mubr.f32.gmra.mrb[0].mxu0 %v2033
        %v2647 = vpop.f32.mrb[0].mxu0
        %v2648 = vadd.f32 %v2503, %v2647
        %v2649 = vpop.f32.mrb[0].mxu0
        %2650 = vmatprep.mubr.f32.mxu0 %v2342
        %2651 = vmatmul.mubr.f32.gmra.mrb[0].mxu0 %v2034
        %v2652 = vpop.f32.mrb[0].mxu0
        %v2653 = vadd.f32 %v2508, %v2652
        %v2654 = vpop.f32.mrb[0].mxu0
        %2655 = vmatprep.mubr.f32.mxu0 %v2343
        %2656 = vmatmul.mubr.f32.gmra.mrb[0].mxu0 %v2035
        %v2657 = vpop.f32.mrb[0].mxu0
        %v2658 = vadd.f32 %v2513, %v2657
        %v2659 = vpop.f32.mrb[0].mxu0
        %2660 = vmatprep.mubr.f32.mxu0 %v2344
        %2661 = vmatmul.mubr.f32.gmra.mrb[0].mxu0 %v2036
        %v2662 = vpop.f32.mrb[0].mxu0
        %v2663 = vadd.f32 %v2518, %v2662
        %v2664 = vpop.f32.mrb[0].mxu0
        %2665 = vmatprep.mubr.f32.mxu0 %v2345
        %2666 = vmatmul.mubr.f32.gmra.mrb[0].mxu0 %v2037
        %v2667 = vpop.f32.mrb[0].mxu0
        %v2668 = vadd.f32 %v2523, %v2667
        %v2669 = vpop.f32.mrb[0].mxu0
        %2670 = vmatprep.mubr.f32.mxu0 %v2346
        %2671 = vmatmul.mubr.f32.gmra.mrb[0].mxu0 %v2038
        %v2672 = vpop.f32.mrb[0].mxu0
        %v2673 = vadd.f32 %v2528, %v2672
        %v2674 = vpop.f32.mrb[0].mxu0
        %2675 = vmatprep.mubr.f32.mxu0 %v2347
        %2676 = vmatmul.mubr.f32.gmra.mrb[0].mxu0 %v2039
        %v2677 = vpop.f32.mrb[0].mxu0
        %v2678 = vadd.f32 %v2533, %v2677
        %v2679 = vpop.f32.mrb[0].mxu0
        %2680 = vmatprep.mubr.f32.mxu0 %v2348
        %2681 = vmatmul.mubr.f32.gmra.mrb[0].mxu0 %v2040
        %v2682 = vpop.f32.mrb[0].mxu0
        %v2683 = vadd.f32 %v2538, %v2682
        %v2684 = vpop.f32.mrb[0].mxu0
        %2685 = vmatprep.mubr.f32.mxu0 %v2349
        %2686 = vmatmul.mubr.f32.gmra.mrb[0].mxu0 %v2041
        %v2687 = vpop.f32.mrb[0].mxu0
        %v2688 = vadd.f32 %v2543, %v2687
        %v2689 = vpop.f32.mrb[0].mxu0
        %2690 = vmatprep.mubr.f32.mxu0 %v2350
        %2691 = vmatmul.mubr.f32.gmra.mrb[0].mxu0 %v2042
        %v2692 = vpop.f32.mrb[0].mxu0
        %v2693 = vadd.f32 %v2548, %v2692
        %v2694 = vpop.f32.mrb[0].mxu0
        %2695 = vmatprep.mubr.f32.mxu0 %v2351
        %2696 = vmatmul.mubr.f32.gmra.mrb[0].mxu0 %v2043
        %v2697 = vpop.f32.mrb[0].mxu0
        %v2698 = vadd.f32 %v2553, %v2697
        %v2699 = vpop.f32.mrb[0].mxu0
        %2700 = vmatprep.mubr.f32.mxu0 %v2352
        %2701 = vmatmul.mubr.f32.gmra.mrb[0].mxu0 %v2044
        %v2702 = vpop.f32.mrb[0].mxu0
        %v2703 = vadd.f32 %v2558, %v2702
        %v2704 = vpop.f32.mrb[0].mxu0
        %2705 = vmatprep.mubr.f32.mxu0 %v2353
        %2706 = vmatmul.mubr.f32.gmra.mrb[0].mxu0 %v2045
        %v2707 = vpop.f32.mrb[0].mxu0
        %v2708 = vadd.f32 %v2563, %v2707
        %v2709 = vpop.f32.mrb[0].mxu0
        %2710 = vmatprep.mubr.f32.mxu0 %v2354
        %2711 = vmatmul.mubr.f32.gmra.mrb[0].mxu0 %v2046
        %v2712 = vpop.f32.mrb[0].mxu0
        %v2713 = vadd.f32 %v2568, %v2712
        %v2714 = vpop.f32.mrb[0].mxu0
        %2715 = vdwg.mxu0
        %v2716 = vsub.f32 0.0, %v2638
        %v2717 = vsub.f32 0.0, %v2643
        %v2718 = vsub.f32 0.0, %v2648
        %v2719 = vsub.f32 0.0, %v2653
        %v2720 = vsub.f32 0.0, %v2658
        %v2721 = vsub.f32 0.0, %v2663
        %v2722 = vsub.f32 0.0, %v2668
        %v2723 = vsub.f32 0.0, %v2673
        %v2724 = vsub.f32 0.0, %v2678
        %v2725 = vsub.f32 0.0, %v2683
        %v2726 = vsub.f32 0.0, %v2688
        %v2727 = vsub.f32 0.0, %v2693
        %v2728 = vsub.f32 0.0, %v2698
        %v2729 = vsub.f32 0.0, %v2703
        %v2730 = vsub.f32 0.0, %v2708
        %v2731 = vsub.f32 0.0, %v2713
        %v2732 = vmul.f32 %v2716, 1.442695
        %v2733 = vpow.pop %v2732
        %v2734 = vmul.f32 %v2717, 1.442695
        %v2735 = vpow.pop %v2734
        %v2736 = vmul.f32 %v2718, 1.442695
        %v2737 = vpow.pop %v2736
        %v2738 = vmul.f32 %v2719, 1.442695
        %v2739 = vpow.pop %v2738
        %v2740 = vmul.f32 %v2720, 1.442695
        %v2741 = vpow.pop %v2740
        %v2742 = vmul.f32 %v2721, 1.442695
        %v2743 = vpow.pop %v2742
        %v2744 = vmul.f32 %v2722, 1.442695
        %v2745 = vpow.pop %v2744
        %v2746 = vmul.f32 %v2723, 1.442695
        %v2747 = vpow.pop %v2746
        %v2748 = vmul.f32 %v2724, 1.442695
        %v2749 = vpow.pop %v2748
        %v2750 = vmul.f32 %v2725, 1.442695
        %v2751 = vpow.pop %v2750
        %v2752 = vmul.f32 %v2726, 1.442695
        %v2753 = vpow.pop %v2752
        %v2754 = vmul.f32 %v2727, 1.442695
        %v2755 = vpow.pop %v2754
        %v2756 = vmul.f32 %v2728, 1.442695
        %v2757 = vpow.pop %v2756
        %v2758 = vmul.f32 %v2729, 1.442695
        %v2759 = vpow.pop %v2758
        %v2760 = vmul.f32 %v2730, 1.442695
        %v2761 = vpow.pop %v2760
        %v2762 = vmul.f32 %v2731, 1.442695
        %v2763 = vpow.pop %v2762
        %v2764 = vadd.f32 %v2733, 1.0
        %v2765 = vadd.f32 %v2735, 1.0
        %v2766 = vadd.f32 %v2737, 1.0
        %v2767 = vadd.f32 %v2739, 1.0
        %v2768 = vadd.f32 %v2741, 1.0
        %v2769 = vadd.f32 %v2743, 1.0
        %v2770 = vadd.f32 %v2745, 1.0
        %v2771 = vadd.f32 %v2747, 1.0
        %v2772 = vadd.f32 %v2749, 1.0
        %v2773 = vadd.f32 %v2751, 1.0
        %v2774 = vadd.f32 %v2753, 1.0
        %v2775 = vadd.f32 %v2755, 1.0
        %v2776 = vadd.f32 %v2757, 1.0
        %v2777 = vadd.f32 %v2759, 1.0
        %v2778 = vadd.f32 %v2761, 1.0
        %v2779 = vadd.f32 %v2763, 1.0
        %v2780 = vrcp.pop %v2764
        %v2781 = vrcp.pop %v2765
        %v2782 = vrcp.pop %v2766
        %v2783 = vrcp.pop %v2767
        %v2784 = vrcp.pop %v2768
        %v2785 = vrcp.pop %v2769
        %v2786 = vrcp.pop %v2770
        %v2787 = vrcp.pop %v2771
        %v2788 = vrcp.pop %v2772
        %v2789 = vrcp.pop %v2773
        %v2790 = vrcp.pop %v2774
        %v2791 = vrcp.pop %v2775
        %v2792 = vrcp.pop %v2776
        %v2793 = vrcp.pop %v2777
        %v2794 = vrcp.pop %v2778
        %v2795 = vrcp.pop %v2779
        %v2796 = vmul.f32 %v2638, %v2780
        %v2797 = vmul.f32 %v2643, %v2781
        %v2798 = vmul.f32 %v2648, %v2782
        %v2799 = vmul.f32 %v2653, %v2783
        %v2800 = vmul.f32 %v2658, %v2784
        %v2801 = vmul.f32 %v2663, %v2785
        %v2802 = vmul.f32 %v2668, %v2786
        %v2803 = vmul.f32 %v2673, %v2787
        %v2804 = vmul.f32 %v2678, %v2788
        %v2805 = vmul.f32 %v2683, %v2789
        %v2806 = vmul.f32 %v2688, %v2790
        %v2807 = vmul.f32 %v2693, %v2791
        %v2808 = vmul.f32 %v2698, %v2792
        %v2809 = vmul.f32 %v2703, %v2793
        %v2810 = vmul.f32 %v2708, %v2794
        %v2811 = vmul.f32 %v2713, %v2795
        %2812 = vst [vmem:[%s289] sm:$0xff] %v2796
        %2813 = vst [vmem:[%s289 + $0x8] sm:$0xff] %v2797
        %2814 = vst [vmem:[%s289 + $0x10] sm:$0xff] %v2798
        %2815 = vst [vmem:[%s289 + $0x18] sm:$0xff] %v2799
        %2816 = vst [vmem:[%s289 + $0x20] sm:$0xff] %v2800
        %2817 = vst [vmem:[%s289 + $0x28] sm:$0xff] %v2801
        %2818 = vst [vmem:[%s289 + $0x30] sm:$0xff] %v2802
        %2819 = vst [vmem:[%s289 + $0x38] sm:$0xff] %v2803
        %2820 = vst [vmem:[%s289 + $0x40] sm:$0xff] %v2804
        %2821 = vst [vmem:[%s289 + $0x48] sm:$0xff] %v2805
        %2822 = vst [vmem:[%s289 + $0x50] sm:$0xff] %v2806
        %2823 = vst [vmem:[%s289 + $0x58] sm:$0xff] %v2807
        %2824 = vst [vmem:[%s289 + $0x60] sm:$0xff] %v2808
        %2825 = vst [vmem:[%s289 + $0x68] sm:$0xff] %v2809
        %2826 = vst [vmem:[%s289 + $0x70] sm:$0xff] %v2810
        %2827 = vst [vmem:[%s289 + $0x78] sm:$0xff] %v2811
        %s2828 = sand.u32 %s157, 1
        %s2829 = scalar_lea.sflag [#allocation5], %s2828
        %s2830 = sand.u32 %s157, 1
        %s2831 = smul.addr %s2830, 128
        %s2832 = scalar_lea.vmem [#allocation9], %s2831
        // Predicated region
        $region53: #{tpu_custom_call.1} parent=39 // pred_check
          %p2833 = pneg %p167
        $region54: #{tpu_custom_call.1} parent=39 // pred_check_branch
          %2835 = sbr.rel (%p2833) target = $region56
        $region55: #{tpu_custom_call.1} parent=39 // pred_region
          %s2836 = smul.u32 8, %s28
          %s2838 = ssub.s32 2048, 2048
          %2839 = vsyncadd %s2829, %s2838
          %s2840 = smul.addr %s2836, 2
          %s2841 = smul.addr %s27, 32
          %s2842 = sadd.s32 %s2840, %s2841
          %s2843 = smul.addr %s2842, 128
          %s2844 = scalar_lea.hbm %s5, %s2843
          %s2845 = sshll.u32 %s2832, 4
          %s2846 = int_to_ptr.vmem [resolvable:$true] %s2845
          %2851 = dma.vmem_to_hbm [thread:$0]  %s2846, 2048, %s2844, %s2829, 128, 128, 8
        $region56: #{tpu_custom_call.1} parent=39 // pred_fallthru
          _
      $region40: #{tpu_custom_call.1} parent=5 // pred_fallthru
        _
      %p2852 = scmp.le.s32.totalorder 2, %s18
      // Predicated region
      $region57: #{tpu_custom_call.1} parent=5 // pred_check
        %p2853 = pneg %p2852
      $region58: #{tpu_custom_call.1} parent=5 // pred_check_branch
        %2855 = sbr.rel (%p2853) target = $region60
      $region59: #{tpu_custom_call.1} parent=5 // pred_region
        %s2856 = ssub.s32 %s18, 2
        // Predicated region
        $region61: #{tpu_custom_call.1} parent=59 // pred_check
          %p2857 = pneg %p173
        $region62: #{tpu_custom_call.1} parent=59 // pred_check_branch
          %2859 = sbr.rel (%p2857) target = $region64
        $region63: #{tpu_custom_call.1} parent=59 // pred_region
          %s2860 = sand.u32 %s158, 1
          %s2861 = scalar_lea.sflag [#allocation5], %s2860
          %s2862 = sand.u32 %s158, 1
          %s2863 = smul.addr %s2862, 128
          %s2864 = scalar_lea.vmem [#allocation9], %s2863
          %2865 = dma.done %s2861, 2048
        $region64: #{tpu_custom_call.1} parent=59 // pred_fallthru
          _
      $region60: #{tpu_custom_call.1} parent=5 // pred_fallthru
        _
    $region6: #{tpu_custom_call.1} parent=1 // loop_footer
      %s22 = sadd.s32 1, %s18
    $region7: #{tpu_custom_call.1} parent=1 // loop_footer_branch
      %17 = sbr.rel target = $region3
    $region8: #{tpu_custom_call.1} parent=1 // loop_exit
      _
    %2866 = vsyncpa [#allocation4], 1
    %s2867 = scalar_lea.sflag [#allocation4], 1
    %2868 = vsyncpa %s2867, 1
    %2869 = vsyncpa [#allocation7], 1
    %2870 = vsyncpa [#allocation5], 1
    %s2871 = scalar_lea.sflag [#allocation5], 1
    %2872 = vsyncpa %s2871, 1

</llo_original>
